<compile_context>
chip_gen: v5e
topology: v5e:2x2
jax: 0.10.0
libtpu: 0.0.40
codegen_flags: <defaults>
</compile_context>

<pallas_src>
import jax
import jax.numpy as jnp
from jax.experimental import pallas as pl
from jax.experimental.pallas import tpu as pltpu


def _linear_tanh_kernel(x_ref, w_ref, b_ref, o_ref):
    """One grid step over the N axis: o = tanh(x @ w_block + b_block).

    x arrives as f32 (tiny: B x 4096) and is cast to bf16 on the VPU; the
    weight block is already bf16 in HBM/VMEM.  The MXU accumulates in f32,
    and the bias-add + tanh epilogue stays in f32.
    """
    x_bf16 = x_ref[...].astype(jnp.bfloat16)
    acc = jnp.dot(x_bf16, w_ref[...], preferred_element_type=jnp.float32)
    o_ref[...] = jnp.tanh(acc + b_ref[...]).astype(o_ref.dtype)


def _tensorcores_per_chip() -> int:
    """Best-effort TC-per-chip query (v7x has 2; v5e/v6e have 1)."""
    try:
        kind = jax.devices()[0].device_kind.lower()
    except Exception:
        return 1
    return 2 if "v7" in kind else 1


def _block_vmem_bytes(m: int, k: int, tn: int) -> int:
    """Double-buffered VMEM footprint of one grid step's blocks."""
    x_bytes = m * k * 4          # f32 activation block
    w_bytes = k * tn * 2         # bf16 weight block (dominant)
    b_bytes = tn * 4             # f32 bias block
    o_bytes = m * tn * 4         # f32 output block
    return 2 * (x_bytes + w_bytes + b_bytes + o_bytes)


def image_embedding_forward(image, image_ids, weight, bias, *, tn=None,
                            vmem_budget_bytes=12 * 1024 * 1024):
    """Pallas implementation of ImageEmbedding.forward.

    image:     (B, 4096) float32
    image_ids: unused (kept for signature parity with the PyTorch module)
    weight:    (4096, output_size) float32   (transpose of torch's (out, in))
    bias:      (output_size,) float32
    returns:   (B, output_size) float32 = tanh(image @ weight + bias)
    """
    del image_ids  # unused in the reference forward pass
    M, K = image.shape
    K2, N = weight.shape
    assert K == K2, f"feature dim mismatch: {K} vs {K2}"

    # Weight streamed as bf16 (halves the dominant HBM traffic); bias kept f32.
    weight_bf16 = weight.astype(jnp.bfloat16)
    bias2d = bias.reshape(1, N).astype(jnp.float32)

    if tn is None:
        tn = N
        # Split the weight stream across the two TensorCores on v7x only; on
        # single-TC v5e/v6e the extra grid step buys nothing.
        if _tensorcores_per_chip() >= 2 and N % 256 == 0:
            tn = N // 2
        # VMEM guard: shrink tn (lane-aligned halving) until the
        # double-buffered blocks fit the budget.
        while (tn > 128 and tn % 256 == 0
               and _block_vmem_bytes(M, K, tn) > vmem_budget_bytes):
            tn //= 2
    assert N % tn == 0, f"output_size {N} must be divisible by tn={tn}"
    assert tn == N or tn % 128 == 0, "tn must be lane-aligned (multiple of 128)"

    grid = (N // tn,)

    # Real cost of the op: ~K*N bf16 weight bytes dominate; tell XLA so it can
    # overlap this custom call with neighbors.
    cost = pl.CostEstimate(
        flops=2 * M * K * N,
        transcendentals=M * N,
        bytes_accessed=M * K * 4 + K * N * 2 + N * 4 + M * N * 4,
    )

    return pl.pallas_call(
        _linear_tanh_kernel,
        out_shape=jax.ShapeDtypeStruct((M, N), image.dtype),
        grid_spec=pltpu.PrefetchScalarGridSpec(
            num_scalar_prefetch=0,
            grid=grid,
            in_specs=[
                # Whole activation matrix (tiny), resident across all N blocks.
                pl.BlockSpec((M, K), lambda j: (0, 0)),
                # Full-K bf16 weight slab for this N block (the dominant DMA).
                pl.BlockSpec((K, tn), lambda j: (0, j)),
                # Bias slice for this N block.
                pl.BlockSpec((1, tn), lambda j: (0, j)),
            ],
            out_specs=pl.BlockSpec((M, tn), lambda j: (0, j)),
        ),
        compiler_params=pltpu.CompilerParams(
            dimension_semantics=("parallel",),
        ),
        cost_estimate=cost,
    )(image, weight_bf16, bias2d)


if __name__ == "__main__":
    # Small, module-consistent shapes: input feature dim is fixed at 4096 by
    # nn.Linear(4096, output_size); pick batch=8 and output_size=256.
    B = 8
    IN_FEATURES = 4096
    OUTPUT_SIZE = 256

    key = jax.random.PRNGKey(0)
    k_img, k_w, k_b = jax.random.split(key, 3)

    image = jax.random.normal(k_img, (B, IN_FEATURES), dtype=jnp.float32)
    image_ids = jnp.arange(B, dtype=jnp.int32)  # unused by forward, like torch

    # Deterministic parameter init (synthetic; mirrors nn.Linear's uniform
    # bound 1/sqrt(in_features)).
    bound = 1.0 / jnp.sqrt(jnp.float32(IN_FEATURES))
    weight = jax.random.uniform(
        k_w, (IN_FEATURES, OUTPUT_SIZE), dtype=jnp.float32,
        minval=-bound, maxval=bound)
    bias = jax.random.uniform(
        k_b, (OUTPUT_SIZE,), dtype=jnp.float32, minval=-bound, maxval=bound)

    out = image_embedding_forward(image, image_ids, weight, bias)
    out = jax.block_until_ready(out)
    assert out.shape == (B, OUTPUT_SIZE)

    # Reference built the same way the kernel computes (bf16 operands, f32
    # accumulation, f32 bias + tanh) — tight, non-flaky tolerance.
    ref_bf16 = jnp.tanh(
        jnp.dot(image.astype(jnp.bfloat16), weight.astype(jnp.bfloat16),
                preferred_element_type=jnp.float32) + bias)
    assert jnp.allclose(out, ref_bf16, atol=1e-4, rtol=1e-4), (
        float(jnp.max(jnp.abs(out - ref_bf16))))

    # Loose sanity check against a full-precision f32 reference (bf16 weight
    # streaming introduces ~1e-3-scale drift pre-tanh).
    ref_f32 = jnp.tanh(
        jnp.dot(image, weight, precision=jax.lax.Precision.HIGHEST) + bias)
    assert jnp.allclose(out, ref_f32, atol=2e-2, rtol=2e-2), (
        float(jnp.max(jnp.abs(out - ref_f32))))

    print("KERNEL_OK")
</pallas_src>

<mosaic_0001>
module attributes {stable_mosaic.version = 11 : i64} {
  func.func @_linear_tanh_kernel(%arg0: i32, %arg1: memref<8x4096xf32, #tpu.memory_space<vmem>>, %arg2: memref<4096x256xbf16, #tpu.memory_space<vmem>>, %arg3: memref<1x256xf32, #tpu.memory_space<vmem>>, %arg4: memref<8x256xf32, #tpu.memory_space<vmem>>) attributes {dimension_semantics = [#tpu.dimension_semantics<parallel>], iteration_bounds = array<i64: 1>, scalar_prefetch = 0 : i64, scratch_operands = 0 : i64, tpu.core_type = #tpu.core_type<tc>, window_params = [{pipeline_mode = #tpu.pipeline_mode<synchronous>, transform_indices = @transform_0, window_bounds = array<i64: 8, 4096>}, {transform_indices = @transform_1, window_bounds = array<i64: 4096, 256>}, {transform_indices = @transform_2, window_bounds = array<i64: 1, 256>}, {transform_indices = @transform_3, window_bounds = array<i64: 8, 256>}]} {
    %c0 = arith.constant 0 : index
    %c0_0 = arith.constant 0 : index
    %0 = vector.load %arg1[%c0, %c0_0] : memref<8x4096xf32, #tpu.memory_space<vmem>>, vector<8x4096xf32>
    %1 = arith.truncf %0 : vector<8x4096xf32> to vector<8x4096xbf16>
    %c0_1 = arith.constant 0 : index
    %c0_2 = arith.constant 0 : index
    %2 = vector.load %arg2[%c0_1, %c0_2] : memref<4096x256xbf16, #tpu.memory_space<vmem>>, vector<4096x256xbf16>
    %cst = arith.constant dense<0.000000e+00> : vector<8x256xf32>
    %3 = tpu.matmul %1, %2, %cst {dimension_numbers = #tpu.dot_dimension_numbers<[1], [0], [0], [1], [0, 0, 1, 1], [], []>} : vector<8x4096xbf16>, vector<4096x256xbf16>, vector<8x256xf32> -> vector<8x256xf32>
    %c0_3 = arith.constant 0 : index
    %c0_4 = arith.constant 0 : index
    %4 = vector.load %arg3[%c0_3, %c0_4] : memref<1x256xf32, #tpu.memory_space<vmem>>, vector<1x256xf32>
    %5 = vector.broadcast %4 : vector<1x256xf32> to vector<8x256xf32>
    %6 = arith.addf %3, %5 : vector<8x256xf32>
    %7 = math.tanh %6 : vector<8x256xf32>
    %c0_5 = arith.constant 0 : index
    %c0_6 = arith.constant 0 : index
    %8 = vector.load %arg4[%c0_5, %c0_6] : memref<8x256xf32, #tpu.memory_space<vmem>>, vector<8x256xf32>
    tpu.vector_store %arg4[%c0_5, %c0_6], %7 {strides = array<i32>} : memref<8x256xf32, #tpu.memory_space<vmem>>, vector<8x256xf32>,
    return
  }
  func.func @transform_0(%arg0: i32) -> (i32, i32) {
    %c0_i32 = arith.constant 0 : i32
    %c0_i32_0 = arith.constant 0 : i32
    %c0_i32_1 = arith.constant 0 : i32
    return %c0_i32, %c0_i32_0 : i32, i32
  }
  func.func @transform_1(%arg0: i32) -> (i32, i32) {
    %c0_i32 = arith.constant 0 : i32
    %c0_i32_0 = arith.constant 0 : i32
    return %c0_i32, %arg0 : i32, i32
  }
  func.func @transform_2(%arg0: i32) -> (i32, i32) {
    %c0_i32 = arith.constant 0 : i32
    %c0_i32_0 = arith.constant 0 : i32
    return %c0_i32, %arg0 : i32, i32
  }
  func.func @transform_3(%arg0: i32) -> (i32, i32) {
    %c0_i32 = arith.constant 0 : i32
    %c0_i32_0 = arith.constant 0 : i32
    return %c0_i32, %arg0 : i32, i32
  }
}

</mosaic_0001>

<llo_original>
// kernel: tpu_custom_call.1
$region0: #{tpu_custom_call.1}
  #allocation0 [shape = 'u32[]', space=smem, size = 0x4, offset = 0x4, fixed_abs, tag = 'smem constant byte address 0x4 - core index']
  #allocation1 [shape = 'u32[72,128]{1,0:T(1,128)}', space=vmem, size = 0x9000, scoped, tag = 'internal scratch']
  %s0 = inlined_call_operand.hbm [shape: f32[8,4096], index: 0, kind: input, shape index: {}]
  %s1 = inlined_call_operand.hbm [shape: bf16[4096,256], index: 1, kind: input, shape index: {}]
  %s2 = inlined_call_operand.hbm [shape: f32[1,256], index: 2, kind: input, shape index: {}]
  %s3 = inlined_call_operand.hbm [shape: f32[8,256], index: 3, kind: output, shape index: {}]
  %s4 = sld [smem:[#allocation0]]
  $region34: #{tpu_custom_call.1} parent=0
    _
  %s6 = ssub.s32 1, %s4
  %s7 = scalar_select 0, %s6, %s4
  $region1: #{tpu_custom_call.1} parent=0
    #allocation2 [shape = 'u8[131072]{0}', space=vmem, size = 0x20000, scoped, tag = 'input window, operand 0, single buffered']
    #allocation3 [shape = 's32[1]{0}', space=sflag, size = 0x4, scoped, tag = 'scoped memory for tpu_custom_call.1']
    #allocation4 [shape = 's32[1]{0}', space=sflag, size = 0x4, scoped, tag = 'scoped memory for tpu_custom_call.1']
    #allocation5 [shape = 'u8[2097152]{0}', space=vmem, size = 0x200000, scoped, tag = 'input window, operand 1, single buffered']
    #allocation6 [shape = 's32[1]{0}', space=sflag, size = 0x4, scoped, tag = 'scoped memory for tpu_custom_call.1']
    #allocation7 [shape = 'u8[1024]{0}', space=vmem, size = 0x400, scoped, tag = 'input window, operand 2, single buffered']
    #allocation8 [shape = 'u8[8192]{0}', space=vmem, size = 0x2000, scoped, tag = 'output window, operand 0, single buffered']
    %8 = vsyncpa [#allocation3], 0
    %9 = vsyncpa [#allocation6], 0
    %10 = vsyncpa [#allocation4], 0
    // Predicated region
    $region2: #{tpu_custom_call.1} parent=1 // pred_check
      _
    $region3: #{tpu_custom_call.1} parent=1 // pred_check_branch
      %12 = sbr.rel (0) target = $region5
    $region4: #{tpu_custom_call.1} parent=1 // pred_region
      %14 = vsyncadd [#allocation3], 0
      %s16 = sshll.u32 %s0, 4
      %s17 = int_to_ptr.hbm [resolvable:$true] %s16
      %s18 = sshll.u32 [#allocation2], 4
      %s19 = int_to_ptr.vmem [resolvable:$true] %s18
      %21 = dma.hbm_to_vmem [thread:$0]  %s17, 4096, %s19, [#allocation3]
    $region5: #{tpu_custom_call.1} parent=1 // pred_fallthru
      _
    // Predicated region
    $region6: #{tpu_custom_call.1} parent=1 // pred_check
      _
    $region7: #{tpu_custom_call.1} parent=1 // pred_check_branch
      %23 = sbr.rel (0) target = $region9
    $region8: #{tpu_custom_call.1} parent=1 // pred_region
      %25 = vsyncadd [#allocation6], 0
      %s26 = sshll.u32 %s1, 4
      %s27 = int_to_ptr.hbm [resolvable:$true] %s26
      %s28 = sshll.u32 [#allocation5], 4
      %s29 = int_to_ptr.vmem [resolvable:$true] %s28
      %34 = dma.hbm_to_vmem [thread:$0]  %s27, 65536, %s29, [#allocation6], 128, 128, 8
    $region9: #{tpu_custom_call.1} parent=1 // pred_fallthru
      _
    // Predicated region
    $region10: #{tpu_custom_call.1} parent=1 // pred_check
      _
    $region11: #{tpu_custom_call.1} parent=1 // pred_check_branch
      %36 = sbr.rel (0) target = $region13
    $region12: #{tpu_custom_call.1} parent=1 // pred_region
      %38 = vsyncadd [#allocation6], 0
      %s40 = sshll.u32 %s2, 4
      %s41 = int_to_ptr.hbm [resolvable:$true] %s40
      %s42 = sshll.u32 [#allocation7], 4
      %s43 = int_to_ptr.vmem [resolvable:$true] %s42
      %45 = dma.hbm_to_vmem [thread:$0]  %s41, 32, %s43, [#allocation6]
    $region13: #{tpu_custom_call.1} parent=1 // pred_fallthru
      _
    // Predicated region
    $region14: #{tpu_custom_call.1} parent=1 // pred_check
      _
    $region15: #{tpu_custom_call.1} parent=1 // pred_check_branch
      %47 = sbr.rel (0) target = $region17
    $region16: #{tpu_custom_call.1} parent=1 // pred_region
      %49 = dma.done [#allocation3], 4096
    $region17: #{tpu_custom_call.1} parent=1 // pred_fallthru
      _
    // Predicated region
    $region18: #{tpu_custom_call.1} parent=1 // pred_check
      _
    $region19: #{tpu_custom_call.1} parent=1 // pred_check_branch
      %51 = sbr.rel (0) target = $region21
    $region20: #{tpu_custom_call.1} parent=1 // pred_region
      %53 = dma.done [#allocation6], 65536
    $region21: #{tpu_custom_call.1} parent=1 // pred_fallthru
      _
    // Predicated region
    $region22: #{tpu_custom_call.1} parent=1 // pred_check
      _
    $region23: #{tpu_custom_call.1} parent=1 // pred_check_branch
      %55 = sbr.rel (0) target = $region25
    $region24: #{tpu_custom_call.1} parent=1 // pred_region
      %57 = dma.done [#allocation6], 32
    $region25: #{tpu_custom_call.1} parent=1 // pred_fallthru
      _
    %v58 = vld [vmem:[#allocation2] sm:$0xff]
    %v59 = vld [vmem:[#allocation2 + $0x8] sm:$0xff]
    %v60 = vld [vmem:[#allocation2 + $0x10] sm:$0xff]
    %v61 = vld [vmem:[#allocation2 + $0x18] sm:$0xff]
    %v62 = vld [vmem:[#allocation2 + $0x20] sm:$0xff]
    %v63 = vld [vmem:[#allocation2 + $0x28] sm:$0xff]
    %v64 = vld [vmem:[#allocation2 + $0x30] sm:$0xff]
    %v65 = vld [vmem:[#allocation2 + $0x38] sm:$0xff]
    %v66 = vld [vmem:[#allocation2 + $0x40] sm:$0xff]
    %v67 = vld [vmem:[#allocation2 + $0x48] sm:$0xff]
    %v68 = vld [vmem:[#allocation2 + $0x50] sm:$0xff]
    %v69 = vld [vmem:[#allocation2 + $0x58] sm:$0xff]
    %v70 = vld [vmem:[#allocation2 + $0x60] sm:$0xff]
    %v71 = vld [vmem:[#allocation2 + $0x68] sm:$0xff]
    %v72 = vld [vmem:[#allocation2 + $0x70] sm:$0xff]
    %v73 = vld [vmem:[#allocation2 + $0x78] sm:$0xff]
    %v74 = vld [vmem:[#allocation2 + $0x80] sm:$0xff]
    %v75 = vld [vmem:[#allocation2 + $0x88] sm:$0xff]
    %v76 = vld [vmem:[#allocation2 + $0x90] sm:$0xff]
    %v77 = vld [vmem:[#allocation2 + $0x98] sm:$0xff]
    %v78 = vld [vmem:[#allocation2 + $0xa0] sm:$0xff]
    %v79 = vld [vmem:[#allocation2 + $0xa8] sm:$0xff]
    %v80 = vld [vmem:[#allocation2 + $0xb0] sm:$0xff]
    %v81 = vld [vmem:[#allocation2 + $0xb8] sm:$0xff]
    %v82 = vld [vmem:[#allocation2 + $0xc0] sm:$0xff]
    %v83 = vld [vmem:[#allocation2 + $0xc8] sm:$0xff]
    %v84 = vld [vmem:[#allocation2 + $0xd0] sm:$0xff]
    %v85 = vld [vmem:[#allocation2 + $0xd8] sm:$0xff]
    %v86 = vld [vmem:[#allocation2 + $0xe0] sm:$0xff]
    %v87 = vld [vmem:[#allocation2 + $0xe8] sm:$0xff]
    %v88 = vld [vmem:[#allocation2 + $0xf0] sm:$0xff]
    %v89 = vld [vmem:[#allocation2 + $0xf8] sm:$0xff]
    %v90 = vpack.c.bf16 %v58, %v58
    %v91 = vpack.c.bf16 %v59, %v59
    %v92 = vpack.c.bf16 %v60, %v60
    %v93 = vpack.c.bf16 %v61, %v61
    %v94 = vpack.c.bf16 %v62, %v62
    %v95 = vpack.c.bf16 %v63, %v63
    %v96 = vpack.c.bf16 %v64, %v64
    %v97 = vpack.c.bf16 %v65, %v65
    %v98 = vpack.c.bf16 %v66, %v66
    %v99 = vpack.c.bf16 %v67, %v67
    %v100 = vpack.c.bf16 %v68, %v68
    %v101 = vpack.c.bf16 %v69, %v69
    %v102 = vpack.c.bf16 %v70, %v70
    %v103 = vpack.c.bf16 %v71, %v71
    %v104 = vpack.c.bf16 %v72, %v72
    %v105 = vpack.c.bf16 %v73, %v73
    %v106 = vpack.c.bf16 %v74, %v74
    %v107 = vpack.c.bf16 %v75, %v75
    %v108 = vpack.c.bf16 %v76, %v76
    %v109 = vpack.c.bf16 %v77, %v77
    %v110 = vpack.c.bf16 %v78, %v78
    %v111 = vpack.c.bf16 %v79, %v79
    %v112 = vpack.c.bf16 %v80, %v80
    %v113 = vpack.c.bf16 %v81, %v81
    %v114 = vpack.c.bf16 %v82, %v82
    %v115 = vpack.c.bf16 %v83, %v83
    %v116 = vpack.c.bf16 %v84, %v84
    %v117 = vpack.c.bf16 %v85, %v85
    %v118 = vpack.c.bf16 %v86, %v86
    %v119 = vpack.c.bf16 %v87, %v87
    %v120 = vpack.c.bf16 %v88, %v88
    %v121 = vpack.c.bf16 %v89, %v89
    %v122 = vld [vmem:[#allocation5] sm:$0xff]
    %v123 = vld [vmem:[#allocation5 + $0x8] sm:$0xff]
    %v124 = vld [vmem:[#allocation5 + $0x10] sm:$0xff]
    %v125 = vld [vmem:[#allocation5 + $0x18] sm:$0xff]
    %v126 = vld [vmem:[#allocation5 + $0x20] sm:$0xff]
    %v127 = vld [vmem:[#allocation5 + $0x28] sm:$0xff]
    %v128 = vld [vmem:[#allocation5 + $0x30] sm:$0xff]
    %v129 = vld [vmem:[#allocation5 + $0x38] sm:$0xff]
    %v130 = vld [vmem:[#allocation5 + $0x40] sm:$0xff]
    %v131 = vld [vmem:[#allocation5 + $0x48] sm:$0xff]
    %v132 = vld [vmem:[#allocation5 + $0x50] sm:$0xff]
    %v133 = vld [vmem:[#allocation5 + $0x58] sm:$0xff]
    %v134 = vld [vmem:[#allocation5 + $0x60] sm:$0xff]
    %v135 = vld [vmem:[#allocation5 + $0x68] sm:$0xff]
    %v136 = vld [vmem:[#allocation5 + $0x70] sm:$0xff]
    %v137 = vld [vmem:[#allocation5 + $0x78] sm:$0xff]
    %v138 = vld [vmem:[#allocation5 + $0x80] sm:$0xff]
    %v139 = vld [vmem:[#allocation5 + $0x88] sm:$0xff]
    %v140 = vld [vmem:[#allocation5 + $0x90] sm:$0xff]
    %v141 = vld [vmem:[#allocation5 + $0x98] sm:$0xff]
    %v142 = vld [vmem:[#allocation5 + $0xa0] sm:$0xff]
    %v143 = vld [vmem:[#allocation5 + $0xa8] sm:$0xff]
    %v144 = vld [vmem:[#allocation5 + $0xb0] sm:$0xff]
    %v145 = vld [vmem:[#allocation5 + $0xb8] sm:$0xff]
    %v146 = vld [vmem:[#allocation5 + $0xc0] sm:$0xff]
    %v147 = vld [vmem:[#allocation5 + $0xc8] sm:$0xff]
    %v148 = vld [vmem:[#allocation5 + $0xd0] sm:$0xff]
    %v149 = vld [vmem:[#allocation5 + $0xd8] sm:$0xff]
    %v150 = vld [vmem:[#allocation5 + $0xe0] sm:$0xff]
    %v151 = vld [vmem:[#allocation5 + $0xe8] sm:$0xff]
    %v152 = vld [vmem:[#allocation5 + $0xf0] sm:$0xff]
    %v153 = vld [vmem:[#allocation5 + $0xf8] sm:$0xff]
    %v154 = vld [vmem:[#allocation5 + $0x100] sm:$0xff]
    %v155 = vld [vmem:[#allocation5 + $0x108] sm:$0xff]
    %v156 = vld [vmem:[#allocation5 + $0x110] sm:$0xff]
    %v157 = vld [vmem:[#allocation5 + $0x118] sm:$0xff]
    %v158 = vld [vmem:[#allocation5 + $0x120] sm:$0xff]
    %v159 = vld [vmem:[#allocation5 + $0x128] sm:$0xff]
    %v160 = vld [vmem:[#allocation5 + $0x130] sm:$0xff]
    %v161 = vld [vmem:[#allocation5 + $0x138] sm:$0xff]
    %v162 = vld [vmem:[#allocation5 + $0x140] sm:$0xff]
    %v163 = vld [vmem:[#allocation5 + $0x148] sm:$0xff]
    %v164 = vld [vmem:[#allocation5 + $0x150] sm:$0xff]
    %v165 = vld [vmem:[#allocation5 + $0x158] sm:$0xff]
    %v166 = vld [vmem:[#allocation5 + $0x160] sm:$0xff]
    %v167 = vld [vmem:[#allocation5 + $0x168] sm:$0xff]
    %v168 = vld [vmem:[#allocation5 + $0x170] sm:$0xff]
    %v169 = vld [vmem:[#allocation5 + $0x178] sm:$0xff]
    %v170 = vld [vmem:[#allocation5 + $0x180] sm:$0xff]
    %v171 = vld [vmem:[#allocation5 + $0x188] sm:$0xff]
    %v172 = vld [vmem:[#allocation5 + $0x190] sm:$0xff]
    %v173 = vld [vmem:[#allocation5 + $0x198] sm:$0xff]
    %v174 = vld [vmem:[#allocation5 + $0x1a0] sm:$0xff]
    %v175 = vld [vmem:[#allocation5 + $0x1a8] sm:$0xff]
    %v176 = vld [vmem:[#allocation5 + $0x1b0] sm:$0xff]
    %v177 = vld [vmem:[#allocation5 + $0x1b8] sm:$0xff]
    %v178 = vld [vmem:[#allocation5 + $0x1c0] sm:$0xff]
    %v179 = vld [vmem:[#allocation5 + $0x1c8] sm:$0xff]
    %v180 = vld [vmem:[#allocation5 + $0x1d0] sm:$0xff]
    %v181 = vld [vmem:[#allocation5 + $0x1d8] sm:$0xff]
    %v182 = vld [vmem:[#allocation5 + $0x1e0] sm:$0xff]
    %v183 = vld [vmem:[#allocation5 + $0x1e8] sm:$0xff]
    %v184 = vld [vmem:[#allocation5 + $0x1f0] sm:$0xff]
    %v185 = vld [vmem:[#allocation5 + $0x1f8] sm:$0xff]
    %v186 = vld [vmem:[#allocation5 + $0x200] sm:$0xff]
    %v187 = vld [vmem:[#allocation5 + $0x208] sm:$0xff]
    %v188 = vld [vmem:[#allocation5 + $0x210] sm:$0xff]
    %v189 = vld [vmem:[#allocation5 + $0x218] sm:$0xff]
    %v190 = vld [vmem:[#allocation5 + $0x220] sm:$0xff]
    %v191 = vld [vmem:[#allocation5 + $0x228] sm:$0xff]
    %v192 = vld [vmem:[#allocation5 + $0x230] sm:$0xff]
    %v193 = vld [vmem:[#allocation5 + $0x238] sm:$0xff]
    %v194 = vld [vmem:[#allocation5 + $0x240] sm:$0xff]
    %v195 = vld [vmem:[#allocation5 + $0x248] sm:$0xff]
    %v196 = vld [vmem:[#allocation5 + $0x250] sm:$0xff]
    %v197 = vld [vmem:[#allocation5 + $0x258] sm:$0xff]
    %v198 = vld [vmem:[#allocation5 + $0x260] sm:$0xff]
    %v199 = vld [vmem:[#allocation5 + $0x268] sm:$0xff]
    %v200 = vld [vmem:[#allocation5 + $0x270] sm:$0xff]
    %v201 = vld [vmem:[#allocation5 + $0x278] sm:$0xff]
    %v202 = vld [vmem:[#allocation5 + $0x280] sm:$0xff]
    %v203 = vld [vmem:[#allocation5 + $0x288] sm:$0xff]
    %v204 = vld [vmem:[#allocation5 + $0x290] sm:$0xff]
    %v205 = vld [vmem:[#allocation5 + $0x298] sm:$0xff]
    %v206 = vld [vmem:[#allocation5 + $0x2a0] sm:$0xff]
    %v207 = vld [vmem:[#allocation5 + $0x2a8] sm:$0xff]
    %v208 = vld [vmem:[#allocation5 + $0x2b0] sm:$0xff]
    %v209 = vld [vmem:[#allocation5 + $0x2b8] sm:$0xff]
    %v210 = vld [vmem:[#allocation5 + $0x2c0] sm:$0xff]
    %v211 = vld [vmem:[#allocation5 + $0x2c8] sm:$0xff]
    %v212 = vld [vmem:[#allocation5 + $0x2d0] sm:$0xff]
    %v213 = vld [vmem:[#allocation5 + $0x2d8] sm:$0xff]
    %v214 = vld [vmem:[#allocation5 + $0x2e0] sm:$0xff]
    %v215 = vld [vmem:[#allocation5 + $0x2e8] sm:$0xff]
    %v216 = vld [vmem:[#allocation5 + $0x2f0] sm:$0xff]
    %v217 = vld [vmem:[#allocation5 + $0x2f8] sm:$0xff]
    %v218 = vld [vmem:[#allocation5 + $0x300] sm:$0xff]
    %v219 = vld [vmem:[#allocation5 + $0x308] sm:$0xff]
    %v220 = vld [vmem:[#allocation5 + $0x310] sm:$0xff]
    %v221 = vld [vmem:[#allocation5 + $0x318] sm:$0xff]
    %v222 = vld [vmem:[#allocation5 + $0x320] sm:$0xff]
    %v223 = vld [vmem:[#allocation5 + $0x328] sm:$0xff]
    %v224 = vld [vmem:[#allocation5 + $0x330] sm:$0xff]
    %v225 = vld [vmem:[#allocation5 + $0x338] sm:$0xff]
    %v226 = vld [vmem:[#allocation5 + $0x340] sm:$0xff]
    %v227 = vld [vmem:[#allocation5 + $0x348] sm:$0xff]
    %v228 = vld [vmem:[#allocation5 + $0x350] sm:$0xff]
    %v229 = vld [vmem:[#allocation5 + $0x358] sm:$0xff]
    %v230 = vld [vmem:[#allocation5 + $0x360] sm:$0xff]
    %v231 = vld [vmem:[#allocation5 + $0x368] sm:$0xff]
    %v232 = vld [vmem:[#allocation5 + $0x370] sm:$0xff]
    %v233 = vld [vmem:[#allocation5 + $0x378] sm:$0xff]
    %v234 = vld [vmem:[#allocation5 + $0x380] sm:$0xff]
    %v235 = vld [vmem:[#allocation5 + $0x388] sm:$0xff]
    %v236 = vld [vmem:[#allocation5 + $0x390] sm:$0xff]
    %v237 = vld [vmem:[#allocation5 + $0x398] sm:$0xff]
    %v238 = vld [vmem:[#allocation5 + $0x3a0] sm:$0xff]
    %v239 = vld [vmem:[#allocation5 + $0x3a8] sm:$0xff]
    %v240 = vld [vmem:[#allocation5 + $0x3b0] sm:$0xff]
    %v241 = vld [vmem:[#allocation5 + $0x3b8] sm:$0xff]
    %v242 = vld [vmem:[#allocation5 + $0x3c0] sm:$0xff]
    %v243 = vld [vmem:[#allocation5 + $0x3c8] sm:$0xff]
    %v244 = vld [vmem:[#allocation5 + $0x3d0] sm:$0xff]
    %v245 = vld [vmem:[#allocation5 + $0x3d8] sm:$0xff]
    %v246 = vld [vmem:[#allocation5 + $0x3e0] sm:$0xff]
    %v247 = vld [vmem:[#allocation5 + $0x3e8] sm:$0xff]
    %v248 = vld [vmem:[#allocation5 + $0x3f0] sm:$0xff]
    %v249 = vld [vmem:[#allocation5 + $0x3f8] sm:$0xff]
    %v250 = vld [vmem:[#allocation5 + $0x400] sm:$0xff]
    %v251 = vld [vmem:[#allocation5 + $0x408] sm:$0xff]
    %v252 = vld [vmem:[#allocation5 + $0x410] sm:$0xff]
    %v253 = vld [vmem:[#allocation5 + $0x418] sm:$0xff]
    %v254 = vld [vmem:[#allocation5 + $0x420] sm:$0xff]
    %v255 = vld [vmem:[#allocation5 + $0x428] sm:$0xff]
    %v256 = vld [vmem:[#allocation5 + $0x430] sm:$0xff]
    %v257 = vld [vmem:[#allocation5 + $0x438] sm:$0xff]
    %v258 = vld [vmem:[#allocation5 + $0x440] sm:$0xff]
    %v259 = vld [vmem:[#allocation5 + $0x448] sm:$0xff]
    %v260 = vld [vmem:[#allocation5 + $0x450] sm:$0xff]
    %v261 = vld [vmem:[#allocation5 + $0x458] sm:$0xff]
    %v262 = vld [vmem:[#allocation5 + $0x460] sm:$0xff]
    %v263 = vld [vmem:[#allocation5 + $0x468] sm:$0xff]
    %v264 = vld [vmem:[#allocation5 + $0x470] sm:$0xff]
    %v265 = vld [vmem:[#allocation5 + $0x478] sm:$0xff]
    %v266 = vld [vmem:[#allocation5 + $0x480] sm:$0xff]
    %v267 = vld [vmem:[#allocation5 + $0x488] sm:$0xff]
    %v268 = vld [vmem:[#allocation5 + $0x490] sm:$0xff]
    %v269 = vld [vmem:[#allocation5 + $0x498] sm:$0xff]
    %v270 = vld [vmem:[#allocation5 + $0x4a0] sm:$0xff]
    %v271 = vld [vmem:[#allocation5 + $0x4a8] sm:$0xff]
    %v272 = vld [vmem:[#allocation5 + $0x4b0] sm:$0xff]
    %v273 = vld [vmem:[#allocation5 + $0x4b8] sm:$0xff]
    %v274 = vld [vmem:[#allocation5 + $0x4c0] sm:$0xff]
    %v275 = vld [vmem:[#allocation5 + $0x4c8] sm:$0xff]
    %v276 = vld [vmem:[#allocation5 + $0x4d0] sm:$0xff]
    %v277 = vld [vmem:[#allocation5 + $0x4d8] sm:$0xff]
    %v278 = vld [vmem:[#allocation5 + $0x4e0] sm:$0xff]
    %v279 = vld [vmem:[#allocation5 + $0x4e8] sm:$0xff]
    %v280 = vld [vmem:[#allocation5 + $0x4f0] sm:$0xff]
    %v281 = vld [vmem:[#allocation5 + $0x4f8] sm:$0xff]
    %v282 = vld [vmem:[#allocation5 + $0x500] sm:$0xff]
    %v283 = vld [vmem:[#allocation5 + $0x508] sm:$0xff]
    %v284 = vld [vmem:[#allocation5 + $0x510] sm:$0xff]
    %v285 = vld [vmem:[#allocation5 + $0x518] sm:$0xff]
    %v286 = vld [vmem:[#allocation5 + $0x520] sm:$0xff]
    %v287 = vld [vmem:[#allocation5 + $0x528] sm:$0xff]
    %v288 = vld [vmem:[#allocation5 + $0x530] sm:$0xff]
    %v289 = vld [vmem:[#allocation5 + $0x538] sm:$0xff]
    %v290 = vld [vmem:[#allocation5 + $0x540] sm:$0xff]
    %v291 = vld [vmem:[#allocation5 + $0x548] sm:$0xff]
    %v292 = vld [vmem:[#allocation5 + $0x550] sm:$0xff]
    %v293 = vld [vmem:[#allocation5 + $0x558] sm:$0xff]
    %v294 = vld [vmem:[#allocation5 + $0x560] sm:$0xff]
    %v295 = vld [vmem:[#allocation5 + $0x568] sm:$0xff]
    %v296 = vld [vmem:[#allocation5 + $0x570] sm:$0xff]
    %v297 = vld [vmem:[#allocation5 + $0x578] sm:$0xff]
    %v298 = vld [vmem:[#allocation5 + $0x580] sm:$0xff]
    %v299 = vld [vmem:[#allocation5 + $0x588] sm:$0xff]
    %v300 = vld [vmem:[#allocation5 + $0x590] sm:$0xff]
    %v301 = vld [vmem:[#allocation5 + $0x598] sm:$0xff]
    %v302 = vld [vmem:[#allocation5 + $0x5a0] sm:$0xff]
    %v303 = vld [vmem:[#allocation5 + $0x5a8] sm:$0xff]
    %v304 = vld [vmem:[#allocation5 + $0x5b0] sm:$0xff]
    %v305 = vld [vmem:[#allocation5 + $0x5b8] sm:$0xff]
    %v306 = vld [vmem:[#allocation5 + $0x5c0] sm:$0xff]
    %v307 = vld [vmem:[#allocation5 + $0x5c8] sm:$0xff]
    %v308 = vld [vmem:[#allocation5 + $0x5d0] sm:$0xff]
    %v309 = vld [vmem:[#allocation5 + $0x5d8] sm:$0xff]
    %v310 = vld [vmem:[#allocation5 + $0x5e0] sm:$0xff]
    %v311 = vld [vmem:[#allocation5 + $0x5e8] sm:$0xff]
    %v312 = vld [vmem:[#allocation5 + $0x5f0] sm:$0xff]
    %v313 = vld [vmem:[#allocation5 + $0x5f8] sm:$0xff]
    %v314 = vld [vmem:[#allocation5 + $0x600] sm:$0xff]
    %v315 = vld [vmem:[#allocation5 + $0x608] sm:$0xff]
    %v316 = vld [vmem:[#allocation5 + $0x610] sm:$0xff]
    %v317 = vld [vmem:[#allocation5 + $0x618] sm:$0xff]
    %v318 = vld [vmem:[#allocation5 + $0x620] sm:$0xff]
    %v319 = vld [vmem:[#allocation5 + $0x628] sm:$0xff]
    %v320 = vld [vmem:[#allocation5 + $0x630] sm:$0xff]
    %v321 = vld [vmem:[#allocation5 + $0x638] sm:$0xff]
    %v322 = vld [vmem:[#allocation5 + $0x640] sm:$0xff]
    %v323 = vld [vmem:[#allocation5 + $0x648] sm:$0xff]
    %v324 = vld [vmem:[#allocation5 + $0x650] sm:$0xff]
    %v325 = vld [vmem:[#allocation5 + $0x658] sm:$0xff]
    %v326 = vld [vmem:[#allocation5 + $0x660] sm:$0xff]
    %v327 = vld [vmem:[#allocation5 + $0x668] sm:$0xff]
    %v328 = vld [vmem:[#allocation5 + $0x670] sm:$0xff]
    %v329 = vld [vmem:[#allocation5 + $0x678] sm:$0xff]
    %v330 = vld [vmem:[#allocation5 + $0x680] sm:$0xff]
    %v331 = vld [vmem:[#allocation5 + $0x688] sm:$0xff]
    %v332 = vld [vmem:[#allocation5 + $0x690] sm:$0xff]
    %v333 = vld [vmem:[#allocation5 + $0x698] sm:$0xff]
    %v334 = vld [vmem:[#allocation5 + $0x6a0] sm:$0xff]
    %v335 = vld [vmem:[#allocation5 + $0x6a8] sm:$0xff]
    %v336 = vld [vmem:[#allocation5 + $0x6b0] sm:$0xff]
    %v337 = vld [vmem:[#allocation5 + $0x6b8] sm:$0xff]
    %v338 = vld [vmem:[#allocation5 + $0x6c0] sm:$0xff]
    %v339 = vld [vmem:[#allocation5 + $0x6c8] sm:$0xff]
    %v340 = vld [vmem:[#allocation5 + $0x6d0] sm:$0xff]
    %v341 = vld [vmem:[#allocation5 + $0x6d8] sm:$0xff]
    %v342 = vld [vmem:[#allocation5 + $0x6e0] sm:$0xff]
    %v343 = vld [vmem:[#allocation5 + $0x6e8] sm:$0xff]
    %v344 = vld [vmem:[#allocation5 + $0x6f0] sm:$0xff]
    %v345 = vld [vmem:[#allocation5 + $0x6f8] sm:$0xff]
    %v346 = vld [vmem:[#allocation5 + $0x700] sm:$0xff]
    %v347 = vld [vmem:[#allocation5 + $0x708] sm:$0xff]
    %v348 = vld [vmem:[#allocation5 + $0x710] sm:$0xff]
    %v349 = vld [vmem:[#allocation5 + $0x718] sm:$0xff]
    %v350 = vld [vmem:[#allocation5 + $0x720] sm:$0xff]
    %v351 = vld [vmem:[#allocation5 + $0x728] sm:$0xff]
    %v352 = vld [vmem:[#allocation5 + $0x730] sm:$0xff]
    %v353 = vld [vmem:[#allocation5 + $0x738] sm:$0xff]
    %v354 = vld [vmem:[#allocation5 + $0x740] sm:$0xff]
    %v355 = vld [vmem:[#allocation5 + $0x748] sm:$0xff]
    %v356 = vld [vmem:[#allocation5 + $0x750] sm:$0xff]
    %v357 = vld [vmem:[#allocation5 + $0x758] sm:$0xff]
    %v358 = vld [vmem:[#allocation5 + $0x760] sm:$0xff]
    %v359 = vld [vmem:[#allocation5 + $0x768] sm:$0xff]
    %v360 = vld [vmem:[#allocation5 + $0x770] sm:$0xff]
    %v361 = vld [vmem:[#allocation5 + $0x778] sm:$0xff]
    %v362 = vld [vmem:[#allocation5 + $0x780] sm:$0xff]
    %v363 = vld [vmem:[#allocation5 + $0x788] sm:$0xff]
    %v364 = vld [vmem:[#allocation5 + $0x790] sm:$0xff]
    %v365 = vld [vmem:[#allocation5 + $0x798] sm:$0xff]
    %v366 = vld [vmem:[#allocation5 + $0x7a0] sm:$0xff]
    %v367 = vld [vmem:[#allocation5 + $0x7a8] sm:$0xff]
    %v368 = vld [vmem:[#allocation5 + $0x7b0] sm:$0xff]
    %v369 = vld [vmem:[#allocation5 + $0x7b8] sm:$0xff]
    %v370 = vld [vmem:[#allocation5 + $0x7c0] sm:$0xff]
    %v371 = vld [vmem:[#allocation5 + $0x7c8] sm:$0xff]
    %v372 = vld [vmem:[#allocation5 + $0x7d0] sm:$0xff]
    %v373 = vld [vmem:[#allocation5 + $0x7d8] sm:$0xff]
    %v374 = vld [vmem:[#allocation5 + $0x7e0] sm:$0xff]
    %v375 = vld [vmem:[#allocation5 + $0x7e8] sm:$0xff]
    %v376 = vld [vmem:[#allocation5 + $0x7f0] sm:$0xff]
    %v377 = vld [vmem:[#allocation5 + $0x7f8] sm:$0xff]
    %v378 = vld [vmem:[#allocation5 + $0x800] sm:$0xff]
    %v379 = vld [vmem:[#allocation5 + $0x808] sm:$0xff]
    %v380 = vld [vmem:[#allocation5 + $0x810] sm:$0xff]
    %v381 = vld [vmem:[#allocation5 + $0x818] sm:$0xff]
    %v382 = vld [vmem:[#allocation5 + $0x820] sm:$0xff]
    %v383 = vld [vmem:[#allocation5 + $0x828] sm:$0xff]
    %v384 = vld [vmem:[#allocation5 + $0x830] sm:$0xff]
    %v385 = vld [vmem:[#allocation5 + $0x838] sm:$0xff]
    %v386 = vld [vmem:[#allocation5 + $0x840] sm:$0xff]
    %v387 = vld [vmem:[#allocation5 + $0x848] sm:$0xff]
    %v388 = vld [vmem:[#allocation5 + $0x850] sm:$0xff]
    %v389 = vld [vmem:[#allocation5 + $0x858] sm:$0xff]
    %v390 = vld [vmem:[#allocation5 + $0x860] sm:$0xff]
    %v391 = vld [vmem:[#allocation5 + $0x868] sm:$0xff]
    %v392 = vld [vmem:[#allocation5 + $0x870] sm:$0xff]
    %v393 = vld [vmem:[#allocation5 + $0x878] sm:$0xff]
    %v394 = vld [vmem:[#allocation5 + $0x880] sm:$0xff]
    %v395 = vld [vmem:[#allocation5 + $0x888] sm:$0xff]
    %v396 = vld [vmem:[#allocation5 + $0x890] sm:$0xff]
    %v397 = vld [vmem:[#allocation5 + $0x898] sm:$0xff]
    %v398 = vld [vmem:[#allocation5 + $0x8a0] sm:$0xff]
    %v399 = vld [vmem:[#allocation5 + $0x8a8] sm:$0xff]
    %v400 = vld [vmem:[#allocation5 + $0x8b0] sm:$0xff]
    %v401 = vld [vmem:[#allocation5 + $0x8b8] sm:$0xff]
    %v402 = vld [vmem:[#allocation5 + $0x8c0] sm:$0xff]
    %v403 = vld [vmem:[#allocation5 + $0x8c8] sm:$0xff]
    %v404 = vld [vmem:[#allocation5 + $0x8d0] sm:$0xff]
    %v405 = vld [vmem:[#allocation5 + $0x8d8] sm:$0xff]
    %v406 = vld [vmem:[#allocation5 + $0x8e0] sm:$0xff]
    %v407 = vld [vmem:[#allocation5 + $0x8e8] sm:$0xff]
    %v408 = vld [vmem:[#allocation5 + $0x8f0] sm:$0xff]
    %v409 = vld [vmem:[#allocation5 + $0x8f8] sm:$0xff]
    %v410 = vld [vmem:[#allocation5 + $0x900] sm:$0xff]
    %v411 = vld [vmem:[#allocation5 + $0x908] sm:$0xff]
    %v412 = vld [vmem:[#allocation5 + $0x910] sm:$0xff]
    %v413 = vld [vmem:[#allocation5 + $0x918] sm:$0xff]
    %v414 = vld [vmem:[#allocation5 + $0x920] sm:$0xff]
    %v415 = vld [vmem:[#allocation5 + $0x928] sm:$0xff]
    %v416 = vld [vmem:[#allocation5 + $0x930] sm:$0xff]
    %v417 = vld [vmem:[#allocation5 + $0x938] sm:$0xff]
    %v418 = vld [vmem:[#allocation5 + $0x940] sm:$0xff]
    %v419 = vld [vmem:[#allocation5 + $0x948] sm:$0xff]
    %v420 = vld [vmem:[#allocation5 + $0x950] sm:$0xff]
    %v421 = vld [vmem:[#allocation5 + $0x958] sm:$0xff]
    %v422 = vld [vmem:[#allocation5 + $0x960] sm:$0xff]
    %v423 = vld [vmem:[#allocation5 + $0x968] sm:$0xff]
    %v424 = vld [vmem:[#allocation5 + $0x970] sm:$0xff]
    %v425 = vld [vmem:[#allocation5 + $0x978] sm:$0xff]
    %v426 = vld [vmem:[#allocation5 + $0x980] sm:$0xff]
    %v427 = vld [vmem:[#allocation5 + $0x988] sm:$0xff]
    %v428 = vld [vmem:[#allocation5 + $0x990] sm:$0xff]
    %v429 = vld [vmem:[#allocation5 + $0x998] sm:$0xff]
    %v430 = vld [vmem:[#allocation5 + $0x9a0] sm:$0xff]
    %v431 = vld [vmem:[#allocation5 + $0x9a8] sm:$0xff]
    %v432 = vld [vmem:[#allocation5 + $0x9b0] sm:$0xff]
    %v433 = vld [vmem:[#allocation5 + $0x9b8] sm:$0xff]
    %v434 = vld [vmem:[#allocation5 + $0x9c0] sm:$0xff]
    %v435 = vld [vmem:[#allocation5 + $0x9c8] sm:$0xff]
    %v436 = vld [vmem:[#allocation5 + $0x9d0] sm:$0xff]
    %v437 = vld [vmem:[#allocation5 + $0x9d8] sm:$0xff]
    %v438 = vld [vmem:[#allocation5 + $0x9e0] sm:$0xff]
    %v439 = vld [vmem:[#allocation5 + $0x9e8] sm:$0xff]
    %v440 = vld [vmem:[#allocation5 + $0x9f0] sm:$0xff]
    %v441 = vld [vmem:[#allocation5 + $0x9f8] sm:$0xff]
    %v442 = vld [vmem:[#allocation5 + $0xa00] sm:$0xff]
    %v443 = vld [vmem:[#allocation5 + $0xa08] sm:$0xff]
    %v444 = vld [vmem:[#allocation5 + $0xa10] sm:$0xff]
    %v445 = vld [vmem:[#allocation5 + $0xa18] sm:$0xff]
    %v446 = vld [vmem:[#allocation5 + $0xa20] sm:$0xff]
    %v447 = vld [vmem:[#allocation5 + $0xa28] sm:$0xff]
    %v448 = vld [vmem:[#allocation5 + $0xa30] sm:$0xff]
    %v449 = vld [vmem:[#allocation5 + $0xa38] sm:$0xff]
    %v450 = vld [vmem:[#allocation5 + $0xa40] sm:$0xff]
    %v451 = vld [vmem:[#allocation5 + $0xa48] sm:$0xff]
    %v452 = vld [vmem:[#allocation5 + $0xa50] sm:$0xff]
    %v453 = vld [vmem:[#allocation5 + $0xa58] sm:$0xff]
    %v454 = vld [vmem:[#allocation5 + $0xa60] sm:$0xff]
    %v455 = vld [vmem:[#allocation5 + $0xa68] sm:$0xff]
    %v456 = vld [vmem:[#allocation5 + $0xa70] sm:$0xff]
    %v457 = vld [vmem:[#allocation5 + $0xa78] sm:$0xff]
    %v458 = vld [vmem:[#allocation5 + $0xa80] sm:$0xff]
    %v459 = vld [vmem:[#allocation5 + $0xa88] sm:$0xff]
    %v460 = vld [vmem:[#allocation5 + $0xa90] sm:$0xff]
    %v461 = vld [vmem:[#allocation5 + $0xa98] sm:$0xff]
    %v462 = vld [vmem:[#allocation5 + $0xaa0] sm:$0xff]
    %v463 = vld [vmem:[#allocation5 + $0xaa8] sm:$0xff]
    %v464 = vld [vmem:[#allocation5 + $0xab0] sm:$0xff]
    %v465 = vld [vmem:[#allocation5 + $0xab8] sm:$0xff]
    %v466 = vld [vmem:[#allocation5 + $0xac0] sm:$0xff]
    %v467 = vld [vmem:[#allocation5 + $0xac8] sm:$0xff]
    %v468 = vld [vmem:[#allocation5 + $0xad0] sm:$0xff]
    %v469 = vld [vmem:[#allocation5 + $0xad8] sm:$0xff]
    %v470 = vld [vmem:[#allocation5 + $0xae0] sm:$0xff]
    %v471 = vld [vmem:[#allocation5 + $0xae8] sm:$0xff]
    %v472 = vld [vmem:[#allocation5 + $0xaf0] sm:$0xff]
    %v473 = vld [vmem:[#allocation5 + $0xaf8] sm:$0xff]
    %v474 = vld [vmem:[#allocation5 + $0xb00] sm:$0xff]
    %v475 = vld [vmem:[#allocation5 + $0xb08] sm:$0xff]
    %v476 = vld [vmem:[#allocation5 + $0xb10] sm:$0xff]
    %v477 = vld [vmem:[#allocation5 + $0xb18] sm:$0xff]
    %v478 = vld [vmem:[#allocation5 + $0xb20] sm:$0xff]
    %v479 = vld [vmem:[#allocation5 + $0xb28] sm:$0xff]
    %v480 = vld [vmem:[#allocation5 + $0xb30] sm:$0xff]
    %v481 = vld [vmem:[#allocation5 + $0xb38] sm:$0xff]
    %v482 = vld [vmem:[#allocation5 + $0xb40] sm:$0xff]
    %v483 = vld [vmem:[#allocation5 + $0xb48] sm:$0xff]
    %v484 = vld [vmem:[#allocation5 + $0xb50] sm:$0xff]
    %v485 = vld [vmem:[#allocation5 + $0xb58] sm:$0xff]
    %v486 = vld [vmem:[#allocation5 + $0xb60] sm:$0xff]
    %v487 = vld [vmem:[#allocation5 + $0xb68] sm:$0xff]
    %v488 = vld [vmem:[#allocation5 + $0xb70] sm:$0xff]
    %v489 = vld [vmem:[#allocation5 + $0xb78] sm:$0xff]
    %v490 = vld [vmem:[#allocation5 + $0xb80] sm:$0xff]
    %v491 = vld [vmem:[#allocation5 + $0xb88] sm:$0xff]
    %v492 = vld [vmem:[#allocation5 + $0xb90] sm:$0xff]
    %v493 = vld [vmem:[#allocation5 + $0xb98] sm:$0xff]
    %v494 = vld [vmem:[#allocation5 + $0xba0] sm:$0xff]
    %v495 = vld [vmem:[#allocation5 + $0xba8] sm:$0xff]
    %v496 = vld [vmem:[#allocation5 + $0xbb0] sm:$0xff]
    %v497 = vld [vmem:[#allocation5 + $0xbb8] sm:$0xff]
    %v498 = vld [vmem:[#allocation5 + $0xbc0] sm:$0xff]
    %v499 = vld [vmem:[#allocation5 + $0xbc8] sm:$0xff]
    %v500 = vld [vmem:[#allocation5 + $0xbd0] sm:$0xff]
    %v501 = vld [vmem:[#allocation5 + $0xbd8] sm:$0xff]
    %v502 = vld [vmem:[#allocation5 + $0xbe0] sm:$0xff]
    %v503 = vld [vmem:[#allocation5 + $0xbe8] sm:$0xff]
    %v504 = vld [vmem:[#allocation5 + $0xbf0] sm:$0xff]
    %v505 = vld [vmem:[#allocation5 + $0xbf8] sm:$0xff]
    %v506 = vld [vmem:[#allocation5 + $0xc00] sm:$0xff]
    %v507 = vld [vmem:[#allocation5 + $0xc08] sm:$0xff]
    %v508 = vld [vmem:[#allocation5 + $0xc10] sm:$0xff]
    %v509 = vld [vmem:[#allocation5 + $0xc18] sm:$0xff]
    %v510 = vld [vmem:[#allocation5 + $0xc20] sm:$0xff]
    %v511 = vld [vmem:[#allocation5 + $0xc28] sm:$0xff]
    %v512 = vld [vmem:[#allocation5 + $0xc30] sm:$0xff]
    %v513 = vld [vmem:[#allocation5 + $0xc38] sm:$0xff]
    %v514 = vld [vmem:[#allocation5 + $0xc40] sm:$0xff]
    %v515 = vld [vmem:[#allocation5 + $0xc48] sm:$0xff]
    %v516 = vld [vmem:[#allocation5 + $0xc50] sm:$0xff]
    %v517 = vld [vmem:[#allocation5 + $0xc58] sm:$0xff]
    %v518 = vld [vmem:[#allocation5 + $0xc60] sm:$0xff]
    %v519 = vld [vmem:[#allocation5 + $0xc68] sm:$0xff]
    %v520 = vld [vmem:[#allocation5 + $0xc70] sm:$0xff]
    %v521 = vld [vmem:[#allocation5 + $0xc78] sm:$0xff]
    %v522 = vld [vmem:[#allocation5 + $0xc80] sm:$0xff]
    %v523 = vld [vmem:[#allocation5 + $0xc88] sm:$0xff]
    %v524 = vld [vmem:[#allocation5 + $0xc90] sm:$0xff]
    %v525 = vld [vmem:[#allocation5 + $0xc98] sm:$0xff]
    %v526 = vld [vmem:[#allocation5 + $0xca0] sm:$0xff]
    %v527 = vld [vmem:[#allocation5 + $0xca8] sm:$0xff]
    %v528 = vld [vmem:[#allocation5 + $0xcb0] sm:$0xff]
    %v529 = vld [vmem:[#allocation5 + $0xcb8] sm:$0xff]
    %v530 = vld [vmem:[#allocation5 + $0xcc0] sm:$0xff]
    %v531 = vld [vmem:[#allocation5 + $0xcc8] sm:$0xff]
    %v532 = vld [vmem:[#allocation5 + $0xcd0] sm:$0xff]
    %v533 = vld [vmem:[#allocation5 + $0xcd8] sm:$0xff]
    %v534 = vld [vmem:[#allocation5 + $0xce0] sm:$0xff]
    %v535 = vld [vmem:[#allocation5 + $0xce8] sm:$0xff]
    %v536 = vld [vmem:[#allocation5 + $0xcf0] sm:$0xff]
    %v537 = vld [vmem:[#allocation5 + $0xcf8] sm:$0xff]
    %v538 = vld [vmem:[#allocation5 + $0xd00] sm:$0xff]
    %v539 = vld [vmem:[#allocation5 + $0xd08] sm:$0xff]
    %v540 = vld [vmem:[#allocation5 + $0xd10] sm:$0xff]
    %v541 = vld [vmem:[#allocation5 + $0xd18] sm:$0xff]
    %v542 = vld [vmem:[#allocation5 + $0xd20] sm:$0xff]
    %v543 = vld [vmem:[#allocation5 + $0xd28] sm:$0xff]
    %v544 = vld [vmem:[#allocation5 + $0xd30] sm:$0xff]
    %v545 = vld [vmem:[#allocation5 + $0xd38] sm:$0xff]
    %v546 = vld [vmem:[#allocation5 + $0xd40] sm:$0xff]
    %v547 = vld [vmem:[#allocation5 + $0xd48] sm:$0xff]
    %v548 = vld [vmem:[#allocation5 + $0xd50] sm:$0xff]
    %v549 = vld [vmem:[#allocation5 + $0xd58] sm:$0xff]
    %v550 = vld [vmem:[#allocation5 + $0xd60] sm:$0xff]
    %v551 = vld [vmem:[#allocation5 + $0xd68] sm:$0xff]
    %v552 = vld [vmem:[#allocation5 + $0xd70] sm:$0xff]
    %v553 = vld [vmem:[#allocation5 + $0xd78] sm:$0xff]
    %v554 = vld [vmem:[#allocation5 + $0xd80] sm:$0xff]
    %v555 = vld [vmem:[#allocation5 + $0xd88] sm:$0xff]
    %v556 = vld [vmem:[#allocation5 + $0xd90] sm:$0xff]
    %v557 = vld [vmem:[#allocation5 + $0xd98] sm:$0xff]
    %v558 = vld [vmem:[#allocation5 + $0xda0] sm:$0xff]
    %v559 = vld [vmem:[#allocation5 + $0xda8] sm:$0xff]
    %v560 = vld [vmem:[#allocation5 + $0xdb0] sm:$0xff]
    %v561 = vld [vmem:[#allocation5 + $0xdb8] sm:$0xff]
    %v562 = vld [vmem:[#allocation5 + $0xdc0] sm:$0xff]
    %v563 = vld [vmem:[#allocation5 + $0xdc8] sm:$0xff]
    %v564 = vld [vmem:[#allocation5 + $0xdd0] sm:$0xff]
    %v565 = vld [vmem:[#allocation5 + $0xdd8] sm:$0xff]
    %v566 = vld [vmem:[#allocation5 + $0xde0] sm:$0xff]
    %v567 = vld [vmem:[#allocation5 + $0xde8] sm:$0xff]
    %v568 = vld [vmem:[#allocation5 + $0xdf0] sm:$0xff]
    %v569 = vld [vmem:[#allocation5 + $0xdf8] sm:$0xff]
    %v570 = vld [vmem:[#allocation5 + $0xe00] sm:$0xff]
    %v571 = vld [vmem:[#allocation5 + $0xe08] sm:$0xff]
    %v572 = vld [vmem:[#allocation5 + $0xe10] sm:$0xff]
    %v573 = vld [vmem:[#allocation5 + $0xe18] sm:$0xff]
    %v574 = vld [vmem:[#allocation5 + $0xe20] sm:$0xff]
    %v575 = vld [vmem:[#allocation5 + $0xe28] sm:$0xff]
    %v576 = vld [vmem:[#allocation5 + $0xe30] sm:$0xff]
    %v577 = vld [vmem:[#allocation5 + $0xe38] sm:$0xff]
    %v578 = vld [vmem:[#allocation5 + $0xe40] sm:$0xff]
    %v579 = vld [vmem:[#allocation5 + $0xe48] sm:$0xff]
    %v580 = vld [vmem:[#allocation5 + $0xe50] sm:$0xff]
    %v581 = vld [vmem:[#allocation5 + $0xe58] sm:$0xff]
    %v582 = vld [vmem:[#allocation5 + $0xe60] sm:$0xff]
    %v583 = vld [vmem:[#allocation5 + $0xe68] sm:$0xff]
    %v584 = vld [vmem:[#allocation5 + $0xe70] sm:$0xff]
    %v585 = vld [vmem:[#allocation5 + $0xe78] sm:$0xff]
    %v586 = vld [vmem:[#allocation5 + $0xe80] sm:$0xff]
    %v587 = vld [vmem:[#allocation5 + $0xe88] sm:$0xff]
    %v588 = vld [vmem:[#allocation5 + $0xe90] sm:$0xff]
    %v589 = vld [vmem:[#allocation5 + $0xe98] sm:$0xff]
    %v590 = vld [vmem:[#allocation5 + $0xea0] sm:$0xff]
    %v591 = vld [vmem:[#allocation5 + $0xea8] sm:$0xff]
    %v592 = vld [vmem:[#allocation5 + $0xeb0] sm:$0xff]
    %v593 = vld [vmem:[#allocation5 + $0xeb8] sm:$0xff]
    %v594 = vld [vmem:[#allocation5 + $0xec0] sm:$0xff]
    %v595 = vld [vmem:[#allocation5 + $0xec8] sm:$0xff]
    %v596 = vld [vmem:[#allocation5 + $0xed0] sm:$0xff]
    %v597 = vld [vmem:[#allocation5 + $0xed8] sm:$0xff]
    %v598 = vld [vmem:[#allocation5 + $0xee0] sm:$0xff]
    %v599 = vld [vmem:[#allocation5 + $0xee8] sm:$0xff]
    %v600 = vld [vmem:[#allocation5 + $0xef0] sm:$0xff]
    %v601 = vld [vmem:[#allocation5 + $0xef8] sm:$0xff]
    %v602 = vld [vmem:[#allocation5 + $0xf00] sm:$0xff]
    %v603 = vld [vmem:[#allocation5 + $0xf08] sm:$0xff]
    %v604 = vld [vmem:[#allocation5 + $0xf10] sm:$0xff]
    %v605 = vld [vmem:[#allocation5 + $0xf18] sm:$0xff]
    %v606 = vld [vmem:[#allocation5 + $0xf20] sm:$0xff]
    %v607 = vld [vmem:[#allocation5 + $0xf28] sm:$0xff]
    %v608 = vld [vmem:[#allocation5 + $0xf30] sm:$0xff]
    %v609 = vld [vmem:[#allocation5 + $0xf38] sm:$0xff]
    %v610 = vld [vmem:[#allocation5 + $0xf40] sm:$0xff]
    %v611 = vld [vmem:[#allocation5 + $0xf48] sm:$0xff]
    %v612 = vld [vmem:[#allocation5 + $0xf50] sm:$0xff]
    %v613 = vld [vmem:[#allocation5 + $0xf58] sm:$0xff]
    %v614 = vld [vmem:[#allocation5 + $0xf60] sm:$0xff]
    %v615 = vld [vmem:[#allocation5 + $0xf68] sm:$0xff]
    %v616 = vld [vmem:[#allocation5 + $0xf70] sm:$0xff]
    %v617 = vld [vmem:[#allocation5 + $0xf78] sm:$0xff]
    %v618 = vld [vmem:[#allocation5 + $0xf80] sm:$0xff]
    %v619 = vld [vmem:[#allocation5 + $0xf88] sm:$0xff]
    %v620 = vld [vmem:[#allocation5 + $0xf90] sm:$0xff]
    %v621 = vld [vmem:[#allocation5 + $0xf98] sm:$0xff]
    %v622 = vld [vmem:[#allocation5 + $0xfa0] sm:$0xff]
    %v623 = vld [vmem:[#allocation5 + $0xfa8] sm:$0xff]
    %v624 = vld [vmem:[#allocation5 + $0xfb0] sm:$0xff]
    %v625 = vld [vmem:[#allocation5 + $0xfb8] sm:$0xff]
    %v626 = vld [vmem:[#allocation5 + $0xfc0] sm:$0xff]
    %v627 = vld [vmem:[#allocation5 + $0xfc8] sm:$0xff]
    %v628 = vld [vmem:[#allocation5 + $0xfd0] sm:$0xff]
    %v629 = vld [vmem:[#allocation5 + $0xfd8] sm:$0xff]
    %v630 = vld [vmem:[#allocation5 + $0xfe0] sm:$0xff]
    %v631 = vld [vmem:[#allocation5 + $0xfe8] sm:$0xff]
    %v632 = vld [vmem:[#allocation5 + $0xff0] sm:$0xff]
    %v633 = vld [vmem:[#allocation5 + $0xff8] sm:$0xff]
    %v634 = vld [vmem:[#allocation7] sm:$0x3]
    %v636 = vperm.slane %v634, 0
    %v637 = vperm.slane %v634, 1
    %v1152 = vunpack.c.l.b16 %v122
    %v1153 = vunpack.c.h.b16 %v122
    %v1154 = vunpack.c.l.b16 %v123
    %v1155 = vunpack.c.h.b16 %v123
    %v1156 = vunpack.c.l.b16 %v124
    %v1157 = vunpack.c.h.b16 %v124
    %v1158 = vunpack.c.l.b16 %v125
    %v1159 = vunpack.c.h.b16 %v125
    %v1160 = vunpack.c.l.b16 %v126
    %v1161 = vunpack.c.h.b16 %v126
    %v1162 = vunpack.c.l.b16 %v127
    %v1163 = vunpack.c.h.b16 %v127
    %v1164 = vunpack.c.l.b16 %v128
    %v1165 = vunpack.c.h.b16 %v128
    %v1166 = vunpack.c.l.b16 %v129
    %v1167 = vunpack.c.h.b16 %v129
    %v1168 = vunpack.c.l.b16 %v130
    %v1169 = vunpack.c.h.b16 %v130
    %v1170 = vunpack.c.l.b16 %v131
    %v1171 = vunpack.c.h.b16 %v131
    %v1172 = vunpack.c.l.b16 %v132
    %v1173 = vunpack.c.h.b16 %v132
    %v1174 = vunpack.c.l.b16 %v133
    %v1175 = vunpack.c.h.b16 %v133
    %v1176 = vunpack.c.l.b16 %v134
    %v1177 = vunpack.c.h.b16 %v134
    %v1178 = vunpack.c.l.b16 %v135
    %v1179 = vunpack.c.h.b16 %v135
    %v1180 = vunpack.c.l.b16 %v136
    %v1181 = vunpack.c.h.b16 %v136
    %v1182 = vunpack.c.l.b16 %v137
    %v1183 = vunpack.c.h.b16 %v137
    %v1184 = vunpack.c.l.b16 %v138
    %v1185 = vunpack.c.h.b16 %v138
    %v1186 = vunpack.c.l.b16 %v139
    %v1187 = vunpack.c.h.b16 %v139
    %v1188 = vunpack.c.l.b16 %v140
    %v1189 = vunpack.c.h.b16 %v140
    %v1190 = vunpack.c.l.b16 %v141
    %v1191 = vunpack.c.h.b16 %v141
    %v1192 = vunpack.c.l.b16 %v142
    %v1193 = vunpack.c.h.b16 %v142
    %v1194 = vunpack.c.l.b16 %v143
    %v1195 = vunpack.c.h.b16 %v143
    %v1196 = vunpack.c.l.b16 %v144
    %v1197 = vunpack.c.h.b16 %v144
    %v1198 = vunpack.c.l.b16 %v145
    %v1199 = vunpack.c.h.b16 %v145
    %v1200 = vunpack.c.l.b16 %v146
    %v1201 = vunpack.c.h.b16 %v146
    %v1202 = vunpack.c.l.b16 %v147
    %v1203 = vunpack.c.h.b16 %v147
    %v1204 = vunpack.c.l.b16 %v148
    %v1205 = vunpack.c.h.b16 %v148
    %v1206 = vunpack.c.l.b16 %v149
    %v1207 = vunpack.c.h.b16 %v149
    %v1208 = vunpack.c.l.b16 %v150
    %v1209 = vunpack.c.h.b16 %v150
    %v1210 = vunpack.c.l.b16 %v151
    %v1211 = vunpack.c.h.b16 %v151
    %v1212 = vunpack.c.l.b16 %v152
    %v1213 = vunpack.c.h.b16 %v152
    %v1214 = vunpack.c.l.b16 %v153
    %v1215 = vunpack.c.h.b16 %v153
    %v1216 = vunpack.c.l.b16 %v154
    %v1217 = vunpack.c.h.b16 %v154
    %v1218 = vunpack.c.l.b16 %v155
    %v1219 = vunpack.c.h.b16 %v155
    %v1220 = vunpack.c.l.b16 %v156
    %v1221 = vunpack.c.h.b16 %v156
    %v1222 = vunpack.c.l.b16 %v157
    %v1223 = vunpack.c.h.b16 %v157
    %v1224 = vunpack.c.l.b16 %v158
    %v1225 = vunpack.c.h.b16 %v158
    %v1226 = vunpack.c.l.b16 %v159
    %v1227 = vunpack.c.h.b16 %v159
    %v1228 = vunpack.c.l.b16 %v160
    %v1229 = vunpack.c.h.b16 %v160
    %v1230 = vunpack.c.l.b16 %v161
    %v1231 = vunpack.c.h.b16 %v161
    %v1232 = vunpack.c.l.b16 %v162
    %v1233 = vunpack.c.h.b16 %v162
    %v1234 = vunpack.c.l.b16 %v163
    %v1235 = vunpack.c.h.b16 %v163
    %v1236 = vunpack.c.l.b16 %v164
    %v1237 = vunpack.c.h.b16 %v164
    %v1238 = vunpack.c.l.b16 %v165
    %v1239 = vunpack.c.h.b16 %v165
    %v1240 = vunpack.c.l.b16 %v166
    %v1241 = vunpack.c.h.b16 %v166
    %v1242 = vunpack.c.l.b16 %v167
    %v1243 = vunpack.c.h.b16 %v167
    %v1244 = vunpack.c.l.b16 %v168
    %v1245 = vunpack.c.h.b16 %v168
    %v1246 = vunpack.c.l.b16 %v169
    %v1247 = vunpack.c.h.b16 %v169
    %v1248 = vunpack.c.l.b16 %v170
    %v1249 = vunpack.c.h.b16 %v170
    %v1250 = vunpack.c.l.b16 %v171
    %v1251 = vunpack.c.h.b16 %v171
    %v1252 = vunpack.c.l.b16 %v172
    %v1253 = vunpack.c.h.b16 %v172
    %v1254 = vunpack.c.l.b16 %v173
    %v1255 = vunpack.c.h.b16 %v173
    %v1256 = vunpack.c.l.b16 %v174
    %v1257 = vunpack.c.h.b16 %v174
    %v1258 = vunpack.c.l.b16 %v175
    %v1259 = vunpack.c.h.b16 %v175
    %v1260 = vunpack.c.l.b16 %v176
    %v1261 = vunpack.c.h.b16 %v176
    %v1262 = vunpack.c.l.b16 %v177
    %v1263 = vunpack.c.h.b16 %v177
    %v1264 = vunpack.c.l.b16 %v178
    %v1265 = vunpack.c.h.b16 %v178
    %v1266 = vunpack.c.l.b16 %v179
    %v1267 = vunpack.c.h.b16 %v179
    %v1268 = vunpack.c.l.b16 %v180
    %v1269 = vunpack.c.h.b16 %v180
    %v1270 = vunpack.c.l.b16 %v181
    %v1271 = vunpack.c.h.b16 %v181
    %v1272 = vunpack.c.l.b16 %v182
    %v1273 = vunpack.c.h.b16 %v182
    %v1274 = vunpack.c.l.b16 %v183
    %v1275 = vunpack.c.h.b16 %v183
    %v1276 = vunpack.c.l.b16 %v184
    %v1277 = vunpack.c.h.b16 %v184
    %v1278 = vunpack.c.l.b16 %v185
    %v1279 = vunpack.c.h.b16 %v185
    %v1280 = vunpack.c.l.b16 %v186
    %v1281 = vunpack.c.h.b16 %v186
    %v1282 = vunpack.c.l.b16 %v187
    %v1283 = vunpack.c.h.b16 %v187
    %v1284 = vunpack.c.l.b16 %v188
    %v1285 = vunpack.c.h.b16 %v188
    %v1286 = vunpack.c.l.b16 %v189
    %v1287 = vunpack.c.h.b16 %v189
    %v1288 = vunpack.c.l.b16 %v190
    %v1289 = vunpack.c.h.b16 %v190
    %v1290 = vunpack.c.l.b16 %v191
    %v1291 = vunpack.c.h.b16 %v191
    %v1292 = vunpack.c.l.b16 %v192
    %v1293 = vunpack.c.h.b16 %v192
    %v1294 = vunpack.c.l.b16 %v193
    %v1295 = vunpack.c.h.b16 %v193
    %v1296 = vunpack.c.l.b16 %v194
    %v1297 = vunpack.c.h.b16 %v194
    %v1298 = vunpack.c.l.b16 %v195
    %v1299 = vunpack.c.h.b16 %v195
    %v1300 = vunpack.c.l.b16 %v196
    %v1301 = vunpack.c.h.b16 %v196
    %v1302 = vunpack.c.l.b16 %v197
    %v1303 = vunpack.c.h.b16 %v197
    %v1304 = vunpack.c.l.b16 %v198
    %v1305 = vunpack.c.h.b16 %v198
    %v1306 = vunpack.c.l.b16 %v199
    %v1307 = vunpack.c.h.b16 %v199
    %v1308 = vunpack.c.l.b16 %v200
    %v1309 = vunpack.c.h.b16 %v200
    %v1310 = vunpack.c.l.b16 %v201
    %v1311 = vunpack.c.h.b16 %v201
    %v1312 = vunpack.c.l.b16 %v202
    %v1313 = vunpack.c.h.b16 %v202
    %v1314 = vunpack.c.l.b16 %v203
    %v1315 = vunpack.c.h.b16 %v203
    %v1316 = vunpack.c.l.b16 %v204
    %v1317 = vunpack.c.h.b16 %v204
    %v1318 = vunpack.c.l.b16 %v205
    %v1319 = vunpack.c.h.b16 %v205
    %v1320 = vunpack.c.l.b16 %v206
    %v1321 = vunpack.c.h.b16 %v206
    %v1322 = vunpack.c.l.b16 %v207
    %v1323 = vunpack.c.h.b16 %v207
    %v1324 = vunpack.c.l.b16 %v208
    %v1325 = vunpack.c.h.b16 %v208
    %v1326 = vunpack.c.l.b16 %v209
    %v1327 = vunpack.c.h.b16 %v209
    %v1328 = vunpack.c.l.b16 %v210
    %v1329 = vunpack.c.h.b16 %v210
    %v1330 = vunpack.c.l.b16 %v211
    %v1331 = vunpack.c.h.b16 %v211
    %v1332 = vunpack.c.l.b16 %v212
    %v1333 = vunpack.c.h.b16 %v212
    %v1334 = vunpack.c.l.b16 %v213
    %v1335 = vunpack.c.h.b16 %v213
    %v1336 = vunpack.c.l.b16 %v214
    %v1337 = vunpack.c.h.b16 %v214
    %v1338 = vunpack.c.l.b16 %v215
    %v1339 = vunpack.c.h.b16 %v215
    %v1340 = vunpack.c.l.b16 %v216
    %v1341 = vunpack.c.h.b16 %v216
    %v1342 = vunpack.c.l.b16 %v217
    %v1343 = vunpack.c.h.b16 %v217
    %v1344 = vunpack.c.l.b16 %v218
    %v1345 = vunpack.c.h.b16 %v218
    %v1346 = vunpack.c.l.b16 %v219
    %v1347 = vunpack.c.h.b16 %v219
    %v1348 = vunpack.c.l.b16 %v220
    %v1349 = vunpack.c.h.b16 %v220
    %v1350 = vunpack.c.l.b16 %v221
    %v1351 = vunpack.c.h.b16 %v221
    %v1352 = vunpack.c.l.b16 %v222
    %v1353 = vunpack.c.h.b16 %v222
    %v1354 = vunpack.c.l.b16 %v223
    %v1355 = vunpack.c.h.b16 %v223
    %v1356 = vunpack.c.l.b16 %v224
    %v1357 = vunpack.c.h.b16 %v224
    %v1358 = vunpack.c.l.b16 %v225
    %v1359 = vunpack.c.h.b16 %v225
    %v1360 = vunpack.c.l.b16 %v226
    %v1361 = vunpack.c.h.b16 %v226
    %v1362 = vunpack.c.l.b16 %v227
    %v1363 = vunpack.c.h.b16 %v227
    %v1364 = vunpack.c.l.b16 %v228
    %v1365 = vunpack.c.h.b16 %v228
    %v1366 = vunpack.c.l.b16 %v229
    %v1367 = vunpack.c.h.b16 %v229
    %v1368 = vunpack.c.l.b16 %v230
    %v1369 = vunpack.c.h.b16 %v230
    %v1370 = vunpack.c.l.b16 %v231
    %v1371 = vunpack.c.h.b16 %v231
    %v1372 = vunpack.c.l.b16 %v232
    %v1373 = vunpack.c.h.b16 %v232
    %v1374 = vunpack.c.l.b16 %v233
    %v1375 = vunpack.c.h.b16 %v233
    %v1376 = vunpack.c.l.b16 %v234
    %v1377 = vunpack.c.h.b16 %v234
    %v1378 = vunpack.c.l.b16 %v235
    %v1379 = vunpack.c.h.b16 %v235
    %v1380 = vunpack.c.l.b16 %v236
    %v1381 = vunpack.c.h.b16 %v236
    %v1382 = vunpack.c.l.b16 %v237
    %v1383 = vunpack.c.h.b16 %v237
    %v1384 = vunpack.c.l.b16 %v238
    %v1385 = vunpack.c.h.b16 %v238
    %v1386 = vunpack.c.l.b16 %v239
    %v1387 = vunpack.c.h.b16 %v239
    %v1388 = vunpack.c.l.b16 %v240
    %v1389 = vunpack.c.h.b16 %v240
    %v1390 = vunpack.c.l.b16 %v241
    %v1391 = vunpack.c.h.b16 %v241
    %v1392 = vunpack.c.l.b16 %v242
    %v1393 = vunpack.c.h.b16 %v242
    %v1394 = vunpack.c.l.b16 %v243
    %v1395 = vunpack.c.h.b16 %v243
    %v1396 = vunpack.c.l.b16 %v244
    %v1397 = vunpack.c.h.b16 %v244
    %v1398 = vunpack.c.l.b16 %v245
    %v1399 = vunpack.c.h.b16 %v245
    %v1400 = vunpack.c.l.b16 %v246
    %v1401 = vunpack.c.h.b16 %v246
    %v1402 = vunpack.c.l.b16 %v247
    %v1403 = vunpack.c.h.b16 %v247
    %v1404 = vunpack.c.l.b16 %v248
    %v1405 = vunpack.c.h.b16 %v248
    %v1406 = vunpack.c.l.b16 %v249
    %v1407 = vunpack.c.h.b16 %v249
    %v1408 = vunpack.c.l.b16 %v250
    %v1409 = vunpack.c.h.b16 %v250
    %v1410 = vunpack.c.l.b16 %v251
    %v1411 = vunpack.c.h.b16 %v251
    %v1412 = vunpack.c.l.b16 %v252
    %v1413 = vunpack.c.h.b16 %v252
    %v1414 = vunpack.c.l.b16 %v253
    %v1415 = vunpack.c.h.b16 %v253
    %v1416 = vunpack.c.l.b16 %v254
    %v1417 = vunpack.c.h.b16 %v254
    %v1418 = vunpack.c.l.b16 %v255
    %v1419 = vunpack.c.h.b16 %v255
    %v1420 = vunpack.c.l.b16 %v256
    %v1421 = vunpack.c.h.b16 %v256
    %v1422 = vunpack.c.l.b16 %v257
    %v1423 = vunpack.c.h.b16 %v257
    %v1424 = vunpack.c.l.b16 %v258
    %v1425 = vunpack.c.h.b16 %v258
    %v1426 = vunpack.c.l.b16 %v259
    %v1427 = vunpack.c.h.b16 %v259
    %v1428 = vunpack.c.l.b16 %v260
    %v1429 = vunpack.c.h.b16 %v260
    %v1430 = vunpack.c.l.b16 %v261
    %v1431 = vunpack.c.h.b16 %v261
    %v1432 = vunpack.c.l.b16 %v262
    %v1433 = vunpack.c.h.b16 %v262
    %v1434 = vunpack.c.l.b16 %v263
    %v1435 = vunpack.c.h.b16 %v263
    %v1436 = vunpack.c.l.b16 %v264
    %v1437 = vunpack.c.h.b16 %v264
    %v1438 = vunpack.c.l.b16 %v265
    %v1439 = vunpack.c.h.b16 %v265
    %v1440 = vunpack.c.l.b16 %v266
    %v1441 = vunpack.c.h.b16 %v266
    %v1442 = vunpack.c.l.b16 %v267
    %v1443 = vunpack.c.h.b16 %v267
    %v1444 = vunpack.c.l.b16 %v268
    %v1445 = vunpack.c.h.b16 %v268
    %v1446 = vunpack.c.l.b16 %v269
    %v1447 = vunpack.c.h.b16 %v269
    %v1448 = vunpack.c.l.b16 %v270
    %v1449 = vunpack.c.h.b16 %v270
    %v1450 = vunpack.c.l.b16 %v271
    %v1451 = vunpack.c.h.b16 %v271
    %v1452 = vunpack.c.l.b16 %v272
    %v1453 = vunpack.c.h.b16 %v272
    %v1454 = vunpack.c.l.b16 %v273
    %v1455 = vunpack.c.h.b16 %v273
    %v1456 = vunpack.c.l.b16 %v274
    %v1457 = vunpack.c.h.b16 %v274
    %v1458 = vunpack.c.l.b16 %v275
    %v1459 = vunpack.c.h.b16 %v275
    %v1460 = vunpack.c.l.b16 %v276
    %v1461 = vunpack.c.h.b16 %v276
    %v1462 = vunpack.c.l.b16 %v277
    %v1463 = vunpack.c.h.b16 %v277
    %v1464 = vunpack.c.l.b16 %v278
    %v1465 = vunpack.c.h.b16 %v278
    %v1466 = vunpack.c.l.b16 %v279
    %v1467 = vunpack.c.h.b16 %v279
    %v1468 = vunpack.c.l.b16 %v280
    %v1469 = vunpack.c.h.b16 %v280
    %v1470 = vunpack.c.l.b16 %v281
    %v1471 = vunpack.c.h.b16 %v281
    %v1472 = vunpack.c.l.b16 %v282
    %v1473 = vunpack.c.h.b16 %v282
    %v1474 = vunpack.c.l.b16 %v283
    %v1475 = vunpack.c.h.b16 %v283
    %v1476 = vunpack.c.l.b16 %v284
    %v1477 = vunpack.c.h.b16 %v284
    %v1478 = vunpack.c.l.b16 %v285
    %v1479 = vunpack.c.h.b16 %v285
    %v1480 = vunpack.c.l.b16 %v286
    %v1481 = vunpack.c.h.b16 %v286
    %v1482 = vunpack.c.l.b16 %v287
    %v1483 = vunpack.c.h.b16 %v287
    %v1484 = vunpack.c.l.b16 %v288
    %v1485 = vunpack.c.h.b16 %v288
    %v1486 = vunpack.c.l.b16 %v289
    %v1487 = vunpack.c.h.b16 %v289
    %v1488 = vunpack.c.l.b16 %v290
    %v1489 = vunpack.c.h.b16 %v290
    %v1490 = vunpack.c.l.b16 %v291
    %v1491 = vunpack.c.h.b16 %v291
    %v1492 = vunpack.c.l.b16 %v292
    %v1493 = vunpack.c.h.b16 %v292
    %v1494 = vunpack.c.l.b16 %v293
    %v1495 = vunpack.c.h.b16 %v293
    %v1496 = vunpack.c.l.b16 %v294
    %v1497 = vunpack.c.h.b16 %v294
    %v1498 = vunpack.c.l.b16 %v295
    %v1499 = vunpack.c.h.b16 %v295
    %v1500 = vunpack.c.l.b16 %v296
    %v1501 = vunpack.c.h.b16 %v296
    %v1502 = vunpack.c.l.b16 %v297
    %v1503 = vunpack.c.h.b16 %v297
    %v1504 = vunpack.c.l.b16 %v298
    %v1505 = vunpack.c.h.b16 %v298
    %v1506 = vunpack.c.l.b16 %v299
    %v1507 = vunpack.c.h.b16 %v299
    %v1508 = vunpack.c.l.b16 %v300
    %v1509 = vunpack.c.h.b16 %v300
    %v1510 = vunpack.c.l.b16 %v301
    %v1511 = vunpack.c.h.b16 %v301
    %v1512 = vunpack.c.l.b16 %v302
    %v1513 = vunpack.c.h.b16 %v302
    %v1514 = vunpack.c.l.b16 %v303
    %v1515 = vunpack.c.h.b16 %v303
    %v1516 = vunpack.c.l.b16 %v304
    %v1517 = vunpack.c.h.b16 %v304
    %v1518 = vunpack.c.l.b16 %v305
    %v1519 = vunpack.c.h.b16 %v305
    %v1520 = vunpack.c.l.b16 %v306
    %v1521 = vunpack.c.h.b16 %v306
    %v1522 = vunpack.c.l.b16 %v307
    %v1523 = vunpack.c.h.b16 %v307
    %v1524 = vunpack.c.l.b16 %v308
    %v1525 = vunpack.c.h.b16 %v308
    %v1526 = vunpack.c.l.b16 %v309
    %v1527 = vunpack.c.h.b16 %v309
    %v1528 = vunpack.c.l.b16 %v310
    %v1529 = vunpack.c.h.b16 %v310
    %v1530 = vunpack.c.l.b16 %v311
    %v1531 = vunpack.c.h.b16 %v311
    %v1532 = vunpack.c.l.b16 %v312
    %v1533 = vunpack.c.h.b16 %v312
    %v1534 = vunpack.c.l.b16 %v313
    %v1535 = vunpack.c.h.b16 %v313
    %v1536 = vunpack.c.l.b16 %v314
    %v1537 = vunpack.c.h.b16 %v314
    %v1538 = vunpack.c.l.b16 %v315
    %v1539 = vunpack.c.h.b16 %v315
    %v1540 = vunpack.c.l.b16 %v316
    %v1541 = vunpack.c.h.b16 %v316
    %v1542 = vunpack.c.l.b16 %v317
    %v1543 = vunpack.c.h.b16 %v317
    %v1544 = vunpack.c.l.b16 %v318
    %v1545 = vunpack.c.h.b16 %v318
    %v1546 = vunpack.c.l.b16 %v319
    %v1547 = vunpack.c.h.b16 %v319
    %v1548 = vunpack.c.l.b16 %v320
    %v1549 = vunpack.c.h.b16 %v320
    %v1550 = vunpack.c.l.b16 %v321
    %v1551 = vunpack.c.h.b16 %v321
    %v1552 = vunpack.c.l.b16 %v322
    %v1553 = vunpack.c.h.b16 %v322
    %v1554 = vunpack.c.l.b16 %v323
    %v1555 = vunpack.c.h.b16 %v323
    %v1556 = vunpack.c.l.b16 %v324
    %v1557 = vunpack.c.h.b16 %v324
    %v1558 = vunpack.c.l.b16 %v325
    %v1559 = vunpack.c.h.b16 %v325
    %v1560 = vunpack.c.l.b16 %v326
    %v1561 = vunpack.c.h.b16 %v326
    %v1562 = vunpack.c.l.b16 %v327
    %v1563 = vunpack.c.h.b16 %v327
    %v1564 = vunpack.c.l.b16 %v328
    %v1565 = vunpack.c.h.b16 %v328
    %v1566 = vunpack.c.l.b16 %v329
    %v1567 = vunpack.c.h.b16 %v329
    %v1568 = vunpack.c.l.b16 %v330
    %v1569 = vunpack.c.h.b16 %v330
    %v1570 = vunpack.c.l.b16 %v331
    %v1571 = vunpack.c.h.b16 %v331
    %v1572 = vunpack.c.l.b16 %v332
    %v1573 = vunpack.c.h.b16 %v332
    %v1574 = vunpack.c.l.b16 %v333
    %v1575 = vunpack.c.h.b16 %v333
    %v1576 = vunpack.c.l.b16 %v334
    %v1577 = vunpack.c.h.b16 %v334
    %v1578 = vunpack.c.l.b16 %v335
    %v1579 = vunpack.c.h.b16 %v335
    %v1580 = vunpack.c.l.b16 %v336
    %v1581 = vunpack.c.h.b16 %v336
    %v1582 = vunpack.c.l.b16 %v337
    %v1583 = vunpack.c.h.b16 %v337
    %v1584 = vunpack.c.l.b16 %v338
    %v1585 = vunpack.c.h.b16 %v338
    %v1586 = vunpack.c.l.b16 %v339
    %v1587 = vunpack.c.h.b16 %v339
    %v1588 = vunpack.c.l.b16 %v340
    %v1589 = vunpack.c.h.b16 %v340
    %v1590 = vunpack.c.l.b16 %v341
    %v1591 = vunpack.c.h.b16 %v341
    %v1592 = vunpack.c.l.b16 %v342
    %v1593 = vunpack.c.h.b16 %v342
    %v1594 = vunpack.c.l.b16 %v343
    %v1595 = vunpack.c.h.b16 %v343
    %v1596 = vunpack.c.l.b16 %v344
    %v1597 = vunpack.c.h.b16 %v344
    %v1598 = vunpack.c.l.b16 %v345
    %v1599 = vunpack.c.h.b16 %v345
    %v1600 = vunpack.c.l.b16 %v346
    %v1601 = vunpack.c.h.b16 %v346
    %v1602 = vunpack.c.l.b16 %v347
    %v1603 = vunpack.c.h.b16 %v347
    %v1604 = vunpack.c.l.b16 %v348
    %v1605 = vunpack.c.h.b16 %v348
    %v1606 = vunpack.c.l.b16 %v349
    %v1607 = vunpack.c.h.b16 %v349
    %v1608 = vunpack.c.l.b16 %v350
    %v1609 = vunpack.c.h.b16 %v350
    %v1610 = vunpack.c.l.b16 %v351
    %v1611 = vunpack.c.h.b16 %v351
    %v1612 = vunpack.c.l.b16 %v352
    %v1613 = vunpack.c.h.b16 %v352
    %v1614 = vunpack.c.l.b16 %v353
    %v1615 = vunpack.c.h.b16 %v353
    %v1616 = vunpack.c.l.b16 %v354
    %v1617 = vunpack.c.h.b16 %v354
    %v1618 = vunpack.c.l.b16 %v355
    %v1619 = vunpack.c.h.b16 %v355
    %v1620 = vunpack.c.l.b16 %v356
    %v1621 = vunpack.c.h.b16 %v356
    %v1622 = vunpack.c.l.b16 %v357
    %v1623 = vunpack.c.h.b16 %v357
    %v1624 = vunpack.c.l.b16 %v358
    %v1625 = vunpack.c.h.b16 %v358
    %v1626 = vunpack.c.l.b16 %v359
    %v1627 = vunpack.c.h.b16 %v359
    %v1628 = vunpack.c.l.b16 %v360
    %v1629 = vunpack.c.h.b16 %v360
    %v1630 = vunpack.c.l.b16 %v361
    %v1631 = vunpack.c.h.b16 %v361
    %v1632 = vunpack.c.l.b16 %v362
    %v1633 = vunpack.c.h.b16 %v362
    %v1634 = vunpack.c.l.b16 %v363
    %v1635 = vunpack.c.h.b16 %v363
    %v1636 = vunpack.c.l.b16 %v364
    %v1637 = vunpack.c.h.b16 %v364
    %v1638 = vunpack.c.l.b16 %v365
    %v1639 = vunpack.c.h.b16 %v365
    %v1640 = vunpack.c.l.b16 %v366
    %v1641 = vunpack.c.h.b16 %v366
    %v1642 = vunpack.c.l.b16 %v367
    %v1643 = vunpack.c.h.b16 %v367
    %v1644 = vunpack.c.l.b16 %v368
    %v1645 = vunpack.c.h.b16 %v368
    %v1646 = vunpack.c.l.b16 %v369
    %v1647 = vunpack.c.h.b16 %v369
    %v1648 = vunpack.c.l.b16 %v370
    %v1649 = vunpack.c.h.b16 %v370
    %v1650 = vunpack.c.l.b16 %v371
    %v1651 = vunpack.c.h.b16 %v371
    %v1652 = vunpack.c.l.b16 %v372
    %v1653 = vunpack.c.h.b16 %v372
    %v1654 = vunpack.c.l.b16 %v373
    %v1655 = vunpack.c.h.b16 %v373
    %v1656 = vunpack.c.l.b16 %v374
    %v1657 = vunpack.c.h.b16 %v374
    %v1658 = vunpack.c.l.b16 %v375
    %v1659 = vunpack.c.h.b16 %v375
    %v1660 = vunpack.c.l.b16 %v376
    %v1661 = vunpack.c.h.b16 %v376
    %v1662 = vunpack.c.l.b16 %v377
    %v1663 = vunpack.c.h.b16 %v377
    %v1664 = vunpack.c.l.b16 %v378
    %v1665 = vunpack.c.h.b16 %v378
    %v1666 = vunpack.c.l.b16 %v379
    %v1667 = vunpack.c.h.b16 %v379
    %v1668 = vunpack.c.l.b16 %v380
    %v1669 = vunpack.c.h.b16 %v380
    %v1670 = vunpack.c.l.b16 %v381
    %v1671 = vunpack.c.h.b16 %v381
    %v1672 = vunpack.c.l.b16 %v382
    %v1673 = vunpack.c.h.b16 %v382
    %v1674 = vunpack.c.l.b16 %v383
    %v1675 = vunpack.c.h.b16 %v383
    %v1676 = vunpack.c.l.b16 %v384
    %v1677 = vunpack.c.h.b16 %v384
    %v1678 = vunpack.c.l.b16 %v385
    %v1679 = vunpack.c.h.b16 %v385
    %v1680 = vunpack.c.l.b16 %v386
    %v1681 = vunpack.c.h.b16 %v386
    %v1682 = vunpack.c.l.b16 %v387
    %v1683 = vunpack.c.h.b16 %v387
    %v1684 = vunpack.c.l.b16 %v388
    %v1685 = vunpack.c.h.b16 %v388
    %v1686 = vunpack.c.l.b16 %v389
    %v1687 = vunpack.c.h.b16 %v389
    %v1688 = vunpack.c.l.b16 %v390
    %v1689 = vunpack.c.h.b16 %v390
    %v1690 = vunpack.c.l.b16 %v391
    %v1691 = vunpack.c.h.b16 %v391
    %v1692 = vunpack.c.l.b16 %v392
    %v1693 = vunpack.c.h.b16 %v392
    %v1694 = vunpack.c.l.b16 %v393
    %v1695 = vunpack.c.h.b16 %v393
    %v1696 = vunpack.c.l.b16 %v394
    %v1697 = vunpack.c.h.b16 %v394
    %v1698 = vunpack.c.l.b16 %v395
    %v1699 = vunpack.c.h.b16 %v395
    %v1700 = vunpack.c.l.b16 %v396
    %v1701 = vunpack.c.h.b16 %v396
    %v1702 = vunpack.c.l.b16 %v397
    %v1703 = vunpack.c.h.b16 %v397
    %v1704 = vunpack.c.l.b16 %v398
    %v1705 = vunpack.c.h.b16 %v398
    %v1706 = vunpack.c.l.b16 %v399
    %v1707 = vunpack.c.h.b16 %v399
    %v1708 = vunpack.c.l.b16 %v400
    %v1709 = vunpack.c.h.b16 %v400
    %v1710 = vunpack.c.l.b16 %v401
    %v1711 = vunpack.c.h.b16 %v401
    %v1712 = vunpack.c.l.b16 %v402
    %v1713 = vunpack.c.h.b16 %v402
    %v1714 = vunpack.c.l.b16 %v403
    %v1715 = vunpack.c.h.b16 %v403
    %v1716 = vunpack.c.l.b16 %v404
    %v1717 = vunpack.c.h.b16 %v404
    %v1718 = vunpack.c.l.b16 %v405
    %v1719 = vunpack.c.h.b16 %v405
    %v1720 = vunpack.c.l.b16 %v406
    %v1721 = vunpack.c.h.b16 %v406
    %v1722 = vunpack.c.l.b16 %v407
    %v1723 = vunpack.c.h.b16 %v407
    %v1724 = vunpack.c.l.b16 %v408
    %v1725 = vunpack.c.h.b16 %v408
    %v1726 = vunpack.c.l.b16 %v409
    %v1727 = vunpack.c.h.b16 %v409
    %v1728 = vunpack.c.l.b16 %v410
    %v1729 = vunpack.c.h.b16 %v410
    %v1730 = vunpack.c.l.b16 %v411
    %v1731 = vunpack.c.h.b16 %v411
    %v1732 = vunpack.c.l.b16 %v412
    %v1733 = vunpack.c.h.b16 %v412
    %v1734 = vunpack.c.l.b16 %v413
    %v1735 = vunpack.c.h.b16 %v413
    %v1736 = vunpack.c.l.b16 %v414
    %v1737 = vunpack.c.h.b16 %v414
    %v1738 = vunpack.c.l.b16 %v415
    %v1739 = vunpack.c.h.b16 %v415
    %v1740 = vunpack.c.l.b16 %v416
    %v1741 = vunpack.c.h.b16 %v416
    %v1742 = vunpack.c.l.b16 %v417
    %v1743 = vunpack.c.h.b16 %v417
    %v1744 = vunpack.c.l.b16 %v418
    %v1745 = vunpack.c.h.b16 %v418
    %v1746 = vunpack.c.l.b16 %v419
    %v1747 = vunpack.c.h.b16 %v419
    %v1748 = vunpack.c.l.b16 %v420
    %v1749 = vunpack.c.h.b16 %v420
    %v1750 = vunpack.c.l.b16 %v421
    %v1751 = vunpack.c.h.b16 %v421
    %v1752 = vunpack.c.l.b16 %v422
    %v1753 = vunpack.c.h.b16 %v422
    %v1754 = vunpack.c.l.b16 %v423
    %v1755 = vunpack.c.h.b16 %v423
    %v1756 = vunpack.c.l.b16 %v424
    %v1757 = vunpack.c.h.b16 %v424
    %v1758 = vunpack.c.l.b16 %v425
    %v1759 = vunpack.c.h.b16 %v425
    %v1760 = vunpack.c.l.b16 %v426
    %v1761 = vunpack.c.h.b16 %v426
    %v1762 = vunpack.c.l.b16 %v427
    %v1763 = vunpack.c.h.b16 %v427
    %v1764 = vunpack.c.l.b16 %v428
    %v1765 = vunpack.c.h.b16 %v428
    %v1766 = vunpack.c.l.b16 %v429
    %v1767 = vunpack.c.h.b16 %v429
    %v1768 = vunpack.c.l.b16 %v430
    %v1769 = vunpack.c.h.b16 %v430
    %v1770 = vunpack.c.l.b16 %v431
    %v1771 = vunpack.c.h.b16 %v431
    %v1772 = vunpack.c.l.b16 %v432
    %v1773 = vunpack.c.h.b16 %v432
    %v1774 = vunpack.c.l.b16 %v433
    %v1775 = vunpack.c.h.b16 %v433
    %v1776 = vunpack.c.l.b16 %v434
    %v1777 = vunpack.c.h.b16 %v434
    %v1778 = vunpack.c.l.b16 %v435
    %v1779 = vunpack.c.h.b16 %v435
    %v1780 = vunpack.c.l.b16 %v436
    %v1781 = vunpack.c.h.b16 %v436
    %v1782 = vunpack.c.l.b16 %v437
    %v1783 = vunpack.c.h.b16 %v437
    %v1784 = vunpack.c.l.b16 %v438
    %v1785 = vunpack.c.h.b16 %v438
    %v1786 = vunpack.c.l.b16 %v439
    %v1787 = vunpack.c.h.b16 %v439
    %v1788 = vunpack.c.l.b16 %v440
    %v1789 = vunpack.c.h.b16 %v440
    %v1790 = vunpack.c.l.b16 %v441
    %v1791 = vunpack.c.h.b16 %v441
    %v1792 = vunpack.c.l.b16 %v442
    %v1793 = vunpack.c.h.b16 %v442
    %v1794 = vunpack.c.l.b16 %v443
    %v1795 = vunpack.c.h.b16 %v443
    %v1796 = vunpack.c.l.b16 %v444
    %v1797 = vunpack.c.h.b16 %v444
    %v1798 = vunpack.c.l.b16 %v445
    %v1799 = vunpack.c.h.b16 %v445
    %v1800 = vunpack.c.l.b16 %v446
    %v1801 = vunpack.c.h.b16 %v446
    %v1802 = vunpack.c.l.b16 %v447
    %v1803 = vunpack.c.h.b16 %v447
    %v1804 = vunpack.c.l.b16 %v448
    %v1805 = vunpack.c.h.b16 %v448
    %v1806 = vunpack.c.l.b16 %v449
    %v1807 = vunpack.c.h.b16 %v449
    %v1808 = vunpack.c.l.b16 %v450
    %v1809 = vunpack.c.h.b16 %v450
    %v1810 = vunpack.c.l.b16 %v451
    %v1811 = vunpack.c.h.b16 %v451
    %v1812 = vunpack.c.l.b16 %v452
    %v1813 = vunpack.c.h.b16 %v452
    %v1814 = vunpack.c.l.b16 %v453
    %v1815 = vunpack.c.h.b16 %v453
    %v1816 = vunpack.c.l.b16 %v454
    %v1817 = vunpack.c.h.b16 %v454
    %v1818 = vunpack.c.l.b16 %v455
    %v1819 = vunpack.c.h.b16 %v455
    %v1820 = vunpack.c.l.b16 %v456
    %v1821 = vunpack.c.h.b16 %v456
    %v1822 = vunpack.c.l.b16 %v457
    %v1823 = vunpack.c.h.b16 %v457
    %v1824 = vunpack.c.l.b16 %v458
    %v1825 = vunpack.c.h.b16 %v458
    %v1826 = vunpack.c.l.b16 %v459
    %v1827 = vunpack.c.h.b16 %v459
    %v1828 = vunpack.c.l.b16 %v460
    %v1829 = vunpack.c.h.b16 %v460
    %v1830 = vunpack.c.l.b16 %v461
    %v1831 = vunpack.c.h.b16 %v461
    %v1832 = vunpack.c.l.b16 %v462
    %v1833 = vunpack.c.h.b16 %v462
    %v1834 = vunpack.c.l.b16 %v463
    %v1835 = vunpack.c.h.b16 %v463
    %v1836 = vunpack.c.l.b16 %v464
    %v1837 = vunpack.c.h.b16 %v464
    %v1838 = vunpack.c.l.b16 %v465
    %v1839 = vunpack.c.h.b16 %v465
    %v1840 = vunpack.c.l.b16 %v466
    %v1841 = vunpack.c.h.b16 %v466
    %v1842 = vunpack.c.l.b16 %v467
    %v1843 = vunpack.c.h.b16 %v467
    %v1844 = vunpack.c.l.b16 %v468
    %v1845 = vunpack.c.h.b16 %v468
    %v1846 = vunpack.c.l.b16 %v469
    %v1847 = vunpack.c.h.b16 %v469
    %v1848 = vunpack.c.l.b16 %v470
    %v1849 = vunpack.c.h.b16 %v470
    %v1850 = vunpack.c.l.b16 %v471
    %v1851 = vunpack.c.h.b16 %v471
    %v1852 = vunpack.c.l.b16 %v472
    %v1853 = vunpack.c.h.b16 %v472
    %v1854 = vunpack.c.l.b16 %v473
    %v1855 = vunpack.c.h.b16 %v473
    %v1856 = vunpack.c.l.b16 %v474
    %v1857 = vunpack.c.h.b16 %v474
    %v1858 = vunpack.c.l.b16 %v475
    %v1859 = vunpack.c.h.b16 %v475
    %v1860 = vunpack.c.l.b16 %v476
    %v1861 = vunpack.c.h.b16 %v476
    %v1862 = vunpack.c.l.b16 %v477
    %v1863 = vunpack.c.h.b16 %v477
    %v1864 = vunpack.c.l.b16 %v478
    %v1865 = vunpack.c.h.b16 %v478
    %v1866 = vunpack.c.l.b16 %v479
    %v1867 = vunpack.c.h.b16 %v479
    %v1868 = vunpack.c.l.b16 %v480
    %v1869 = vunpack.c.h.b16 %v480
    %v1870 = vunpack.c.l.b16 %v481
    %v1871 = vunpack.c.h.b16 %v481
    %v1872 = vunpack.c.l.b16 %v482
    %v1873 = vunpack.c.h.b16 %v482
    %v1874 = vunpack.c.l.b16 %v483
    %v1875 = vunpack.c.h.b16 %v483
    %v1876 = vunpack.c.l.b16 %v484
    %v1877 = vunpack.c.h.b16 %v484
    %v1878 = vunpack.c.l.b16 %v485
    %v1879 = vunpack.c.h.b16 %v485
    %v1880 = vunpack.c.l.b16 %v486
    %v1881 = vunpack.c.h.b16 %v486
    %v1882 = vunpack.c.l.b16 %v487
    %v1883 = vunpack.c.h.b16 %v487
    %v1884 = vunpack.c.l.b16 %v488
    %v1885 = vunpack.c.h.b16 %v488
    %v1886 = vunpack.c.l.b16 %v489
    %v1887 = vunpack.c.h.b16 %v489
    %v1888 = vunpack.c.l.b16 %v490
    %v1889 = vunpack.c.h.b16 %v490
    %v1890 = vunpack.c.l.b16 %v491
    %v1891 = vunpack.c.h.b16 %v491
    %v1892 = vunpack.c.l.b16 %v492
    %v1893 = vunpack.c.h.b16 %v492
    %v1894 = vunpack.c.l.b16 %v493
    %v1895 = vunpack.c.h.b16 %v493
    %v1896 = vunpack.c.l.b16 %v494
    %v1897 = vunpack.c.h.b16 %v494
    %v1898 = vunpack.c.l.b16 %v495
    %v1899 = vunpack.c.h.b16 %v495
    %v1900 = vunpack.c.l.b16 %v496
    %v1901 = vunpack.c.h.b16 %v496
    %v1902 = vunpack.c.l.b16 %v497
    %v1903 = vunpack.c.h.b16 %v497
    %v1904 = vunpack.c.l.b16 %v498
    %v1905 = vunpack.c.h.b16 %v498
    %v1906 = vunpack.c.l.b16 %v499
    %v1907 = vunpack.c.h.b16 %v499
    %v1908 = vunpack.c.l.b16 %v500
    %v1909 = vunpack.c.h.b16 %v500
    %v1910 = vunpack.c.l.b16 %v501
    %v1911 = vunpack.c.h.b16 %v501
    %v1912 = vunpack.c.l.b16 %v502
    %v1913 = vunpack.c.h.b16 %v502
    %v1914 = vunpack.c.l.b16 %v503
    %v1915 = vunpack.c.h.b16 %v503
    %v1916 = vunpack.c.l.b16 %v504
    %v1917 = vunpack.c.h.b16 %v504
    %v1918 = vunpack.c.l.b16 %v505
    %v1919 = vunpack.c.h.b16 %v505
    %v1920 = vunpack.c.l.b16 %v506
    %v1921 = vunpack.c.h.b16 %v506
    %v1922 = vunpack.c.l.b16 %v507
    %v1923 = vunpack.c.h.b16 %v507
    %v1924 = vunpack.c.l.b16 %v508
    %v1925 = vunpack.c.h.b16 %v508
    %v1926 = vunpack.c.l.b16 %v509
    %v1927 = vunpack.c.h.b16 %v509
    %v1928 = vunpack.c.l.b16 %v510
    %v1929 = vunpack.c.h.b16 %v510
    %v1930 = vunpack.c.l.b16 %v511
    %v1931 = vunpack.c.h.b16 %v511
    %v1932 = vunpack.c.l.b16 %v512
    %v1933 = vunpack.c.h.b16 %v512
    %v1934 = vunpack.c.l.b16 %v513
    %v1935 = vunpack.c.h.b16 %v513
    %v1936 = vunpack.c.l.b16 %v514
    %v1937 = vunpack.c.h.b16 %v514
    %v1938 = vunpack.c.l.b16 %v515
    %v1939 = vunpack.c.h.b16 %v515
    %v1940 = vunpack.c.l.b16 %v516
    %v1941 = vunpack.c.h.b16 %v516
    %v1942 = vunpack.c.l.b16 %v517
    %v1943 = vunpack.c.h.b16 %v517
    %v1944 = vunpack.c.l.b16 %v518
    %v1945 = vunpack.c.h.b16 %v518
    %v1946 = vunpack.c.l.b16 %v519
    %v1947 = vunpack.c.h.b16 %v519
    %v1948 = vunpack.c.l.b16 %v520
    %v1949 = vunpack.c.h.b16 %v520
    %v1950 = vunpack.c.l.b16 %v521
    %v1951 = vunpack.c.h.b16 %v521
    %v1952 = vunpack.c.l.b16 %v522
    %v1953 = vunpack.c.h.b16 %v522
    %v1954 = vunpack.c.l.b16 %v523
    %v1955 = vunpack.c.h.b16 %v523
    %v1956 = vunpack.c.l.b16 %v524
    %v1957 = vunpack.c.h.b16 %v524
    %v1958 = vunpack.c.l.b16 %v525
    %v1959 = vunpack.c.h.b16 %v525
    %v1960 = vunpack.c.l.b16 %v526
    %v1961 = vunpack.c.h.b16 %v526
    %v1962 = vunpack.c.l.b16 %v527
    %v1963 = vunpack.c.h.b16 %v527
    %v1964 = vunpack.c.l.b16 %v528
    %v1965 = vunpack.c.h.b16 %v528
    %v1966 = vunpack.c.l.b16 %v529
    %v1967 = vunpack.c.h.b16 %v529
    %v1968 = vunpack.c.l.b16 %v530
    %v1969 = vunpack.c.h.b16 %v530
    %v1970 = vunpack.c.l.b16 %v531
    %v1971 = vunpack.c.h.b16 %v531
    %v1972 = vunpack.c.l.b16 %v532
    %v1973 = vunpack.c.h.b16 %v532
    %v1974 = vunpack.c.l.b16 %v533
    %v1975 = vunpack.c.h.b16 %v533
    %v1976 = vunpack.c.l.b16 %v534
    %v1977 = vunpack.c.h.b16 %v534
    %v1978 = vunpack.c.l.b16 %v535
    %v1979 = vunpack.c.h.b16 %v535
    %v1980 = vunpack.c.l.b16 %v536
    %v1981 = vunpack.c.h.b16 %v536
    %v1982 = vunpack.c.l.b16 %v537
    %v1983 = vunpack.c.h.b16 %v537
    %v1984 = vunpack.c.l.b16 %v538
    %v1985 = vunpack.c.h.b16 %v538
    %v1986 = vunpack.c.l.b16 %v539
    %v1987 = vunpack.c.h.b16 %v539
    %v1988 = vunpack.c.l.b16 %v540
    %v1989 = vunpack.c.h.b16 %v540
    %v1990 = vunpack.c.l.b16 %v541
    %v1991 = vunpack.c.h.b16 %v541
    %v1992 = vunpack.c.l.b16 %v542
    %v1993 = vunpack.c.h.b16 %v542
    %v1994 = vunpack.c.l.b16 %v543
    %v1995 = vunpack.c.h.b16 %v543
    %v1996 = vunpack.c.l.b16 %v544
    %v1997 = vunpack.c.h.b16 %v544
    %v1998 = vunpack.c.l.b16 %v545
    %v1999 = vunpack.c.h.b16 %v545
    %v2000 = vunpack.c.l.b16 %v546
    %v2001 = vunpack.c.h.b16 %v546
    %v2002 = vunpack.c.l.b16 %v547
    %v2003 = vunpack.c.h.b16 %v547
    %v2004 = vunpack.c.l.b16 %v548
    %v2005 = vunpack.c.h.b16 %v548
    %v2006 = vunpack.c.l.b16 %v549
    %v2007 = vunpack.c.h.b16 %v549
    %v2008 = vunpack.c.l.b16 %v550
    %v2009 = vunpack.c.h.b16 %v550
    %v2010 = vunpack.c.l.b16 %v551
    %v2011 = vunpack.c.h.b16 %v551
    %v2012 = vunpack.c.l.b16 %v552
    %v2013 = vunpack.c.h.b16 %v552
    %v2014 = vunpack.c.l.b16 %v553
    %v2015 = vunpack.c.h.b16 %v553
    %v2016 = vunpack.c.l.b16 %v554
    %v2017 = vunpack.c.h.b16 %v554
    %v2018 = vunpack.c.l.b16 %v555
    %v2019 = vunpack.c.h.b16 %v555
    %v2020 = vunpack.c.l.b16 %v556
    %v2021 = vunpack.c.h.b16 %v556
    %v2022 = vunpack.c.l.b16 %v557
    %v2023 = vunpack.c.h.b16 %v557
    %v2024 = vunpack.c.l.b16 %v558
    %v2025 = vunpack.c.h.b16 %v558
    %v2026 = vunpack.c.l.b16 %v559
    %v2027 = vunpack.c.h.b16 %v559
    %v2028 = vunpack.c.l.b16 %v560
    %v2029 = vunpack.c.h.b16 %v560
    %v2030 = vunpack.c.l.b16 %v561
    %v2031 = vunpack.c.h.b16 %v561
    %v2032 = vunpack.c.l.b16 %v562
    %v2033 = vunpack.c.h.b16 %v562
    %v2034 = vunpack.c.l.b16 %v563
    %v2035 = vunpack.c.h.b16 %v563
    %v2036 = vunpack.c.l.b16 %v564
    %v2037 = vunpack.c.h.b16 %v564
    %v2038 = vunpack.c.l.b16 %v565
    %v2039 = vunpack.c.h.b16 %v565
    %v2040 = vunpack.c.l.b16 %v566
    %v2041 = vunpack.c.h.b16 %v566
    %v2042 = vunpack.c.l.b16 %v567
    %v2043 = vunpack.c.h.b16 %v567
    %v2044 = vunpack.c.l.b16 %v568
    %v2045 = vunpack.c.h.b16 %v568
    %v2046 = vunpack.c.l.b16 %v569
    %v2047 = vunpack.c.h.b16 %v569
    %v2048 = vunpack.c.l.b16 %v570
    %v2049 = vunpack.c.h.b16 %v570
    %v2050 = vunpack.c.l.b16 %v571
    %v2051 = vunpack.c.h.b16 %v571
    %v2052 = vunpack.c.l.b16 %v572
    %v2053 = vunpack.c.h.b16 %v572
    %v2054 = vunpack.c.l.b16 %v573
    %v2055 = vunpack.c.h.b16 %v573
    %v2056 = vunpack.c.l.b16 %v574
    %v2057 = vunpack.c.h.b16 %v574
    %v2058 = vunpack.c.l.b16 %v575
    %v2059 = vunpack.c.h.b16 %v575
    %v2060 = vunpack.c.l.b16 %v576
    %v2061 = vunpack.c.h.b16 %v576
    %v2062 = vunpack.c.l.b16 %v577
    %v2063 = vunpack.c.h.b16 %v577
    %v2064 = vunpack.c.l.b16 %v578
    %v2065 = vunpack.c.h.b16 %v578
    %v2066 = vunpack.c.l.b16 %v579
    %v2067 = vunpack.c.h.b16 %v579
    %v2068 = vunpack.c.l.b16 %v580
    %v2069 = vunpack.c.h.b16 %v580
    %v2070 = vunpack.c.l.b16 %v581
    %v2071 = vunpack.c.h.b16 %v581
    %v2072 = vunpack.c.l.b16 %v582
    %v2073 = vunpack.c.h.b16 %v582
    %v2074 = vunpack.c.l.b16 %v583
    %v2075 = vunpack.c.h.b16 %v583
    %v2076 = vunpack.c.l.b16 %v584
    %v2077 = vunpack.c.h.b16 %v584
    %v2078 = vunpack.c.l.b16 %v585
    %v2079 = vunpack.c.h.b16 %v585
    %v2080 = vunpack.c.l.b16 %v586
    %v2081 = vunpack.c.h.b16 %v586
    %v2082 = vunpack.c.l.b16 %v587
    %v2083 = vunpack.c.h.b16 %v587
    %v2084 = vunpack.c.l.b16 %v588
    %v2085 = vunpack.c.h.b16 %v588
    %v2086 = vunpack.c.l.b16 %v589
    %v2087 = vunpack.c.h.b16 %v589
    %v2088 = vunpack.c.l.b16 %v590
    %v2089 = vunpack.c.h.b16 %v590
    %v2090 = vunpack.c.l.b16 %v591
    %v2091 = vunpack.c.h.b16 %v591
    %v2092 = vunpack.c.l.b16 %v592
    %v2093 = vunpack.c.h.b16 %v592
    %v2094 = vunpack.c.l.b16 %v593
    %v2095 = vunpack.c.h.b16 %v593
    %v2096 = vunpack.c.l.b16 %v594
    %v2097 = vunpack.c.h.b16 %v594
    %v2098 = vunpack.c.l.b16 %v595
    %v2099 = vunpack.c.h.b16 %v595
    %v2100 = vunpack.c.l.b16 %v596
    %v2101 = vunpack.c.h.b16 %v596
    %v2102 = vunpack.c.l.b16 %v597
    %v2103 = vunpack.c.h.b16 %v597
    %v2104 = vunpack.c.l.b16 %v598
    %v2105 = vunpack.c.h.b16 %v598
    %v2106 = vunpack.c.l.b16 %v599
    %v2107 = vunpack.c.h.b16 %v599
    %v2108 = vunpack.c.l.b16 %v600
    %v2109 = vunpack.c.h.b16 %v600
    %v2110 = vunpack.c.l.b16 %v601
    %v2111 = vunpack.c.h.b16 %v601
    %v2112 = vunpack.c.l.b16 %v602
    %v2113 = vunpack.c.h.b16 %v602
    %v2114 = vunpack.c.l.b16 %v603
    %v2115 = vunpack.c.h.b16 %v603
    %v2116 = vunpack.c.l.b16 %v604
    %v2117 = vunpack.c.h.b16 %v604
    %v2118 = vunpack.c.l.b16 %v605
    %v2119 = vunpack.c.h.b16 %v605
    %v2120 = vunpack.c.l.b16 %v606
    %v2121 = vunpack.c.h.b16 %v606
    %v2122 = vunpack.c.l.b16 %v607
    %v2123 = vunpack.c.h.b16 %v607
    %v2124 = vunpack.c.l.b16 %v608
    %v2125 = vunpack.c.h.b16 %v608
    %v2126 = vunpack.c.l.b16 %v609
    %v2127 = vunpack.c.h.b16 %v609
    %v2128 = vunpack.c.l.b16 %v610
    %v2129 = vunpack.c.h.b16 %v610
    %v2130 = vunpack.c.l.b16 %v611
    %v2131 = vunpack.c.h.b16 %v611
    %v2132 = vunpack.c.l.b16 %v612
    %v2133 = vunpack.c.h.b16 %v612
    %v2134 = vunpack.c.l.b16 %v613
    %v2135 = vunpack.c.h.b16 %v613
    %v2136 = vunpack.c.l.b16 %v614
    %v2137 = vunpack.c.h.b16 %v614
    %v2138 = vunpack.c.l.b16 %v615
    %v2139 = vunpack.c.h.b16 %v615
    %v2140 = vunpack.c.l.b16 %v616
    %v2141 = vunpack.c.h.b16 %v616
    %v2142 = vunpack.c.l.b16 %v617
    %v2143 = vunpack.c.h.b16 %v617
    %v2144 = vunpack.c.l.b16 %v618
    %v2145 = vunpack.c.h.b16 %v618
    %v2146 = vunpack.c.l.b16 %v619
    %v2147 = vunpack.c.h.b16 %v619
    %v2148 = vunpack.c.l.b16 %v620
    %v2149 = vunpack.c.h.b16 %v620
    %v2150 = vunpack.c.l.b16 %v621
    %v2151 = vunpack.c.h.b16 %v621
    %v2152 = vunpack.c.l.b16 %v622
    %v2153 = vunpack.c.h.b16 %v622
    %v2154 = vunpack.c.l.b16 %v623
    %v2155 = vunpack.c.h.b16 %v623
    %v2156 = vunpack.c.l.b16 %v624
    %v2157 = vunpack.c.h.b16 %v624
    %v2158 = vunpack.c.l.b16 %v625
    %v2159 = vunpack.c.h.b16 %v625
    %v2160 = vunpack.c.l.b16 %v626
    %v2161 = vunpack.c.h.b16 %v626
    %v2162 = vunpack.c.l.b16 %v627
    %v2163 = vunpack.c.h.b16 %v627
    %v2164 = vunpack.c.l.b16 %v628
    %v2165 = vunpack.c.h.b16 %v628
    %v2166 = vunpack.c.l.b16 %v629
    %v2167 = vunpack.c.h.b16 %v629
    %v2168 = vunpack.c.l.b16 %v630
    %v2169 = vunpack.c.h.b16 %v630
    %v2170 = vunpack.c.l.b16 %v631
    %v2171 = vunpack.c.h.b16 %v631
    %v2172 = vunpack.c.l.b16 %v632
    %v2173 = vunpack.c.h.b16 %v632
    %v2174 = vunpack.c.l.b16 %v633
    %v2175 = vunpack.c.h.b16 %v633
    %v2176 = vpack.c.b16 %v1154, %v1152
    %v2177 = vpack.c.b16 %v1155, %v1153
    %v2178 = vpack.c.b16 %v1158, %v1156
    %v2179 = vpack.c.b16 %v1159, %v1157
    %v2180 = vpack.c.b16 %v1162, %v1160
    %v2181 = vpack.c.b16 %v1163, %v1161
    %v2182 = vpack.c.b16 %v1166, %v1164
    %v2183 = vpack.c.b16 %v1167, %v1165
    %v2184 = vpack.c.b16 %v1170, %v1168
    %v2185 = vpack.c.b16 %v1171, %v1169
    %v2186 = vpack.c.b16 %v1174, %v1172
    %v2187 = vpack.c.b16 %v1175, %v1173
    %v2188 = vpack.c.b16 %v1178, %v1176
    %v2189 = vpack.c.b16 %v1179, %v1177
    %v2190 = vpack.c.b16 %v1182, %v1180
    %v2191 = vpack.c.b16 %v1183, %v1181
    %v2192 = vpack.c.b16 %v1186, %v1184
    %v2193 = vpack.c.b16 %v1187, %v1185
    %v2194 = vpack.c.b16 %v1190, %v1188
    %v2195 = vpack.c.b16 %v1191, %v1189
    %v2196 = vpack.c.b16 %v1194, %v1192
    %v2197 = vpack.c.b16 %v1195, %v1193
    %v2198 = vpack.c.b16 %v1198, %v1196
    %v2199 = vpack.c.b16 %v1199, %v1197
    %v2200 = vpack.c.b16 %v1202, %v1200
    %v2201 = vpack.c.b16 %v1203, %v1201
    %v2202 = vpack.c.b16 %v1206, %v1204
    %v2203 = vpack.c.b16 %v1207, %v1205
    %v2204 = vpack.c.b16 %v1210, %v1208
    %v2205 = vpack.c.b16 %v1211, %v1209
    %v2206 = vpack.c.b16 %v1214, %v1212
    %v2207 = vpack.c.b16 %v1215, %v1213
    %v2208 = vpack.c.b16 %v1218, %v1216
    %v2209 = vpack.c.b16 %v1219, %v1217
    %v2210 = vpack.c.b16 %v1222, %v1220
    %v2211 = vpack.c.b16 %v1223, %v1221
    %v2212 = vpack.c.b16 %v1226, %v1224
    %v2213 = vpack.c.b16 %v1227, %v1225
    %v2214 = vpack.c.b16 %v1230, %v1228
    %v2215 = vpack.c.b16 %v1231, %v1229
    %v2216 = vpack.c.b16 %v1234, %v1232
    %v2217 = vpack.c.b16 %v1235, %v1233
    %v2218 = vpack.c.b16 %v1238, %v1236
    %v2219 = vpack.c.b16 %v1239, %v1237
    %v2220 = vpack.c.b16 %v1242, %v1240
    %v2221 = vpack.c.b16 %v1243, %v1241
    %v2222 = vpack.c.b16 %v1246, %v1244
    %v2223 = vpack.c.b16 %v1247, %v1245
    %v2224 = vpack.c.b16 %v1250, %v1248
    %v2225 = vpack.c.b16 %v1251, %v1249
    %v2226 = vpack.c.b16 %v1254, %v1252
    %v2227 = vpack.c.b16 %v1255, %v1253
    %v2228 = vpack.c.b16 %v1258, %v1256
    %v2229 = vpack.c.b16 %v1259, %v1257
    %v2230 = vpack.c.b16 %v1262, %v1260
    %v2231 = vpack.c.b16 %v1263, %v1261
    %v2232 = vpack.c.b16 %v1266, %v1264
    %v2233 = vpack.c.b16 %v1267, %v1265
    %v2234 = vpack.c.b16 %v1270, %v1268
    %v2235 = vpack.c.b16 %v1271, %v1269
    %v2236 = vpack.c.b16 %v1274, %v1272
    %v2237 = vpack.c.b16 %v1275, %v1273
    %v2238 = vpack.c.b16 %v1278, %v1276
    %v2239 = vpack.c.b16 %v1279, %v1277
    %v2240 = vpack.c.b16 %v1282, %v1280
    %v2241 = vpack.c.b16 %v1283, %v1281
    %v2242 = vpack.c.b16 %v1286, %v1284
    %v2243 = vpack.c.b16 %v1287, %v1285
    %v2244 = vpack.c.b16 %v1290, %v1288
    %v2245 = vpack.c.b16 %v1291, %v1289
    %v2246 = vpack.c.b16 %v1294, %v1292
    %v2247 = vpack.c.b16 %v1295, %v1293
    %v2248 = vpack.c.b16 %v1298, %v1296
    %v2249 = vpack.c.b16 %v1299, %v1297
    %v2250 = vpack.c.b16 %v1302, %v1300
    %v2251 = vpack.c.b16 %v1303, %v1301
    %v2252 = vpack.c.b16 %v1306, %v1304
    %v2253 = vpack.c.b16 %v1307, %v1305
    %v2254 = vpack.c.b16 %v1310, %v1308
    %v2255 = vpack.c.b16 %v1311, %v1309
    %v2256 = vpack.c.b16 %v1314, %v1312
    %v2257 = vpack.c.b16 %v1315, %v1313
    %v2258 = vpack.c.b16 %v1318, %v1316
    %v2259 = vpack.c.b16 %v1319, %v1317
    %v2260 = vpack.c.b16 %v1322, %v1320
    %v2261 = vpack.c.b16 %v1323, %v1321
    %v2262 = vpack.c.b16 %v1326, %v1324
    %v2263 = vpack.c.b16 %v1327, %v1325
    %v2264 = vpack.c.b16 %v1330, %v1328
    %v2265 = vpack.c.b16 %v1331, %v1329
    %v2266 = vpack.c.b16 %v1334, %v1332
    %v2267 = vpack.c.b16 %v1335, %v1333
    %v2268 = vpack.c.b16 %v1338, %v1336
    %v2269 = vpack.c.b16 %v1339, %v1337
    %v2270 = vpack.c.b16 %v1342, %v1340
    %v2271 = vpack.c.b16 %v1343, %v1341
    %v2272 = vpack.c.b16 %v1346, %v1344
    %v2273 = vpack.c.b16 %v1347, %v1345
    %v2274 = vpack.c.b16 %v1350, %v1348
    %v2275 = vpack.c.b16 %v1351, %v1349
    %v2276 = vpack.c.b16 %v1354, %v1352
    %v2277 = vpack.c.b16 %v1355, %v1353
    %v2278 = vpack.c.b16 %v1358, %v1356
    %v2279 = vpack.c.b16 %v1359, %v1357
    %v2280 = vpack.c.b16 %v1362, %v1360
    %v2281 = vpack.c.b16 %v1363, %v1361
    %v2282 = vpack.c.b16 %v1366, %v1364
    %v2283 = vpack.c.b16 %v1367, %v1365
    %v2284 = vpack.c.b16 %v1370, %v1368
    %v2285 = vpack.c.b16 %v1371, %v1369
    %v2286 = vpack.c.b16 %v1374, %v1372
    %v2287 = vpack.c.b16 %v1375, %v1373
    %v2288 = vpack.c.b16 %v1378, %v1376
    %v2289 = vpack.c.b16 %v1379, %v1377
    %v2290 = vpack.c.b16 %v1382, %v1380
    %v2291 = vpack.c.b16 %v1383, %v1381
    %v2292 = vpack.c.b16 %v1386, %v1384
    %v2293 = vpack.c.b16 %v1387, %v1385
    %v2294 = vpack.c.b16 %v1390, %v1388
    %v2295 = vpack.c.b16 %v1391, %v1389
    %v2296 = vpack.c.b16 %v1394, %v1392
    %v2297 = vpack.c.b16 %v1395, %v1393
    %v2298 = vpack.c.b16 %v1398, %v1396
    %v2299 = vpack.c.b16 %v1399, %v1397
    %v2300 = vpack.c.b16 %v1402, %v1400
    %v2301 = vpack.c.b16 %v1403, %v1401
    %v2302 = vpack.c.b16 %v1406, %v1404
    %v2303 = vpack.c.b16 %v1407, %v1405
    %v2304 = vpack.c.b16 %v1410, %v1408
    %v2305 = vpack.c.b16 %v1411, %v1409
    %v2306 = vpack.c.b16 %v1414, %v1412
    %v2307 = vpack.c.b16 %v1415, %v1413
    %v2308 = vpack.c.b16 %v1418, %v1416
    %v2309 = vpack.c.b16 %v1419, %v1417
    %v2310 = vpack.c.b16 %v1422, %v1420
    %v2311 = vpack.c.b16 %v1423, %v1421
    %v2312 = vpack.c.b16 %v1426, %v1424
    %v2313 = vpack.c.b16 %v1427, %v1425
    %v2314 = vpack.c.b16 %v1430, %v1428
    %v2315 = vpack.c.b16 %v1431, %v1429
    %v2316 = vpack.c.b16 %v1434, %v1432
    %v2317 = vpack.c.b16 %v1435, %v1433
    %v2318 = vpack.c.b16 %v1438, %v1436
    %v2319 = vpack.c.b16 %v1439, %v1437
    %v2320 = vpack.c.b16 %v1442, %v1440
    %v2321 = vpack.c.b16 %v1443, %v1441
    %v2322 = vpack.c.b16 %v1446, %v1444
    %v2323 = vpack.c.b16 %v1447, %v1445
    %v2324 = vpack.c.b16 %v1450, %v1448
    %v2325 = vpack.c.b16 %v1451, %v1449
    %v2326 = vpack.c.b16 %v1454, %v1452
    %v2327 = vpack.c.b16 %v1455, %v1453
    %v2328 = vpack.c.b16 %v1458, %v1456
    %v2329 = vpack.c.b16 %v1459, %v1457
    %v2330 = vpack.c.b16 %v1462, %v1460
    %v2331 = vpack.c.b16 %v1463, %v1461
    %v2332 = vpack.c.b16 %v1466, %v1464
    %v2333 = vpack.c.b16 %v1467, %v1465
    %v2334 = vpack.c.b16 %v1470, %v1468
    %v2335 = vpack.c.b16 %v1471, %v1469
    %v2336 = vpack.c.b16 %v1474, %v1472
    %v2337 = vpack.c.b16 %v1475, %v1473
    %v2338 = vpack.c.b16 %v1478, %v1476
    %v2339 = vpack.c.b16 %v1479, %v1477
    %v2340 = vpack.c.b16 %v1482, %v1480
    %v2341 = vpack.c.b16 %v1483, %v1481
    %v2342 = vpack.c.b16 %v1486, %v1484
    %v2343 = vpack.c.b16 %v1487, %v1485
    %v2344 = vpack.c.b16 %v1490, %v1488
    %v2345 = vpack.c.b16 %v1491, %v1489
    %v2346 = vpack.c.b16 %v1494, %v1492
    %v2347 = vpack.c.b16 %v1495, %v1493
    %v2348 = vpack.c.b16 %v1498, %v1496
    %v2349 = vpack.c.b16 %v1499, %v1497
    %v2350 = vpack.c.b16 %v1502, %v1500
    %v2351 = vpack.c.b16 %v1503, %v1501
    %v2352 = vpack.c.b16 %v1506, %v1504
    %v2353 = vpack.c.b16 %v1507, %v1505
    %v2354 = vpack.c.b16 %v1510, %v1508
    %v2355 = vpack.c.b16 %v1511, %v1509
    %v2356 = vpack.c.b16 %v1514, %v1512
    %v2357 = vpack.c.b16 %v1515, %v1513
    %v2358 = vpack.c.b16 %v1518, %v1516
    %v2359 = vpack.c.b16 %v1519, %v1517
    %v2360 = vpack.c.b16 %v1522, %v1520
    %v2361 = vpack.c.b16 %v1523, %v1521
    %v2362 = vpack.c.b16 %v1526, %v1524
    %v2363 = vpack.c.b16 %v1527, %v1525
    %v2364 = vpack.c.b16 %v1530, %v1528
    %v2365 = vpack.c.b16 %v1531, %v1529
    %v2366 = vpack.c.b16 %v1534, %v1532
    %v2367 = vpack.c.b16 %v1535, %v1533
    %v2368 = vpack.c.b16 %v1538, %v1536
    %v2369 = vpack.c.b16 %v1539, %v1537
    %v2370 = vpack.c.b16 %v1542, %v1540
    %v2371 = vpack.c.b16 %v1543, %v1541
    %v2372 = vpack.c.b16 %v1546, %v1544
    %v2373 = vpack.c.b16 %v1547, %v1545
    %v2374 = vpack.c.b16 %v1550, %v1548
    %v2375 = vpack.c.b16 %v1551, %v1549
    %v2376 = vpack.c.b16 %v1554, %v1552
    %v2377 = vpack.c.b16 %v1555, %v1553
    %v2378 = vpack.c.b16 %v1558, %v1556
    %v2379 = vpack.c.b16 %v1559, %v1557
    %v2380 = vpack.c.b16 %v1562, %v1560
    %v2381 = vpack.c.b16 %v1563, %v1561
    %v2382 = vpack.c.b16 %v1566, %v1564
    %v2383 = vpack.c.b16 %v1567, %v1565
    %v2384 = vpack.c.b16 %v1570, %v1568
    %v2385 = vpack.c.b16 %v1571, %v1569
    %v2386 = vpack.c.b16 %v1574, %v1572
    %v2387 = vpack.c.b16 %v1575, %v1573
    %v2388 = vpack.c.b16 %v1578, %v1576
    %v2389 = vpack.c.b16 %v1579, %v1577
    %v2390 = vpack.c.b16 %v1582, %v1580
    %v2391 = vpack.c.b16 %v1583, %v1581
    %v2392 = vpack.c.b16 %v1586, %v1584
    %v2393 = vpack.c.b16 %v1587, %v1585
    %v2394 = vpack.c.b16 %v1590, %v1588
    %v2395 = vpack.c.b16 %v1591, %v1589
    %v2396 = vpack.c.b16 %v1594, %v1592
    %v2397 = vpack.c.b16 %v1595, %v1593
    %v2398 = vpack.c.b16 %v1598, %v1596
    %v2399 = vpack.c.b16 %v1599, %v1597
    %v2400 = vpack.c.b16 %v1602, %v1600
    %v2401 = vpack.c.b16 %v1603, %v1601
    %v2402 = vpack.c.b16 %v1606, %v1604
    %v2403 = vpack.c.b16 %v1607, %v1605
    %v2404 = vpack.c.b16 %v1610, %v1608
    %v2405 = vpack.c.b16 %v1611, %v1609
    %v2406 = vpack.c.b16 %v1614, %v1612
    %v2407 = vpack.c.b16 %v1615, %v1613
    %v2408 = vpack.c.b16 %v1618, %v1616
    %v2409 = vpack.c.b16 %v1619, %v1617
    %v2410 = vpack.c.b16 %v1622, %v1620
    %v2411 = vpack.c.b16 %v1623, %v1621
    %v2412 = vpack.c.b16 %v1626, %v1624
    %v2413 = vpack.c.b16 %v1627, %v1625
    %v2414 = vpack.c.b16 %v1630, %v1628
    %v2415 = vpack.c.b16 %v1631, %v1629
    %v2416 = vpack.c.b16 %v1634, %v1632
    %v2417 = vpack.c.b16 %v1635, %v1633
    %v2418 = vpack.c.b16 %v1638, %v1636
    %v2419 = vpack.c.b16 %v1639, %v1637
    %v2420 = vpack.c.b16 %v1642, %v1640
    %v2421 = vpack.c.b16 %v1643, %v1641
    %v2422 = vpack.c.b16 %v1646, %v1644
    %v2423 = vpack.c.b16 %v1647, %v1645
    %v2424 = vpack.c.b16 %v1650, %v1648
    %v2425 = vpack.c.b16 %v1651, %v1649
    %v2426 = vpack.c.b16 %v1654, %v1652
    %v2427 = vpack.c.b16 %v1655, %v1653
    %v2428 = vpack.c.b16 %v1658, %v1656
    %v2429 = vpack.c.b16 %v1659, %v1657
    %v2430 = vpack.c.b16 %v1662, %v1660
    %v2431 = vpack.c.b16 %v1663, %v1661
    %v2432 = vpack.c.b16 %v1666, %v1664
    %v2433 = vpack.c.b16 %v1667, %v1665
    %v2434 = vpack.c.b16 %v1670, %v1668
    %v2435 = vpack.c.b16 %v1671, %v1669
    %v2436 = vpack.c.b16 %v1674, %v1672
    %v2437 = vpack.c.b16 %v1675, %v1673
    %v2438 = vpack.c.b16 %v1678, %v1676
    %v2439 = vpack.c.b16 %v1679, %v1677
    %v2440 = vpack.c.b16 %v1682, %v1680
    %v2441 = vpack.c.b16 %v1683, %v1681
    %v2442 = vpack.c.b16 %v1686, %v1684
    %v2443 = vpack.c.b16 %v1687, %v1685
    %v2444 = vpack.c.b16 %v1690, %v1688
    %v2445 = vpack.c.b16 %v1691, %v1689
    %v2446 = vpack.c.b16 %v1694, %v1692
    %v2447 = vpack.c.b16 %v1695, %v1693
    %v2448 = vpack.c.b16 %v1698, %v1696
    %v2449 = vpack.c.b16 %v1699, %v1697
    %v2450 = vpack.c.b16 %v1702, %v1700
    %v2451 = vpack.c.b16 %v1703, %v1701
    %v2452 = vpack.c.b16 %v1706, %v1704
    %v2453 = vpack.c.b16 %v1707, %v1705
    %v2454 = vpack.c.b16 %v1710, %v1708
    %v2455 = vpack.c.b16 %v1711, %v1709
    %v2456 = vpack.c.b16 %v1714, %v1712
    %v2457 = vpack.c.b16 %v1715, %v1713
    %v2458 = vpack.c.b16 %v1718, %v1716
    %v2459 = vpack.c.b16 %v1719, %v1717
    %v2460 = vpack.c.b16 %v1722, %v1720
    %v2461 = vpack.c.b16 %v1723, %v1721
    %v2462 = vpack.c.b16 %v1726, %v1724
    %v2463 = vpack.c.b16 %v1727, %v1725
    %v2464 = vpack.c.b16 %v1730, %v1728
    %v2465 = vpack.c.b16 %v1731, %v1729
    %v2466 = vpack.c.b16 %v1734, %v1732
    %v2467 = vpack.c.b16 %v1735, %v1733
    %v2468 = vpack.c.b16 %v1738, %v1736
    %v2469 = vpack.c.b16 %v1739, %v1737
    %v2470 = vpack.c.b16 %v1742, %v1740
    %v2471 = vpack.c.b16 %v1743, %v1741
    %v2472 = vpack.c.b16 %v1746, %v1744
    %v2473 = vpack.c.b16 %v1747, %v1745
    %v2474 = vpack.c.b16 %v1750, %v1748
    %v2475 = vpack.c.b16 %v1751, %v1749
    %v2476 = vpack.c.b16 %v1754, %v1752
    %v2477 = vpack.c.b16 %v1755, %v1753
    %v2478 = vpack.c.b16 %v1758, %v1756
    %v2479 = vpack.c.b16 %v1759, %v1757
    %v2480 = vpack.c.b16 %v1762, %v1760
    %v2481 = vpack.c.b16 %v1763, %v1761
    %v2482 = vpack.c.b16 %v1766, %v1764
    %v2483 = vpack.c.b16 %v1767, %v1765
    %v2484 = vpack.c.b16 %v1770, %v1768
    %v2485 = vpack.c.b16 %v1771, %v1769
    %v2486 = vpack.c.b16 %v1774, %v1772
    %v2487 = vpack.c.b16 %v1775, %v1773
    %v2488 = vpack.c.b16 %v1778, %v1776
    %v2489 = vpack.c.b16 %v1779, %v1777
    %v2490 = vpack.c.b16 %v1782, %v1780
    %v2491 = vpack.c.b16 %v1783, %v1781
    %v2492 = vpack.c.b16 %v1786, %v1784
    %v2493 = vpack.c.b16 %v1787, %v1785
    %v2494 = vpack.c.b16 %v1790, %v1788
    %v2495 = vpack.c.b16 %v1791, %v1789
    %v2496 = vpack.c.b16 %v1794, %v1792
    %v2497 = vpack.c.b16 %v1795, %v1793
    %v2498 = vpack.c.b16 %v1798, %v1796
    %v2499 = vpack.c.b16 %v1799, %v1797
    %v2500 = vpack.c.b16 %v1802, %v1800
    %v2501 = vpack.c.b16 %v1803, %v1801
    %v2502 = vpack.c.b16 %v1806, %v1804
    %v2503 = vpack.c.b16 %v1807, %v1805
    %v2504 = vpack.c.b16 %v1810, %v1808
    %v2505 = vpack.c.b16 %v1811, %v1809
    %v2506 = vpack.c.b16 %v1814, %v1812
    %v2507 = vpack.c.b16 %v1815, %v1813
    %v2508 = vpack.c.b16 %v1818, %v1816
    %v2509 = vpack.c.b16 %v1819, %v1817
    %v2510 = vpack.c.b16 %v1822, %v1820
    %v2511 = vpack.c.b16 %v1823, %v1821
    %v2512 = vpack.c.b16 %v1826, %v1824
    %v2513 = vpack.c.b16 %v1827, %v1825
    %v2514 = vpack.c.b16 %v1830, %v1828
    %v2515 = vpack.c.b16 %v1831, %v1829
    %v2516 = vpack.c.b16 %v1834, %v1832
    %v2517 = vpack.c.b16 %v1835, %v1833
    %v2518 = vpack.c.b16 %v1838, %v1836
    %v2519 = vpack.c.b16 %v1839, %v1837
    %v2520 = vpack.c.b16 %v1842, %v1840
    %v2521 = vpack.c.b16 %v1843, %v1841
    %v2522 = vpack.c.b16 %v1846, %v1844
    %v2523 = vpack.c.b16 %v1847, %v1845
    %v2524 = vpack.c.b16 %v1850, %v1848
    %v2525 = vpack.c.b16 %v1851, %v1849
    %v2526 = vpack.c.b16 %v1854, %v1852
    %v2527 = vpack.c.b16 %v1855, %v1853
    %v2528 = vpack.c.b16 %v1858, %v1856
    %v2529 = vpack.c.b16 %v1859, %v1857
    %v2530 = vpack.c.b16 %v1862, %v1860
    %v2531 = vpack.c.b16 %v1863, %v1861
    %v2532 = vpack.c.b16 %v1866, %v1864
    %v2533 = vpack.c.b16 %v1867, %v1865
    %v2534 = vpack.c.b16 %v1870, %v1868
    %v2535 = vpack.c.b16 %v1871, %v1869
    %v2536 = vpack.c.b16 %v1874, %v1872
    %v2537 = vpack.c.b16 %v1875, %v1873
    %v2538 = vpack.c.b16 %v1878, %v1876
    %v2539 = vpack.c.b16 %v1879, %v1877
    %v2540 = vpack.c.b16 %v1882, %v1880
    %v2541 = vpack.c.b16 %v1883, %v1881
    %v2542 = vpack.c.b16 %v1886, %v1884
    %v2543 = vpack.c.b16 %v1887, %v1885
    %v2544 = vpack.c.b16 %v1890, %v1888
    %v2545 = vpack.c.b16 %v1891, %v1889
    %v2546 = vpack.c.b16 %v1894, %v1892
    %v2547 = vpack.c.b16 %v1895, %v1893
    %v2548 = vpack.c.b16 %v1898, %v1896
    %v2549 = vpack.c.b16 %v1899, %v1897
    %v2550 = vpack.c.b16 %v1902, %v1900
    %v2551 = vpack.c.b16 %v1903, %v1901
    %v2552 = vpack.c.b16 %v1906, %v1904
    %v2553 = vpack.c.b16 %v1907, %v1905
    %v2554 = vpack.c.b16 %v1910, %v1908
    %v2555 = vpack.c.b16 %v1911, %v1909
    %v2556 = vpack.c.b16 %v1914, %v1912
    %v2557 = vpack.c.b16 %v1915, %v1913
    %v2558 = vpack.c.b16 %v1918, %v1916
    %v2559 = vpack.c.b16 %v1919, %v1917
    %v2560 = vpack.c.b16 %v1922, %v1920
    %v2561 = vpack.c.b16 %v1923, %v1921
    %v2562 = vpack.c.b16 %v1926, %v1924
    %v2563 = vpack.c.b16 %v1927, %v1925
    %v2564 = vpack.c.b16 %v1930, %v1928
    %v2565 = vpack.c.b16 %v1931, %v1929
    %v2566 = vpack.c.b16 %v1934, %v1932
    %v2567 = vpack.c.b16 %v1935, %v1933
    %v2568 = vpack.c.b16 %v1938, %v1936
    %v2569 = vpack.c.b16 %v1939, %v1937
    %v2570 = vpack.c.b16 %v1942, %v1940
    %v2571 = vpack.c.b16 %v1943, %v1941
    %v2572 = vpack.c.b16 %v1946, %v1944
    %v2573 = vpack.c.b16 %v1947, %v1945
    %v2574 = vpack.c.b16 %v1950, %v1948
    %v2575 = vpack.c.b16 %v1951, %v1949
    %v2576 = vpack.c.b16 %v1954, %v1952
    %v2577 = vpack.c.b16 %v1955, %v1953
    %v2578 = vpack.c.b16 %v1958, %v1956
    %v2579 = vpack.c.b16 %v1959, %v1957
    %v2580 = vpack.c.b16 %v1962, %v1960
    %v2581 = vpack.c.b16 %v1963, %v1961
    %v2582 = vpack.c.b16 %v1966, %v1964
    %v2583 = vpack.c.b16 %v1967, %v1965
    %v2584 = vpack.c.b16 %v1970, %v1968
    %v2585 = vpack.c.b16 %v1971, %v1969
    %v2586 = vpack.c.b16 %v1974, %v1972
    %v2587 = vpack.c.b16 %v1975, %v1973
    %v2588 = vpack.c.b16 %v1978, %v1976
    %v2589 = vpack.c.b16 %v1979, %v1977
    %v2590 = vpack.c.b16 %v1982, %v1980
    %v2591 = vpack.c.b16 %v1983, %v1981
    %v2592 = vpack.c.b16 %v1986, %v1984
    %v2593 = vpack.c.b16 %v1987, %v1985
    %v2594 = vpack.c.b16 %v1990, %v1988
    %v2595 = vpack.c.b16 %v1991, %v1989
    %v2596 = vpack.c.b16 %v1994, %v1992
    %v2597 = vpack.c.b16 %v1995, %v1993
    %v2598 = vpack.c.b16 %v1998, %v1996
    %v2599 = vpack.c.b16 %v1999, %v1997
    %v2600 = vpack.c.b16 %v2002, %v2000
    %v2601 = vpack.c.b16 %v2003, %v2001
    %v2602 = vpack.c.b16 %v2006, %v2004
    %v2603 = vpack.c.b16 %v2007, %v2005
    %v2604 = vpack.c.b16 %v2010, %v2008
    %v2605 = vpack.c.b16 %v2011, %v2009
    %v2606 = vpack.c.b16 %v2014, %v2012
    %v2607 = vpack.c.b16 %v2015, %v2013
    %v2608 = vpack.c.b16 %v2018, %v2016
    %v2609 = vpack.c.b16 %v2019, %v2017
    %v2610 = vpack.c.b16 %v2022, %v2020
    %v2611 = vpack.c.b16 %v2023, %v2021
    %v2612 = vpack.c.b16 %v2026, %v2024
    %v2613 = vpack.c.b16 %v2027, %v2025
    %v2614 = vpack.c.b16 %v2030, %v2028
    %v2615 = vpack.c.b16 %v2031, %v2029
    %v2616 = vpack.c.b16 %v2034, %v2032
    %v2617 = vpack.c.b16 %v2035, %v2033
    %v2618 = vpack.c.b16 %v2038, %v2036
    %v2619 = vpack.c.b16 %v2039, %v2037
    %v2620 = vpack.c.b16 %v2042, %v2040
    %v2621 = vpack.c.b16 %v2043, %v2041
    %v2622 = vpack.c.b16 %v2046, %v2044
    %v2623 = vpack.c.b16 %v2047, %v2045
    %v2624 = vpack.c.b16 %v2050, %v2048
    %v2625 = vpack.c.b16 %v2051, %v2049
    %v2626 = vpack.c.b16 %v2054, %v2052
    %v2627 = vpack.c.b16 %v2055, %v2053
    %v2628 = vpack.c.b16 %v2058, %v2056
    %v2629 = vpack.c.b16 %v2059, %v2057
    %v2630 = vpack.c.b16 %v2062, %v2060
    %v2631 = vpack.c.b16 %v2063, %v2061
    %v2632 = vpack.c.b16 %v2066, %v2064
    %v2633 = vpack.c.b16 %v2067, %v2065
    %v2634 = vpack.c.b16 %v2070, %v2068
    %v2635 = vpack.c.b16 %v2071, %v2069
    %v2636 = vpack.c.b16 %v2074, %v2072
    %v2637 = vpack.c.b16 %v2075, %v2073
    %v2638 = vpack.c.b16 %v2078, %v2076
    %v2639 = vpack.c.b16 %v2079, %v2077
    %v2640 = vpack.c.b16 %v2082, %v2080
    %v2641 = vpack.c.b16 %v2083, %v2081
    %v2642 = vpack.c.b16 %v2086, %v2084
    %v2643 = vpack.c.b16 %v2087, %v2085
    %v2644 = vpack.c.b16 %v2090, %v2088
    %v2645 = vpack.c.b16 %v2091, %v2089
    %v2646 = vpack.c.b16 %v2094, %v2092
    %v2647 = vpack.c.b16 %v2095, %v2093
    %v2648 = vpack.c.b16 %v2098, %v2096
    %v2649 = vpack.c.b16 %v2099, %v2097
    %v2650 = vpack.c.b16 %v2102, %v2100
    %v2651 = vpack.c.b16 %v2103, %v2101
    %v2652 = vpack.c.b16 %v2106, %v2104
    %v2653 = vpack.c.b16 %v2107, %v2105
    %v2654 = vpack.c.b16 %v2110, %v2108
    %v2655 = vpack.c.b16 %v2111, %v2109
    %v2656 = vpack.c.b16 %v2114, %v2112
    %v2657 = vpack.c.b16 %v2115, %v2113
    %v2658 = vpack.c.b16 %v2118, %v2116
    %v2659 = vpack.c.b16 %v2119, %v2117
    %v2660 = vpack.c.b16 %v2122, %v2120
    %v2661 = vpack.c.b16 %v2123, %v2121
    %v2662 = vpack.c.b16 %v2126, %v2124
    %v2663 = vpack.c.b16 %v2127, %v2125
    %v2664 = vpack.c.b16 %v2130, %v2128
    %v2665 = vpack.c.b16 %v2131, %v2129
    %v2666 = vpack.c.b16 %v2134, %v2132
    %v2667 = vpack.c.b16 %v2135, %v2133
    %v2668 = vpack.c.b16 %v2138, %v2136
    %v2669 = vpack.c.b16 %v2139, %v2137
    %v2670 = vpack.c.b16 %v2142, %v2140
    %v2671 = vpack.c.b16 %v2143, %v2141
    %v2672 = vpack.c.b16 %v2146, %v2144
    %v2673 = vpack.c.b16 %v2147, %v2145
    %v2674 = vpack.c.b16 %v2150, %v2148
    %v2675 = vpack.c.b16 %v2151, %v2149
    %v2676 = vpack.c.b16 %v2154, %v2152
    %v2677 = vpack.c.b16 %v2155, %v2153
    %v2678 = vpack.c.b16 %v2158, %v2156
    %v2679 = vpack.c.b16 %v2159, %v2157
    %v2680 = vpack.c.b16 %v2162, %v2160
    %v2681 = vpack.c.b16 %v2163, %v2161
    %v2682 = vpack.c.b16 %v2166, %v2164
    %v2683 = vpack.c.b16 %v2167, %v2165
    %v2684 = vpack.c.b16 %v2170, %v2168
    %v2685 = vpack.c.b16 %v2171, %v2169
    %v2686 = vpack.c.b16 %v2174, %v2172
    %v2687 = vpack.c.b16 %v2175, %v2173
    %3200 = vmatpush.bf16.msra.mxu0 %v2190
    %3201 = vmatpush.bf16.msra.mxu0 %v2188
    %3202 = vmatpush.bf16.msra.mxu0 %v2186
    %3203 = vmatpush.bf16.msra.mxu0 %v2184
    %3204 = vmatpush.bf16.msra.mxu0 %v2182
    %3205 = vmatpush.bf16.msra.mxu0 %v2180
    %3206 = vmatpush.bf16.msra.mxu0 %v2178
    %3207 = vmatpush.bf16.msra.mxu0 %v2176
    %3208 = vmatmul.bf16.gmra.mxu0 %v90
    %v3209 = vpop.f32.mrf.mxu0
    %v3210 = vadd.f32 %v636, %v3209
    %v3211 = vpop.f32.mrf.mxu0
    %3212 = vdwg.mxu0
    %3213 = vmatpush.bf16.msra.mxu0 %v2206
    %3214 = vmatpush.bf16.msra.mxu0 %v2204
    %3215 = vmatpush.bf16.msra.mxu0 %v2202
    %3216 = vmatpush.bf16.msra.mxu0 %v2200
    %3217 = vmatpush.bf16.msra.mxu0 %v2198
    %3218 = vmatpush.bf16.msra.mxu0 %v2196
    %3219 = vmatpush.bf16.msra.mxu0 %v2194
    %3220 = vmatpush.bf16.msra.mxu0 %v2192
    %3221 = vmatmul.bf16.gmra.mxu0 %v91
    %v3222 = vpop.f32.mrf.mxu0
    %v3223 = vadd.f32 %v3210, %v3222
    %v3224 = vpop.f32.mrf.mxu0
    %3225 = vdwg.mxu0
    %3226 = vmatpush.bf16.msra.mxu0 %v2222
    %3227 = vmatpush.bf16.msra.mxu0 %v2220
    %3228 = vmatpush.bf16.msra.mxu0 %v2218
    %3229 = vmatpush.bf16.msra.mxu0 %v2216
    %3230 = vmatpush.bf16.msra.mxu0 %v2214
    %3231 = vmatpush.bf16.msra.mxu0 %v2212
    %3232 = vmatpush.bf16.msra.mxu0 %v2210
    %3233 = vmatpush.bf16.msra.mxu0 %v2208
    %3234 = vmatmul.bf16.gmra.mxu0 %v92
    %v3235 = vpop.f32.mrf.mxu0
    %v3236 = vadd.f32 %v3223, %v3235
    %v3237 = vpop.f32.mrf.mxu0
    %3238 = vdwg.mxu0
    %3239 = vmatpush.bf16.msra.mxu0 %v2238
    %3240 = vmatpush.bf16.msra.mxu0 %v2236
    %3241 = vmatpush.bf16.msra.mxu0 %v2234
    %3242 = vmatpush.bf16.msra.mxu0 %v2232
    %3243 = vmatpush.bf16.msra.mxu0 %v2230
    %3244 = vmatpush.bf16.msra.mxu0 %v2228
    %3245 = vmatpush.bf16.msra.mxu0 %v2226
    %3246 = vmatpush.bf16.msra.mxu0 %v2224
    %3247 = vmatmul.bf16.gmra.mxu0 %v93
    %v3248 = vpop.f32.mrf.mxu0
    %v3249 = vadd.f32 %v3236, %v3248
    %v3250 = vpop.f32.mrf.mxu0
    %3251 = vdwg.mxu0
    %3252 = vmatpush.bf16.msra.mxu0 %v2254
    %3253 = vmatpush.bf16.msra.mxu0 %v2252
    %3254 = vmatpush.bf16.msra.mxu0 %v2250
    %3255 = vmatpush.bf16.msra.mxu0 %v2248
    %3256 = vmatpush.bf16.msra.mxu0 %v2246
    %3257 = vmatpush.bf16.msra.mxu0 %v2244
    %3258 = vmatpush.bf16.msra.mxu0 %v2242
    %3259 = vmatpush.bf16.msra.mxu0 %v2240
    %3260 = vmatmul.bf16.gmra.mxu0 %v94
    %v3261 = vpop.f32.mrf.mxu0
    %v3262 = vadd.f32 %v3249, %v3261
    %v3263 = vpop.f32.mrf.mxu0
    %3264 = vdwg.mxu0
    %3265 = vmatpush.bf16.msra.mxu0 %v2270
    %3266 = vmatpush.bf16.msra.mxu0 %v2268
    %3267 = vmatpush.bf16.msra.mxu0 %v2266
    %3268 = vmatpush.bf16.msra.mxu0 %v2264
    %3269 = vmatpush.bf16.msra.mxu0 %v2262
    %3270 = vmatpush.bf16.msra.mxu0 %v2260
    %3271 = vmatpush.bf16.msra.mxu0 %v2258
    %3272 = vmatpush.bf16.msra.mxu0 %v2256
    %3273 = vmatmul.bf16.gmra.mxu0 %v95
    %v3274 = vpop.f32.mrf.mxu0
    %v3275 = vadd.f32 %v3262, %v3274
    %v3276 = vpop.f32.mrf.mxu0
    %3277 = vdwg.mxu0
    %3278 = vmatpush.bf16.msra.mxu0 %v2286
    %3279 = vmatpush.bf16.msra.mxu0 %v2284
    %3280 = vmatpush.bf16.msra.mxu0 %v2282
    %3281 = vmatpush.bf16.msra.mxu0 %v2280
    %3282 = vmatpush.bf16.msra.mxu0 %v2278
    %3283 = vmatpush.bf16.msra.mxu0 %v2276
    %3284 = vmatpush.bf16.msra.mxu0 %v2274
    %3285 = vmatpush.bf16.msra.mxu0 %v2272
    %3286 = vmatmul.bf16.gmra.mxu0 %v96
    %v3287 = vpop.f32.mrf.mxu0
    %v3288 = vadd.f32 %v3275, %v3287
    %v3289 = vpop.f32.mrf.mxu0
    %3290 = vdwg.mxu0
    %3291 = vmatpush.bf16.msra.mxu0 %v2302
    %3292 = vmatpush.bf16.msra.mxu0 %v2300
    %3293 = vmatpush.bf16.msra.mxu0 %v2298
    %3294 = vmatpush.bf16.msra.mxu0 %v2296
    %3295 = vmatpush.bf16.msra.mxu0 %v2294
    %3296 = vmatpush.bf16.msra.mxu0 %v2292
    %3297 = vmatpush.bf16.msra.mxu0 %v2290
    %3298 = vmatpush.bf16.msra.mxu0 %v2288
    %3299 = vmatmul.bf16.gmra.mxu0 %v97
    %v3300 = vpop.f32.mrf.mxu0
    %v3301 = vadd.f32 %v3288, %v3300
    %v3302 = vpop.f32.mrf.mxu0
    %3303 = vdwg.mxu0
    %3304 = vmatpush.bf16.msra.mxu0 %v2318
    %3305 = vmatpush.bf16.msra.mxu0 %v2316
    %3306 = vmatpush.bf16.msra.mxu0 %v2314
    %3307 = vmatpush.bf16.msra.mxu0 %v2312
    %3308 = vmatpush.bf16.msra.mxu0 %v2310
    %3309 = vmatpush.bf16.msra.mxu0 %v2308
    %3310 = vmatpush.bf16.msra.mxu0 %v2306
    %3311 = vmatpush.bf16.msra.mxu0 %v2304
    %3312 = vmatmul.bf16.gmra.mxu0 %v98
    %v3313 = vpop.f32.mrf.mxu0
    %v3314 = vadd.f32 %v3301, %v3313
    %v3315 = vpop.f32.mrf.mxu0
    %3316 = vdwg.mxu0
    %3317 = vmatpush.bf16.msra.mxu0 %v2334
    %3318 = vmatpush.bf16.msra.mxu0 %v2332
    %3319 = vmatpush.bf16.msra.mxu0 %v2330
    %3320 = vmatpush.bf16.msra.mxu0 %v2328
    %3321 = vmatpush.bf16.msra.mxu0 %v2326
    %3322 = vmatpush.bf16.msra.mxu0 %v2324
    %3323 = vmatpush.bf16.msra.mxu0 %v2322
    %3324 = vmatpush.bf16.msra.mxu0 %v2320
    %3325 = vmatmul.bf16.gmra.mxu0 %v99
    %v3326 = vpop.f32.mrf.mxu0
    %v3327 = vadd.f32 %v3314, %v3326
    %v3328 = vpop.f32.mrf.mxu0
    %3329 = vdwg.mxu0
    %3330 = vmatpush.bf16.msra.mxu0 %v2350
    %3331 = vmatpush.bf16.msra.mxu0 %v2348
    %3332 = vmatpush.bf16.msra.mxu0 %v2346
    %3333 = vmatpush.bf16.msra.mxu0 %v2344
    %3334 = vmatpush.bf16.msra.mxu0 %v2342
    %3335 = vmatpush.bf16.msra.mxu0 %v2340
    %3336 = vmatpush.bf16.msra.mxu0 %v2338
    %3337 = vmatpush.bf16.msra.mxu0 %v2336
    %3338 = vmatmul.bf16.gmra.mxu0 %v100
    %v3339 = vpop.f32.mrf.mxu0
    %v3340 = vadd.f32 %v3327, %v3339
    %v3341 = vpop.f32.mrf.mxu0
    %3342 = vdwg.mxu0
    %3343 = vmatpush.bf16.msra.mxu0 %v2366
    %3344 = vmatpush.bf16.msra.mxu0 %v2364
    %3345 = vmatpush.bf16.msra.mxu0 %v2362
    %3346 = vmatpush.bf16.msra.mxu0 %v2360
    %3347 = vmatpush.bf16.msra.mxu0 %v2358
    %3348 = vmatpush.bf16.msra.mxu0 %v2356
    %3349 = vmatpush.bf16.msra.mxu0 %v2354
    %3350 = vmatpush.bf16.msra.mxu0 %v2352
    %3351 = vmatmul.bf16.gmra.mxu0 %v101
    %v3352 = vpop.f32.mrf.mxu0
    %v3353 = vadd.f32 %v3340, %v3352
    %v3354 = vpop.f32.mrf.mxu0
    %3355 = vdwg.mxu0
    %3356 = vmatpush.bf16.msra.mxu0 %v2382
    %3357 = vmatpush.bf16.msra.mxu0 %v2380
    %3358 = vmatpush.bf16.msra.mxu0 %v2378
    %3359 = vmatpush.bf16.msra.mxu0 %v2376
    %3360 = vmatpush.bf16.msra.mxu0 %v2374
    %3361 = vmatpush.bf16.msra.mxu0 %v2372
    %3362 = vmatpush.bf16.msra.mxu0 %v2370
    %3363 = vmatpush.bf16.msra.mxu0 %v2368
    %3364 = vmatmul.bf16.gmra.mxu0 %v102
    %v3365 = vpop.f32.mrf.mxu0
    %v3366 = vadd.f32 %v3353, %v3365
    %v3367 = vpop.f32.mrf.mxu0
    %3368 = vdwg.mxu0
    %3369 = vmatpush.bf16.msra.mxu0 %v2398
    %3370 = vmatpush.bf16.msra.mxu0 %v2396
    %3371 = vmatpush.bf16.msra.mxu0 %v2394
    %3372 = vmatpush.bf16.msra.mxu0 %v2392
    %3373 = vmatpush.bf16.msra.mxu0 %v2390
    %3374 = vmatpush.bf16.msra.mxu0 %v2388
    %3375 = vmatpush.bf16.msra.mxu0 %v2386
    %3376 = vmatpush.bf16.msra.mxu0 %v2384
    %3377 = vmatmul.bf16.gmra.mxu0 %v103
    %v3378 = vpop.f32.mrf.mxu0
    %v3379 = vadd.f32 %v3366, %v3378
    %v3380 = vpop.f32.mrf.mxu0
    %3381 = vdwg.mxu0
    %3382 = vmatpush.bf16.msra.mxu0 %v2414
    %3383 = vmatpush.bf16.msra.mxu0 %v2412
    %3384 = vmatpush.bf16.msra.mxu0 %v2410
    %3385 = vmatpush.bf16.msra.mxu0 %v2408
    %3386 = vmatpush.bf16.msra.mxu0 %v2406
    %3387 = vmatpush.bf16.msra.mxu0 %v2404
    %3388 = vmatpush.bf16.msra.mxu0 %v2402
    %3389 = vmatpush.bf16.msra.mxu0 %v2400
    %3390 = vmatmul.bf16.gmra.mxu0 %v104
    %v3391 = vpop.f32.mrf.mxu0
    %v3392 = vadd.f32 %v3379, %v3391
    %v3393 = vpop.f32.mrf.mxu0
    %3394 = vdwg.mxu0
    %3395 = vmatpush.bf16.msra.mxu0 %v2430
    %3396 = vmatpush.bf16.msra.mxu0 %v2428
    %3397 = vmatpush.bf16.msra.mxu0 %v2426
    %3398 = vmatpush.bf16.msra.mxu0 %v2424
    %3399 = vmatpush.bf16.msra.mxu0 %v2422
    %3400 = vmatpush.bf16.msra.mxu0 %v2420
    %3401 = vmatpush.bf16.msra.mxu0 %v2418
    %3402 = vmatpush.bf16.msra.mxu0 %v2416
    %3403 = vmatmul.bf16.gmra.mxu0 %v105
    %v3404 = vpop.f32.mrf.mxu0
    %v3405 = vadd.f32 %v3392, %v3404
    %v3406 = vpop.f32.mrf.mxu0
    %3407 = vdwg.mxu0
    %3408 = vmatpush.bf16.msra.mxu0 %v2446
    %3409 = vmatpush.bf16.msra.mxu0 %v2444
    %3410 = vmatpush.bf16.msra.mxu0 %v2442
    %3411 = vmatpush.bf16.msra.mxu0 %v2440
    %3412 = vmatpush.bf16.msra.mxu0 %v2438
    %3413 = vmatpush.bf16.msra.mxu0 %v2436
    %3414 = vmatpush.bf16.msra.mxu0 %v2434
    %3415 = vmatpush.bf16.msra.mxu0 %v2432
    %3416 = vmatmul.bf16.gmra.mxu0 %v106
    %v3417 = vpop.f32.mrf.mxu0
    %v3418 = vadd.f32 %v3405, %v3417
    %v3419 = vpop.f32.mrf.mxu0
    %3420 = vdwg.mxu0
    %3421 = vmatpush.bf16.msra.mxu0 %v2462
    %3422 = vmatpush.bf16.msra.mxu0 %v2460
    %3423 = vmatpush.bf16.msra.mxu0 %v2458
    %3424 = vmatpush.bf16.msra.mxu0 %v2456
    %3425 = vmatpush.bf16.msra.mxu0 %v2454
    %3426 = vmatpush.bf16.msra.mxu0 %v2452
    %3427 = vmatpush.bf16.msra.mxu0 %v2450
    %3428 = vmatpush.bf16.msra.mxu0 %v2448
    %3429 = vmatmul.bf16.gmra.mxu0 %v107
    %v3430 = vpop.f32.mrf.mxu0
    %v3431 = vadd.f32 %v3418, %v3430
    %v3432 = vpop.f32.mrf.mxu0
    %3433 = vdwg.mxu0
    %3434 = vmatpush.bf16.msra.mxu0 %v2478
    %3435 = vmatpush.bf16.msra.mxu0 %v2476
    %3436 = vmatpush.bf16.msra.mxu0 %v2474
    %3437 = vmatpush.bf16.msra.mxu0 %v2472
    %3438 = vmatpush.bf16.msra.mxu0 %v2470
    %3439 = vmatpush.bf16.msra.mxu0 %v2468
    %3440 = vmatpush.bf16.msra.mxu0 %v2466
    %3441 = vmatpush.bf16.msra.mxu0 %v2464
    %3442 = vmatmul.bf16.gmra.mxu0 %v108
    %v3443 = vpop.f32.mrf.mxu0
    %v3444 = vadd.f32 %v3431, %v3443
    %v3445 = vpop.f32.mrf.mxu0
    %3446 = vdwg.mxu0
    %3447 = vmatpush.bf16.msra.mxu0 %v2494
    %3448 = vmatpush.bf16.msra.mxu0 %v2492
    %3449 = vmatpush.bf16.msra.mxu0 %v2490
    %3450 = vmatpush.bf16.msra.mxu0 %v2488
    %3451 = vmatpush.bf16.msra.mxu0 %v2486
    %3452 = vmatpush.bf16.msra.mxu0 %v2484
    %3453 = vmatpush.bf16.msra.mxu0 %v2482
    %3454 = vmatpush.bf16.msra.mxu0 %v2480
    %3455 = vmatmul.bf16.gmra.mxu0 %v109
    %v3456 = vpop.f32.mrf.mxu0
    %v3457 = vadd.f32 %v3444, %v3456
    %v3458 = vpop.f32.mrf.mxu0
    %3459 = vdwg.mxu0
    %3460 = vmatpush.bf16.msra.mxu0 %v2510
    %3461 = vmatpush.bf16.msra.mxu0 %v2508
    %3462 = vmatpush.bf16.msra.mxu0 %v2506
    %3463 = vmatpush.bf16.msra.mxu0 %v2504
    %3464 = vmatpush.bf16.msra.mxu0 %v2502
    %3465 = vmatpush.bf16.msra.mxu0 %v2500
    %3466 = vmatpush.bf16.msra.mxu0 %v2498
    %3467 = vmatpush.bf16.msra.mxu0 %v2496
    %3468 = vmatmul.bf16.gmra.mxu0 %v110
    %v3469 = vpop.f32.mrf.mxu0
    %v3470 = vadd.f32 %v3457, %v3469
    %v3471 = vpop.f32.mrf.mxu0
    %3472 = vdwg.mxu0
    %3473 = vmatpush.bf16.msra.mxu0 %v2526
    %3474 = vmatpush.bf16.msra.mxu0 %v2524
    %3475 = vmatpush.bf16.msra.mxu0 %v2522
    %3476 = vmatpush.bf16.msra.mxu0 %v2520
    %3477 = vmatpush.bf16.msra.mxu0 %v2518
    %3478 = vmatpush.bf16.msra.mxu0 %v2516
    %3479 = vmatpush.bf16.msra.mxu0 %v2514
    %3480 = vmatpush.bf16.msra.mxu0 %v2512
    %3481 = vmatmul.bf16.gmra.mxu0 %v111
    %v3482 = vpop.f32.mrf.mxu0
    %v3483 = vadd.f32 %v3470, %v3482
    %v3484 = vpop.f32.mrf.mxu0
    %3485 = vdwg.mxu0
    %3486 = vmatpush.bf16.msra.mxu0 %v2542
    %3487 = vmatpush.bf16.msra.mxu0 %v2540
    %3488 = vmatpush.bf16.msra.mxu0 %v2538
    %3489 = vmatpush.bf16.msra.mxu0 %v2536
    %3490 = vmatpush.bf16.msra.mxu0 %v2534
    %3491 = vmatpush.bf16.msra.mxu0 %v2532
    %3492 = vmatpush.bf16.msra.mxu0 %v2530
    %3493 = vmatpush.bf16.msra.mxu0 %v2528
    %3494 = vmatmul.bf16.gmra.mxu0 %v112
    %v3495 = vpop.f32.mrf.mxu0
    %v3496 = vadd.f32 %v3483, %v3495
    %v3497 = vpop.f32.mrf.mxu0
    %3498 = vdwg.mxu0
    %3499 = vmatpush.bf16.msra.mxu0 %v2558
    %3500 = vmatpush.bf16.msra.mxu0 %v2556
    %3501 = vmatpush.bf16.msra.mxu0 %v2554
    %3502 = vmatpush.bf16.msra.mxu0 %v2552
    %3503 = vmatpush.bf16.msra.mxu0 %v2550
    %3504 = vmatpush.bf16.msra.mxu0 %v2548
    %3505 = vmatpush.bf16.msra.mxu0 %v2546
    %3506 = vmatpush.bf16.msra.mxu0 %v2544
    %3507 = vmatmul.bf16.gmra.mxu0 %v113
    %v3508 = vpop.f32.mrf.mxu0
    %v3509 = vadd.f32 %v3496, %v3508
    %v3510 = vpop.f32.mrf.mxu0
    %3511 = vdwg.mxu0
    %3512 = vmatpush.bf16.msra.mxu0 %v2574
    %3513 = vmatpush.bf16.msra.mxu0 %v2572
    %3514 = vmatpush.bf16.msra.mxu0 %v2570
    %3515 = vmatpush.bf16.msra.mxu0 %v2568
    %3516 = vmatpush.bf16.msra.mxu0 %v2566
    %3517 = vmatpush.bf16.msra.mxu0 %v2564
    %3518 = vmatpush.bf16.msra.mxu0 %v2562
    %3519 = vmatpush.bf16.msra.mxu0 %v2560
    %3520 = vmatmul.bf16.gmra.mxu0 %v114
    %v3521 = vpop.f32.mrf.mxu0
    %v3522 = vadd.f32 %v3509, %v3521
    %v3523 = vpop.f32.mrf.mxu0
    %3524 = vdwg.mxu0
    %3525 = vmatpush.bf16.msra.mxu0 %v2590
    %3526 = vmatpush.bf16.msra.mxu0 %v2588
    %3527 = vmatpush.bf16.msra.mxu0 %v2586
    %3528 = vmatpush.bf16.msra.mxu0 %v2584
    %3529 = vmatpush.bf16.msra.mxu0 %v2582
    %3530 = vmatpush.bf16.msra.mxu0 %v2580
    %3531 = vmatpush.bf16.msra.mxu0 %v2578
    %3532 = vmatpush.bf16.msra.mxu0 %v2576
    %3533 = vmatmul.bf16.gmra.mxu0 %v115
    %v3534 = vpop.f32.mrf.mxu0
    %v3535 = vadd.f32 %v3522, %v3534
    %v3536 = vpop.f32.mrf.mxu0
    %3537 = vdwg.mxu0
    %3538 = vmatpush.bf16.msra.mxu0 %v2606
    %3539 = vmatpush.bf16.msra.mxu0 %v2604
    %3540 = vmatpush.bf16.msra.mxu0 %v2602
    %3541 = vmatpush.bf16.msra.mxu0 %v2600
    %3542 = vmatpush.bf16.msra.mxu0 %v2598
    %3543 = vmatpush.bf16.msra.mxu0 %v2596
    %3544 = vmatpush.bf16.msra.mxu0 %v2594
    %3545 = vmatpush.bf16.msra.mxu0 %v2592
    %3546 = vmatmul.bf16.gmra.mxu0 %v116
    %v3547 = vpop.f32.mrf.mxu0
    %v3548 = vadd.f32 %v3535, %v3547
    %v3549 = vpop.f32.mrf.mxu0
    %3550 = vdwg.mxu0
    %3551 = vmatpush.bf16.msra.mxu0 %v2622
    %3552 = vmatpush.bf16.msra.mxu0 %v2620
    %3553 = vmatpush.bf16.msra.mxu0 %v2618
    %3554 = vmatpush.bf16.msra.mxu0 %v2616
    %3555 = vmatpush.bf16.msra.mxu0 %v2614
    %3556 = vmatpush.bf16.msra.mxu0 %v2612
    %3557 = vmatpush.bf16.msra.mxu0 %v2610
    %3558 = vmatpush.bf16.msra.mxu0 %v2608
    %3559 = vmatmul.bf16.gmra.mxu0 %v117
    %v3560 = vpop.f32.mrf.mxu0
    %v3561 = vadd.f32 %v3548, %v3560
    %v3562 = vpop.f32.mrf.mxu0
    %3563 = vdwg.mxu0
    %3564 = vmatpush.bf16.msra.mxu0 %v2638
    %3565 = vmatpush.bf16.msra.mxu0 %v2636
    %3566 = vmatpush.bf16.msra.mxu0 %v2634
    %3567 = vmatpush.bf16.msra.mxu0 %v2632
    %3568 = vmatpush.bf16.msra.mxu0 %v2630
    %3569 = vmatpush.bf16.msra.mxu0 %v2628
    %3570 = vmatpush.bf16.msra.mxu0 %v2626
    %3571 = vmatpush.bf16.msra.mxu0 %v2624
    %3572 = vmatmul.bf16.gmra.mxu0 %v118
    %v3573 = vpop.f32.mrf.mxu0
    %v3574 = vadd.f32 %v3561, %v3573
    %v3575 = vpop.f32.mrf.mxu0
    %3576 = vdwg.mxu0
    %3577 = vmatpush.bf16.msra.mxu0 %v2654
    %3578 = vmatpush.bf16.msra.mxu0 %v2652
    %3579 = vmatpush.bf16.msra.mxu0 %v2650
    %3580 = vmatpush.bf16.msra.mxu0 %v2648
    %3581 = vmatpush.bf16.msra.mxu0 %v2646
    %3582 = vmatpush.bf16.msra.mxu0 %v2644
    %3583 = vmatpush.bf16.msra.mxu0 %v2642
    %3584 = vmatpush.bf16.msra.mxu0 %v2640
    %3585 = vmatmul.bf16.gmra.mxu0 %v119
    %v3586 = vpop.f32.mrf.mxu0
    %v3587 = vadd.f32 %v3574, %v3586
    %v3588 = vpop.f32.mrf.mxu0
    %3589 = vdwg.mxu0
    %3590 = vmatpush.bf16.msra.mxu0 %v2670
    %3591 = vmatpush.bf16.msra.mxu0 %v2668
    %3592 = vmatpush.bf16.msra.mxu0 %v2666
    %3593 = vmatpush.bf16.msra.mxu0 %v2664
    %3594 = vmatpush.bf16.msra.mxu0 %v2662
    %3595 = vmatpush.bf16.msra.mxu0 %v2660
    %3596 = vmatpush.bf16.msra.mxu0 %v2658
    %3597 = vmatpush.bf16.msra.mxu0 %v2656
    %3598 = vmatmul.bf16.gmra.mxu0 %v120
    %v3599 = vpop.f32.mrf.mxu0
    %v3600 = vadd.f32 %v3587, %v3599
    %v3601 = vpop.f32.mrf.mxu0
    %3602 = vdwg.mxu0
    %3603 = vmatpush.bf16.msra.mxu0 %v2686
    %3604 = vmatpush.bf16.msra.mxu0 %v2684
    %3605 = vmatpush.bf16.msra.mxu0 %v2682
    %3606 = vmatpush.bf16.msra.mxu0 %v2680
    %3607 = vmatpush.bf16.msra.mxu0 %v2678
    %3608 = vmatpush.bf16.msra.mxu0 %v2676
    %3609 = vmatpush.bf16.msra.mxu0 %v2674
    %3610 = vmatpush.bf16.msra.mxu0 %v2672
    %3611 = vmatmul.bf16.gmra.mxu0 %v121
    %v3612 = vpop.f32.mrf.mxu0
    %v3613 = vadd.f32 %v3600, %v3612
    %v3614 = vpop.f32.mrf.mxu0
    %3615 = vdwg.mxu0
    %3616 = vmatpush.bf16.msra.mxu0 %v2191
    %3617 = vmatpush.bf16.msra.mxu0 %v2189
    %3618 = vmatpush.bf16.msra.mxu0 %v2187
    %3619 = vmatpush.bf16.msra.mxu0 %v2185
    %3620 = vmatpush.bf16.msra.mxu0 %v2183
    %3621 = vmatpush.bf16.msra.mxu0 %v2181
    %3622 = vmatpush.bf16.msra.mxu0 %v2179
    %3623 = vmatpush.bf16.msra.mxu0 %v2177
    %3624 = vmatmul.bf16.gmra.mxu0 %v90
    %v3625 = vpop.f32.mrf.mxu0
    %v3626 = vadd.f32 %v637, %v3625
    %v3627 = vpop.f32.mrf.mxu0
    %3628 = vdwg.mxu0
    %3629 = vmatpush.bf16.msra.mxu0 %v2207
    %3630 = vmatpush.bf16.msra.mxu0 %v2205
    %3631 = vmatpush.bf16.msra.mxu0 %v2203
    %3632 = vmatpush.bf16.msra.mxu0 %v2201
    %3633 = vmatpush.bf16.msra.mxu0 %v2199
    %3634 = vmatpush.bf16.msra.mxu0 %v2197
    %3635 = vmatpush.bf16.msra.mxu0 %v2195
    %3636 = vmatpush.bf16.msra.mxu0 %v2193
    %3637 = vmatmul.bf16.gmra.mxu0 %v91
    %v3638 = vpop.f32.mrf.mxu0
    %v3639 = vadd.f32 %v3626, %v3638
    %v3640 = vpop.f32.mrf.mxu0
    %3641 = vdwg.mxu0
    %3642 = vmatpush.bf16.msra.mxu0 %v2223
    %3643 = vmatpush.bf16.msra.mxu0 %v2221
    %3644 = vmatpush.bf16.msra.mxu0 %v2219
    %3645 = vmatpush.bf16.msra.mxu0 %v2217
    %3646 = vmatpush.bf16.msra.mxu0 %v2215
    %3647 = vmatpush.bf16.msra.mxu0 %v2213
    %3648 = vmatpush.bf16.msra.mxu0 %v2211
    %3649 = vmatpush.bf16.msra.mxu0 %v2209
    %3650 = vmatmul.bf16.gmra.mxu0 %v92
    %v3651 = vpop.f32.mrf.mxu0
    %v3652 = vadd.f32 %v3639, %v3651
    %v3653 = vpop.f32.mrf.mxu0
    %3654 = vdwg.mxu0
    %3655 = vmatpush.bf16.msra.mxu0 %v2239
    %3656 = vmatpush.bf16.msra.mxu0 %v2237
    %3657 = vmatpush.bf16.msra.mxu0 %v2235
    %3658 = vmatpush.bf16.msra.mxu0 %v2233
    %3659 = vmatpush.bf16.msra.mxu0 %v2231
    %3660 = vmatpush.bf16.msra.mxu0 %v2229
    %3661 = vmatpush.bf16.msra.mxu0 %v2227
    %3662 = vmatpush.bf16.msra.mxu0 %v2225
    %3663 = vmatmul.bf16.gmra.mxu0 %v93
    %v3664 = vpop.f32.mrf.mxu0
    %v3665 = vadd.f32 %v3652, %v3664
    %v3666 = vpop.f32.mrf.mxu0
    %3667 = vdwg.mxu0
    %3668 = vmatpush.bf16.msra.mxu0 %v2255
    %3669 = vmatpush.bf16.msra.mxu0 %v2253
    %3670 = vmatpush.bf16.msra.mxu0 %v2251
    %3671 = vmatpush.bf16.msra.mxu0 %v2249
    %3672 = vmatpush.bf16.msra.mxu0 %v2247
    %3673 = vmatpush.bf16.msra.mxu0 %v2245
    %3674 = vmatpush.bf16.msra.mxu0 %v2243
    %3675 = vmatpush.bf16.msra.mxu0 %v2241
    %3676 = vmatmul.bf16.gmra.mxu0 %v94
    %v3677 = vpop.f32.mrf.mxu0
    %v3678 = vadd.f32 %v3665, %v3677
    %v3679 = vpop.f32.mrf.mxu0
    %3680 = vdwg.mxu0
    %3681 = vmatpush.bf16.msra.mxu0 %v2271
    %3682 = vmatpush.bf16.msra.mxu0 %v2269
    %3683 = vmatpush.bf16.msra.mxu0 %v2267
    %3684 = vmatpush.bf16.msra.mxu0 %v2265
    %3685 = vmatpush.bf16.msra.mxu0 %v2263
    %3686 = vmatpush.bf16.msra.mxu0 %v2261
    %3687 = vmatpush.bf16.msra.mxu0 %v2259
    %3688 = vmatpush.bf16.msra.mxu0 %v2257
    %3689 = vmatmul.bf16.gmra.mxu0 %v95
    %v3690 = vpop.f32.mrf.mxu0
    %v3691 = vadd.f32 %v3678, %v3690
    %v3692 = vpop.f32.mrf.mxu0
    %3693 = vdwg.mxu0
    %3694 = vmatpush.bf16.msra.mxu0 %v2287
    %3695 = vmatpush.bf16.msra.mxu0 %v2285
    %3696 = vmatpush.bf16.msra.mxu0 %v2283
    %3697 = vmatpush.bf16.msra.mxu0 %v2281
    %3698 = vmatpush.bf16.msra.mxu0 %v2279
    %3699 = vmatpush.bf16.msra.mxu0 %v2277
    %3700 = vmatpush.bf16.msra.mxu0 %v2275
    %3701 = vmatpush.bf16.msra.mxu0 %v2273
    %3702 = vmatmul.bf16.gmra.mxu0 %v96
    %v3703 = vpop.f32.mrf.mxu0
    %v3704 = vadd.f32 %v3691, %v3703
    %v3705 = vpop.f32.mrf.mxu0
    %3706 = vdwg.mxu0
    %3707 = vmatpush.bf16.msra.mxu0 %v2303
    %3708 = vmatpush.bf16.msra.mxu0 %v2301
    %3709 = vmatpush.bf16.msra.mxu0 %v2299
    %3710 = vmatpush.bf16.msra.mxu0 %v2297
    %3711 = vmatpush.bf16.msra.mxu0 %v2295
    %3712 = vmatpush.bf16.msra.mxu0 %v2293
    %3713 = vmatpush.bf16.msra.mxu0 %v2291
    %3714 = vmatpush.bf16.msra.mxu0 %v2289
    %3715 = vmatmul.bf16.gmra.mxu0 %v97
    %v3716 = vpop.f32.mrf.mxu0
    %v3717 = vadd.f32 %v3704, %v3716
    %v3718 = vpop.f32.mrf.mxu0
    %3719 = vdwg.mxu0
    %3720 = vmatpush.bf16.msra.mxu0 %v2319
    %3721 = vmatpush.bf16.msra.mxu0 %v2317
    %3722 = vmatpush.bf16.msra.mxu0 %v2315
    %3723 = vmatpush.bf16.msra.mxu0 %v2313
    %3724 = vmatpush.bf16.msra.mxu0 %v2311
    %3725 = vmatpush.bf16.msra.mxu0 %v2309
    %3726 = vmatpush.bf16.msra.mxu0 %v2307
    %3727 = vmatpush.bf16.msra.mxu0 %v2305
    %3728 = vmatmul.bf16.gmra.mxu0 %v98
    %v3729 = vpop.f32.mrf.mxu0
    %v3730 = vadd.f32 %v3717, %v3729
    %v3731 = vpop.f32.mrf.mxu0
    %3732 = vdwg.mxu0
    %3733 = vmatpush.bf16.msra.mxu0 %v2335
    %3734 = vmatpush.bf16.msra.mxu0 %v2333
    %3735 = vmatpush.bf16.msra.mxu0 %v2331
    %3736 = vmatpush.bf16.msra.mxu0 %v2329
    %3737 = vmatpush.bf16.msra.mxu0 %v2327
    %3738 = vmatpush.bf16.msra.mxu0 %v2325
    %3739 = vmatpush.bf16.msra.mxu0 %v2323
    %3740 = vmatpush.bf16.msra.mxu0 %v2321
    %3741 = vmatmul.bf16.gmra.mxu0 %v99
    %v3742 = vpop.f32.mrf.mxu0
    %v3743 = vadd.f32 %v3730, %v3742
    %v3744 = vpop.f32.mrf.mxu0
    %3745 = vdwg.mxu0
    %3746 = vmatpush.bf16.msra.mxu0 %v2351
    %3747 = vmatpush.bf16.msra.mxu0 %v2349
    %3748 = vmatpush.bf16.msra.mxu0 %v2347
    %3749 = vmatpush.bf16.msra.mxu0 %v2345
    %3750 = vmatpush.bf16.msra.mxu0 %v2343
    %3751 = vmatpush.bf16.msra.mxu0 %v2341
    %3752 = vmatpush.bf16.msra.mxu0 %v2339
    %3753 = vmatpush.bf16.msra.mxu0 %v2337
    %3754 = vmatmul.bf16.gmra.mxu0 %v100
    %v3755 = vpop.f32.mrf.mxu0
    %v3756 = vadd.f32 %v3743, %v3755
    %v3757 = vpop.f32.mrf.mxu0
    %3758 = vdwg.mxu0
    %3759 = vmatpush.bf16.msra.mxu0 %v2367
    %3760 = vmatpush.bf16.msra.mxu0 %v2365
    %3761 = vmatpush.bf16.msra.mxu0 %v2363
    %3762 = vmatpush.bf16.msra.mxu0 %v2361
    %3763 = vmatpush.bf16.msra.mxu0 %v2359
    %3764 = vmatpush.bf16.msra.mxu0 %v2357
    %3765 = vmatpush.bf16.msra.mxu0 %v2355
    %3766 = vmatpush.bf16.msra.mxu0 %v2353
    %3767 = vmatmul.bf16.gmra.mxu0 %v101
    %v3768 = vpop.f32.mrf.mxu0
    %v3769 = vadd.f32 %v3756, %v3768
    %v3770 = vpop.f32.mrf.mxu0
    %3771 = vdwg.mxu0
    %3772 = vmatpush.bf16.msra.mxu0 %v2383
    %3773 = vmatpush.bf16.msra.mxu0 %v2381
    %3774 = vmatpush.bf16.msra.mxu0 %v2379
    %3775 = vmatpush.bf16.msra.mxu0 %v2377
    %3776 = vmatpush.bf16.msra.mxu0 %v2375
    %3777 = vmatpush.bf16.msra.mxu0 %v2373
    %3778 = vmatpush.bf16.msra.mxu0 %v2371
    %3779 = vmatpush.bf16.msra.mxu0 %v2369
    %3780 = vmatmul.bf16.gmra.mxu0 %v102
    %v3781 = vpop.f32.mrf.mxu0
    %v3782 = vadd.f32 %v3769, %v3781
    %v3783 = vpop.f32.mrf.mxu0
    %3784 = vdwg.mxu0
    %3785 = vmatpush.bf16.msra.mxu0 %v2399
    %3786 = vmatpush.bf16.msra.mxu0 %v2397
    %3787 = vmatpush.bf16.msra.mxu0 %v2395
    %3788 = vmatpush.bf16.msra.mxu0 %v2393
    %3789 = vmatpush.bf16.msra.mxu0 %v2391
    %3790 = vmatpush.bf16.msra.mxu0 %v2389
    %3791 = vmatpush.bf16.msra.mxu0 %v2387
    %3792 = vmatpush.bf16.msra.mxu0 %v2385
    %3793 = vmatmul.bf16.gmra.mxu0 %v103
    %v3794 = vpop.f32.mrf.mxu0
    %v3795 = vadd.f32 %v3782, %v3794
    %v3796 = vpop.f32.mrf.mxu0
    %3797 = vdwg.mxu0
    %3798 = vmatpush.bf16.msra.mxu0 %v2415
    %3799 = vmatpush.bf16.msra.mxu0 %v2413
    %3800 = vmatpush.bf16.msra.mxu0 %v2411
    %3801 = vmatpush.bf16.msra.mxu0 %v2409
    %3802 = vmatpush.bf16.msra.mxu0 %v2407
    %3803 = vmatpush.bf16.msra.mxu0 %v2405
    %3804 = vmatpush.bf16.msra.mxu0 %v2403
    %3805 = vmatpush.bf16.msra.mxu0 %v2401
    %3806 = vmatmul.bf16.gmra.mxu0 %v104
    %v3807 = vpop.f32.mrf.mxu0
    %v3808 = vadd.f32 %v3795, %v3807
    %v3809 = vpop.f32.mrf.mxu0
    %3810 = vdwg.mxu0
    %3811 = vmatpush.bf16.msra.mxu0 %v2431
    %3812 = vmatpush.bf16.msra.mxu0 %v2429
    %3813 = vmatpush.bf16.msra.mxu0 %v2427
    %3814 = vmatpush.bf16.msra.mxu0 %v2425
    %3815 = vmatpush.bf16.msra.mxu0 %v2423
    %3816 = vmatpush.bf16.msra.mxu0 %v2421
    %3817 = vmatpush.bf16.msra.mxu0 %v2419
    %3818 = vmatpush.bf16.msra.mxu0 %v2417
    %3819 = vmatmul.bf16.gmra.mxu0 %v105
    %v3820 = vpop.f32.mrf.mxu0
    %v3821 = vadd.f32 %v3808, %v3820
    %v3822 = vpop.f32.mrf.mxu0
    %3823 = vdwg.mxu0
    %3824 = vmatpush.bf16.msra.mxu0 %v2447
    %3825 = vmatpush.bf16.msra.mxu0 %v2445
    %3826 = vmatpush.bf16.msra.mxu0 %v2443
    %3827 = vmatpush.bf16.msra.mxu0 %v2441
    %3828 = vmatpush.bf16.msra.mxu0 %v2439
    %3829 = vmatpush.bf16.msra.mxu0 %v2437
    %3830 = vmatpush.bf16.msra.mxu0 %v2435
    %3831 = vmatpush.bf16.msra.mxu0 %v2433
    %3832 = vmatmul.bf16.gmra.mxu0 %v106
    %v3833 = vpop.f32.mrf.mxu0
    %v3834 = vadd.f32 %v3821, %v3833
    %v3835 = vpop.f32.mrf.mxu0
    %3836 = vdwg.mxu0
    %3837 = vmatpush.bf16.msra.mxu0 %v2463
    %3838 = vmatpush.bf16.msra.mxu0 %v2461
    %3839 = vmatpush.bf16.msra.mxu0 %v2459
    %3840 = vmatpush.bf16.msra.mxu0 %v2457
    %3841 = vmatpush.bf16.msra.mxu0 %v2455
    %3842 = vmatpush.bf16.msra.mxu0 %v2453
    %3843 = vmatpush.bf16.msra.mxu0 %v2451
    %3844 = vmatpush.bf16.msra.mxu0 %v2449
    %3845 = vmatmul.bf16.gmra.mxu0 %v107
    %v3846 = vpop.f32.mrf.mxu0
    %v3847 = vadd.f32 %v3834, %v3846
    %v3848 = vpop.f32.mrf.mxu0
    %3849 = vdwg.mxu0
    %3850 = vmatpush.bf16.msra.mxu0 %v2479
    %3851 = vmatpush.bf16.msra.mxu0 %v2477
    %3852 = vmatpush.bf16.msra.mxu0 %v2475
    %3853 = vmatpush.bf16.msra.mxu0 %v2473
    %3854 = vmatpush.bf16.msra.mxu0 %v2471
    %3855 = vmatpush.bf16.msra.mxu0 %v2469
    %3856 = vmatpush.bf16.msra.mxu0 %v2467
    %3857 = vmatpush.bf16.msra.mxu0 %v2465
    %3858 = vmatmul.bf16.gmra.mxu0 %v108
    %v3859 = vpop.f32.mrf.mxu0
    %v3860 = vadd.f32 %v3847, %v3859
    %v3861 = vpop.f32.mrf.mxu0
    %3862 = vdwg.mxu0
    %3863 = vmatpush.bf16.msra.mxu0 %v2495
    %3864 = vmatpush.bf16.msra.mxu0 %v2493
    %3865 = vmatpush.bf16.msra.mxu0 %v2491
    %3866 = vmatpush.bf16.msra.mxu0 %v2489
    %3867 = vmatpush.bf16.msra.mxu0 %v2487
    %3868 = vmatpush.bf16.msra.mxu0 %v2485
    %3869 = vmatpush.bf16.msra.mxu0 %v2483
    %3870 = vmatpush.bf16.msra.mxu0 %v2481
    %3871 = vmatmul.bf16.gmra.mxu0 %v109
    %v3872 = vpop.f32.mrf.mxu0
    %v3873 = vadd.f32 %v3860, %v3872
    %v3874 = vpop.f32.mrf.mxu0
    %3875 = vdwg.mxu0
    %3876 = vmatpush.bf16.msra.mxu0 %v2511
    %3877 = vmatpush.bf16.msra.mxu0 %v2509
    %3878 = vmatpush.bf16.msra.mxu0 %v2507
    %3879 = vmatpush.bf16.msra.mxu0 %v2505
    %3880 = vmatpush.bf16.msra.mxu0 %v2503
    %3881 = vmatpush.bf16.msra.mxu0 %v2501
    %3882 = vmatpush.bf16.msra.mxu0 %v2499
    %3883 = vmatpush.bf16.msra.mxu0 %v2497
    %3884 = vmatmul.bf16.gmra.mxu0 %v110
    %v3885 = vpop.f32.mrf.mxu0
    %v3886 = vadd.f32 %v3873, %v3885
    %v3887 = vpop.f32.mrf.mxu0
    %3888 = vdwg.mxu0
    %3889 = vmatpush.bf16.msra.mxu0 %v2527
    %3890 = vmatpush.bf16.msra.mxu0 %v2525
    %3891 = vmatpush.bf16.msra.mxu0 %v2523
    %3892 = vmatpush.bf16.msra.mxu0 %v2521
    %3893 = vmatpush.bf16.msra.mxu0 %v2519
    %3894 = vmatpush.bf16.msra.mxu0 %v2517
    %3895 = vmatpush.bf16.msra.mxu0 %v2515
    %3896 = vmatpush.bf16.msra.mxu0 %v2513
    %3897 = vmatmul.bf16.gmra.mxu0 %v111
    %v3898 = vpop.f32.mrf.mxu0
    %v3899 = vadd.f32 %v3886, %v3898
    %v3900 = vpop.f32.mrf.mxu0
    %3901 = vdwg.mxu0
    %3902 = vmatpush.bf16.msra.mxu0 %v2543
    %3903 = vmatpush.bf16.msra.mxu0 %v2541
    %3904 = vmatpush.bf16.msra.mxu0 %v2539
    %3905 = vmatpush.bf16.msra.mxu0 %v2537
    %3906 = vmatpush.bf16.msra.mxu0 %v2535
    %3907 = vmatpush.bf16.msra.mxu0 %v2533
    %3908 = vmatpush.bf16.msra.mxu0 %v2531
    %3909 = vmatpush.bf16.msra.mxu0 %v2529
    %3910 = vmatmul.bf16.gmra.mxu0 %v112
    %v3911 = vpop.f32.mrf.mxu0
    %v3912 = vadd.f32 %v3899, %v3911
    %v3913 = vpop.f32.mrf.mxu0
    %3914 = vdwg.mxu0
    %3915 = vmatpush.bf16.msra.mxu0 %v2559
    %3916 = vmatpush.bf16.msra.mxu0 %v2557
    %3917 = vmatpush.bf16.msra.mxu0 %v2555
    %3918 = vmatpush.bf16.msra.mxu0 %v2553
    %3919 = vmatpush.bf16.msra.mxu0 %v2551
    %3920 = vmatpush.bf16.msra.mxu0 %v2549
    %3921 = vmatpush.bf16.msra.mxu0 %v2547
    %3922 = vmatpush.bf16.msra.mxu0 %v2545
    %3923 = vmatmul.bf16.gmra.mxu0 %v113
    %v3924 = vpop.f32.mrf.mxu0
    %v3925 = vadd.f32 %v3912, %v3924
    %v3926 = vpop.f32.mrf.mxu0
    %3927 = vdwg.mxu0
    %3928 = vmatpush.bf16.msra.mxu0 %v2575
    %3929 = vmatpush.bf16.msra.mxu0 %v2573
    %3930 = vmatpush.bf16.msra.mxu0 %v2571
    %3931 = vmatpush.bf16.msra.mxu0 %v2569
    %3932 = vmatpush.bf16.msra.mxu0 %v2567
    %3933 = vmatpush.bf16.msra.mxu0 %v2565
    %3934 = vmatpush.bf16.msra.mxu0 %v2563
    %3935 = vmatpush.bf16.msra.mxu0 %v2561
    %3936 = vmatmul.bf16.gmra.mxu0 %v114
    %v3937 = vpop.f32.mrf.mxu0
    %v3938 = vadd.f32 %v3925, %v3937
    %v3939 = vpop.f32.mrf.mxu0
    %3940 = vdwg.mxu0
    %3941 = vmatpush.bf16.msra.mxu0 %v2591
    %3942 = vmatpush.bf16.msra.mxu0 %v2589
    %3943 = vmatpush.bf16.msra.mxu0 %v2587
    %3944 = vmatpush.bf16.msra.mxu0 %v2585
    %3945 = vmatpush.bf16.msra.mxu0 %v2583
    %3946 = vmatpush.bf16.msra.mxu0 %v2581
    %3947 = vmatpush.bf16.msra.mxu0 %v2579
    %3948 = vmatpush.bf16.msra.mxu0 %v2577
    %3949 = vmatmul.bf16.gmra.mxu0 %v115
    %v3950 = vpop.f32.mrf.mxu0
    %v3951 = vadd.f32 %v3938, %v3950
    %v3952 = vpop.f32.mrf.mxu0
    %3953 = vdwg.mxu0
    %3954 = vmatpush.bf16.msra.mxu0 %v2607
    %3955 = vmatpush.bf16.msra.mxu0 %v2605
    %3956 = vmatpush.bf16.msra.mxu0 %v2603
    %3957 = vmatpush.bf16.msra.mxu0 %v2601
    %3958 = vmatpush.bf16.msra.mxu0 %v2599
    %3959 = vmatpush.bf16.msra.mxu0 %v2597
    %3960 = vmatpush.bf16.msra.mxu0 %v2595
    %3961 = vmatpush.bf16.msra.mxu0 %v2593
    %3962 = vmatmul.bf16.gmra.mxu0 %v116
    %v3963 = vpop.f32.mrf.mxu0
    %v3964 = vadd.f32 %v3951, %v3963
    %v3965 = vpop.f32.mrf.mxu0
    %3966 = vdwg.mxu0
    %3967 = vmatpush.bf16.msra.mxu0 %v2623
    %3968 = vmatpush.bf16.msra.mxu0 %v2621
    %3969 = vmatpush.bf16.msra.mxu0 %v2619
    %3970 = vmatpush.bf16.msra.mxu0 %v2617
    %3971 = vmatpush.bf16.msra.mxu0 %v2615
    %3972 = vmatpush.bf16.msra.mxu0 %v2613
    %3973 = vmatpush.bf16.msra.mxu0 %v2611
    %3974 = vmatpush.bf16.msra.mxu0 %v2609
    %3975 = vmatmul.bf16.gmra.mxu0 %v117
    %v3976 = vpop.f32.mrf.mxu0
    %v3977 = vadd.f32 %v3964, %v3976
    %v3978 = vpop.f32.mrf.mxu0
    %3979 = vdwg.mxu0
    %3980 = vmatpush.bf16.msra.mxu0 %v2639
    %3981 = vmatpush.bf16.msra.mxu0 %v2637
    %3982 = vmatpush.bf16.msra.mxu0 %v2635
    %3983 = vmatpush.bf16.msra.mxu0 %v2633
    %3984 = vmatpush.bf16.msra.mxu0 %v2631
    %3985 = vmatpush.bf16.msra.mxu0 %v2629
    %3986 = vmatpush.bf16.msra.mxu0 %v2627
    %3987 = vmatpush.bf16.msra.mxu0 %v2625
    %3988 = vmatmul.bf16.gmra.mxu0 %v118
    %v3989 = vpop.f32.mrf.mxu0
    %v3990 = vadd.f32 %v3977, %v3989
    %v3991 = vpop.f32.mrf.mxu0
    %3992 = vdwg.mxu0
    %3993 = vmatpush.bf16.msra.mxu0 %v2655
    %3994 = vmatpush.bf16.msra.mxu0 %v2653
    %3995 = vmatpush.bf16.msra.mxu0 %v2651
    %3996 = vmatpush.bf16.msra.mxu0 %v2649
    %3997 = vmatpush.bf16.msra.mxu0 %v2647
    %3998 = vmatpush.bf16.msra.mxu0 %v2645
    %3999 = vmatpush.bf16.msra.mxu0 %v2643
    %4000 = vmatpush.bf16.msra.mxu0 %v2641
    %4001 = vmatmul.bf16.gmra.mxu0 %v119
    %v4002 = vpop.f32.mrf.mxu0
    %v4003 = vadd.f32 %v3990, %v4002
    %v4004 = vpop.f32.mrf.mxu0
    %4005 = vdwg.mxu0
    %4006 = vmatpush.bf16.msra.mxu0 %v2671
    %4007 = vmatpush.bf16.msra.mxu0 %v2669
    %4008 = vmatpush.bf16.msra.mxu0 %v2667
    %4009 = vmatpush.bf16.msra.mxu0 %v2665
    %4010 = vmatpush.bf16.msra.mxu0 %v2663
    %4011 = vmatpush.bf16.msra.mxu0 %v2661
    %4012 = vmatpush.bf16.msra.mxu0 %v2659
    %4013 = vmatpush.bf16.msra.mxu0 %v2657
    %4014 = vmatmul.bf16.gmra.mxu0 %v120
    %v4015 = vpop.f32.mrf.mxu0
    %v4016 = vadd.f32 %v4003, %v4015
    %v4017 = vpop.f32.mrf.mxu0
    %4018 = vdwg.mxu0
    %4019 = vmatpush.bf16.msra.mxu0 %v2687
    %4020 = vmatpush.bf16.msra.mxu0 %v2685
    %4021 = vmatpush.bf16.msra.mxu0 %v2683
    %4022 = vmatpush.bf16.msra.mxu0 %v2681
    %4023 = vmatpush.bf16.msra.mxu0 %v2679
    %4024 = vmatpush.bf16.msra.mxu0 %v2677
    %4025 = vmatpush.bf16.msra.mxu0 %v2675
    %4026 = vmatpush.bf16.msra.mxu0 %v2673
    %4027 = vmatmul.bf16.gmra.mxu0 %v121
    %v4028 = vpop.f32.mrf.mxu0
    %v4029 = vadd.f32 %v4016, %v4028
    %v4030 = vpop.f32.mrf.mxu0
    %4031 = vdwg.mxu0
    %v4032 = vtanh.pop %v3613
    %v4033 = vtanh.pop %v4029
    %4034 = vst [vmem:[#allocation8] sm:$0xff] %v4032
    %4035 = vst [vmem:[#allocation8 + $0x8] sm:$0xff] %v4033
    // Predicated region
    $region26: #{tpu_custom_call.1} parent=1 // pred_check
      _
    $region27: #{tpu_custom_call.1} parent=1 // pred_check_branch
      %4037 = sbr.rel (0) target = $region29
    $region28: #{tpu_custom_call.1} parent=1 // pred_region
      %4039 = vsyncadd [#allocation4], 0
      %s4041 = sshll.u32 [#allocation8], 4
      %s4042 = int_to_ptr.vmem [resolvable:$true] %s4041
      %s4043 = sshll.u32 %s3, 4
      %s4044 = int_to_ptr.hbm [resolvable:$true] %s4043
      %4046 = dma.vmem_to_hbm [thread:$0]  %s4042, 256, %s4044, [#allocation4]
    $region29: #{tpu_custom_call.1} parent=1 // pred_fallthru
      _
    // Predicated region
    $region30: #{tpu_custom_call.1} parent=1 // pred_check
      _
    $region31: #{tpu_custom_call.1} parent=1 // pred_check_branch
      %4048 = sbr.rel (0) target = $region33
    $region32: #{tpu_custom_call.1} parent=1 // pred_region
      %4050 = dma.done [#allocation4], 256
    $region33: #{tpu_custom_call.1} parent=1 // pred_fallthru
      _
    %4051 = vsyncpa [#allocation3], 1
    %4052 = vsyncpa [#allocation6], 1
    %4053 = vsyncpa [#allocation4], 1

</llo_original>
